<compile_context>
chip_gen: v5e
topology: v5e:2x2
jax: 0.10.0
libtpu: 0.0.40
codegen_flags: <defaults>
</compile_context>

<pallas_src>
import functools
from collections import OrderedDict

import jax
import jax.numpy as jnp
from jax import lax
from jax.experimental import pallas as pl
from jax.experimental.pallas import tpu as pltpu


def _round_up(x, m):
    return (x + m - 1) // m * m


def _counts_accum_dtype():
    """bf16 counts accumulation on chips with a bf16 VPU (v6e/v7x), f32 otherwise."""
    try:
        kind = jax.devices()[0].device_kind.lower()
    except Exception:
        return jnp.float32
    if "v6" in kind or "v7" in kind:
        return jnp.bfloat16
    return jnp.float32


# ----------------------------- Pallas kernel ------------------------------ #
def _fused_bag_kernel(ids_ref, table_hbm_ref, out_ref, table_vmem, sem, *,
                      accum_dtype):
    """Fused sum-pooled embedding-bag lookup for all sparse features of all groups.

    ids_ref    : [tb, P] int32  pre-masked ids (shifted by each feature's row
                                offset in the stacked table; padded / invalid
                                positions -> zero sentinel row)
    table_hbm  : [V, Dp] bf16   global stacked table, resident in HBM
    out_ref    : [tb, Dp] f32   concatenated pooled embeddings of all groups
    table_vmem : [V, Dp] bf16   single-buffered VMEM copy of the stacked table
    sem        : DMA semaphore
    """
    # TODO(synk): for production vocabularies (V*Dp*2 approaching VMEM,
    # mandatory on v7x's 64 MiB), replace the counts @ table formulation with a
    # PrefetchScalarGridSpec row-gather kernel (ids in SMEM, per-bag rows DMA'd
    # HBM->VMEM with 2-deep manual double buffering, VPU accumulate):
    # O(B*L*D) work and VMEM-independent of V, vs O(B*V*(P+D)) here.

    copy = pltpu.make_async_copy(table_hbm_ref, table_vmem, sem)

    # Start the one-time table load; the wait is deferred to just before the
    # matmul so the HBM->VMEM copy overlaps the counts construction of the
    # first batch tile.  The scratch persists across the sequential
    # ("arbitrary") grid, so later steps see the loaded table.
    @pl.when(pl.program_id(0) == 0)
    def _start_table_load():
        copy.start()

    ids = ids_ref[...]                                    # [tb, P] int32
    tb, num_pos = ids.shape
    vocab_size = table_vmem.shape[0]

    # counts[b, v] = #{p : ids[b, p] == v}.  Masked positions point at the
    # all-zero sentinel rows so they contribute nothing to the matmul.
    # TODO(synk): for large P (>~32) switch to lax.fori_loop(..., unroll=8)
    # over a [P, tb]-transposed ids block to bound vreg live ranges; the static
    # loop is fine for the small P used here.
    vocab = lax.broadcasted_iota(jnp.int32, (tb, vocab_size), 1)   # [tb, V]
    counts = jnp.zeros((tb, vocab_size), accum_dtype)
    for p in range(num_pos):          # static & small (sum of max bag lengths)
        counts = counts + (ids[:, p:p + 1] == vocab).astype(accum_dtype)
    counts = counts.astype(jnp.bfloat16)   # exact: counts <= num_pos << 256

    @pl.when(pl.program_id(0) == 0)
    def _finish_table_load():
        copy.wait()

    # Sum pooling + cross-group concat in one bf16 MXU matmul with f32
    # accumulation; feature f of group g occupies rows [voff_f, voff_f+V_f)
    # and cols [doff_{g,f}, doff_{g,f}+D_{g,f}) of the stacked table.
    out_ref[...] = jnp.dot(counts, table_vmem[...],
                           preferred_element_type=jnp.float32)


def fused_group_embedding_bag(ids_all, stacked_table, *, tb=None):
    """ids_all [B, P] int32 (offset + sentinel-masked), stacked_table [V, Dp] bf16
    -> [B, Dp] f32 sum-pooled, group-concatenated sparse embeddings."""
    B, P = ids_all.shape
    V, Dp = stacked_table.shape
    assert P > 0, "empty bag width must be guarded on the host side"
    assert V % 8 == 0 and Dp % 128 == 0, "stacked table must be tile-aligned"

    if tb is None:
        # Large MXU-friendly M tile; small batches use a padded 8-row tile.
        tb = 256 if B > 256 else _round_up(max(B, 1), 8)
    Bp = _round_up(B, tb)
    if Bp != B:
        sentinel = V - 1                 # trailing rows of the table are zero
        ids_all = jnp.concatenate(
            [ids_all, jnp.full((Bp - B, P), sentinel, jnp.int32)], axis=0)

    # Explicit scoped-VMEM budget: single-buffered table scratch +
    # double-buffered ids/out tiles + counts live values, with headroom.
    table_bytes = V * Dp * stacked_table.dtype.itemsize
    tile_bytes = 2 * tb * P * 4 + 2 * tb * Dp * 4
    counts_bytes = 2 * tb * V * 4
    vmem_limit = int(min(64 << 20,
                         max(32 << 20,
                             table_bytes + tile_bytes + counts_bytes + (4 << 20))))

    kernel = functools.partial(_fused_bag_kernel,
                               accum_dtype=_counts_accum_dtype())

    # TODO(synk): on v7x (2 TensorCores) split batch tiles over an outer
    # "parallel" grid axis and re-gate the table load on the inner index == 0
    # so each core loads its own scratch copy; kept 1-D here for portability.
    out = pl.pallas_call(
        kernel,
        out_shape=jax.ShapeDtypeStruct((Bp, Dp), jnp.float32),
        grid=(Bp // tb,),
        in_specs=[
            pl.BlockSpec((tb, P), lambda i: (i, 0)),     # ids tile (VMEM)
            pl.BlockSpec(memory_space=pl.ANY),           # table stays in HBM
        ],
        out_specs=pl.BlockSpec((tb, Dp), lambda i: (i, 0)),  # lane-dense output
        scratch_shapes=[
            pltpu.VMEM((V, Dp), stacked_table.dtype),    # single-buffered table
            pltpu.SemaphoreType.DMA,
        ],
        compiler_params=pltpu.CompilerParams(
            dimension_semantics=("arbitrary",),
            vmem_limit_bytes=vmem_limit),
    )(ids_all.astype(jnp.int32), stacked_table)
    return out[:B]


# ----------------------- EmbeddingGroupImpl (JAX) ------------------------- #
class EmbeddingGroupImplJax:
    """JAX/Pallas re-implementation of tzrec EmbeddingGroupImpl (forward only).

    features: list of dicts
        sparse: {"name", "is_sparse": True, "num_embeddings", "embedding_dim"}
        dense:  {"name", "is_sparse": False, "output_dim"}
    feature_groups: list of dicts {"group_name", "feature_names", "group_type"}
    """

    def __init__(self, features, feature_groups, wide_embedding_dim=4, seed=0):
        name_to_feature = {f["name"]: f for f in features}
        self._name_to_feature = name_to_feature
        self._emb_bag_configs = OrderedDict()     # emb_name -> (V, D, [features])
        self._group_to_feature_names = OrderedDict()
        self._group_to_shared_feature_names = OrderedDict()
        self._group_total_dim = dict()
        self._group_feature_output_dims = dict()
        self._feat_group_emb_name = dict()        # (feature, group) -> emb_name
        self.has_sparse = False
        self.has_dense = False

        # pass 1: emb name per (feature, group) -> detect cross-group sharing
        feat_to_group_to_emb_name = {}
        for fg in feature_groups:
            for fname in fg["feature_names"]:
                feat = name_to_feature[fname]
                if feat["is_sparse"]:
                    emb_name = "emb_" + fname
                    if fg["group_type"] == "WIDE":
                        emb_name = emb_name + "_wide"
                    feat_to_group_to_emb_name.setdefault(fname, {})[
                        fg["group_name"]] = emb_name
        shared_feature_flag = {
            f: len(set(g2e.values())) > 1
            for f, g2e in feat_to_group_to_emb_name.items()
        }

        # pass 2: emb-bag configs (with sharing) and group metadata
        for fg in feature_groups:
            gname = fg["group_name"]
            is_wide = fg["group_type"] == "WIDE"
            total_dim = 0
            feature_output_dims = OrderedDict()
            shared_feature_names = []
            for fname in fg["feature_names"]:
                feat = name_to_feature[fname]
                shared_name = fname
                if feat["is_sparse"]:
                    emb_name = feat_to_group_to_emb_name[fname][gname]
                    out_dim = (wide_embedding_dim or 4) if is_wide \
                        else feat["embedding_dim"]
                    if emb_name in self._emb_bag_configs:
                        V, D, flist = self._emb_bag_configs[emb_name]
                        assert V == feat["num_embeddings"] and D == out_dim, \
                            "mismatched shared embedding config"
                        if fname not in flist:
                            flist.append(fname)
                    else:
                        self._emb_bag_configs[emb_name] = (
                            feat["num_embeddings"], out_dim, [fname])
                    self.has_sparse = True
                    if shared_feature_flag[fname]:
                        shared_name = fname + "@" + emb_name
                    self._feat_group_emb_name[(fname, gname)] = emb_name
                else:
                    if is_wide:
                        raise ValueError(
                            "dense feature should not be configured in wide group.")
                    out_dim = feat["output_dim"]
                    self.has_dense = True
                total_dim += out_dim
                feature_output_dims[fname] = out_dim
                shared_feature_names.append(shared_name)
            self._group_to_feature_names[gname] = list(fg["feature_names"])
            self._group_to_shared_feature_names[gname] = shared_feature_names
            self._group_total_dim[gname] = total_dim
            self._group_feature_output_dims[gname] = feature_output_dims

        # deterministic EmbeddingBagCollection parameter init (shared tables, f32)
        key = jax.random.PRNGKey(seed)
        self.tables = OrderedDict()
        for emb_name, (V, D, _) in self._emb_bag_configs.items():
            key, sub = jax.random.split(key)
            self.tables[emb_name] = (
                jax.random.normal(sub, (V, D), jnp.float32) / jnp.sqrt(D))

        # pass 3: GLOBAL fused-lookup plan across ALL groups
        #   * one row block per unique sparse feature vocabulary (shared by
        #     every group that references it -> one counts matrix serves all)
        #   * one column block per (group, sparse feature) embedding, ordered
        #     group-major then config order -> each group's sparse columns are
        #     contiguous in the fused output
        #   * trailing zero rows are the sentinel for padded / invalid ids
        feat_row = OrderedDict()          # fname -> (voff, Vf)
        voff = 0
        for fg in feature_groups:
            for fname in fg["feature_names"]:
                feat = name_to_feature[fname]
                if feat["is_sparse"] and fname not in feat_row:
                    feat_row[fname] = (voff, feat["num_embeddings"])
                    voff += feat["num_embeddings"]
        has_any_sparse = bool(feat_row)
        v_stack = _round_up(voff + 1, 16) if has_any_sparse else 0
        sentinel = v_stack - 1 if has_any_sparse else -1

        col_entries = []                  # (gname, fname, emb_name, doff, Df)
        group_layout = OrderedDict()      # gname -> [("sparse",c0,c1)|("dense",f,None)]
        doff = 0
        for fg in feature_groups:
            gname = fg["group_name"]
            layout = []
            for fname in fg["feature_names"]:
                feat = name_to_feature[fname]
                if feat["is_sparse"]:
                    emb_name = self._feat_group_emb_name[(fname, gname)]
                    _V, Df, _ = self._emb_bag_configs[emb_name]
                    col_entries.append((gname, fname, emb_name, doff, Df))
                    if layout and layout[-1][0] == "sparse" and layout[-1][2] == doff:
                        layout[-1] = ("sparse", layout[-1][1], doff + Df)
                    else:
                        layout.append(("sparse", doff, doff + Df))
                    doff += Df
                else:
                    layout.append(("dense", fname, None))
            group_layout[gname] = layout
        d_stack = _round_up(max(doff, 1), 128) if has_any_sparse else 0

        stacked = None
        if has_any_sparse:
            stacked = jnp.zeros((v_stack, d_stack), jnp.float32)
            for (_g, fname, emb_name, do, Df) in col_entries:
                vo, Vf = feat_row[fname]
                stacked = stacked.at[vo:vo + Vf, do:do + Df].set(
                    self.tables[emb_name])
            # bf16 storage: native MXU path, half the DMA bytes and VMEM scratch.
            stacked = stacked.astype(jnp.bfloat16)

        self._fused_plan = dict(
            feat_row=feat_row, stacked_table=stacked, v_stack=v_stack,
            d_stack=d_stack, sentinel=sentinel, group_layout=group_layout,
            has_sparse=has_any_sparse)

    def group_dims(self, group_name):
        return list(self._group_feature_output_dims[group_name].values())

    def group_feature_dims(self, group_name):
        return self._group_feature_output_dims[group_name]

    def group_total_dim(self, group_name):
        return self._group_total_dim[group_name]

    def forward(self, sparse_feature, dense_feature):
        """sparse_feature: {name: (ids [B, L] int32, lengths [B] int32)}
           dense_feature:  {name: values [B, D] float32}
           returns {group_name: [B, group_total_dim] float32}"""
        plan = self._fused_plan
        fused = None
        if plan["has_sparse"]:
            # Host-side jagged-bag masking: padded / out-of-range positions map
            # to the all-zero sentinel row; each feature's ids are shifted by
            # its row offset in the stacked table.  lengths never enter the
            # kernel.
            cols = []
            batch = None
            for fname, (vo, Vf) in plan["feat_row"].items():
                ids, lengths = sparse_feature[fname]
                ids = ids.astype(jnp.int32)
                lengths = lengths.astype(jnp.int32)
                batch = ids.shape[0]
                L = ids.shape[1]
                if L == 0:          # zero-width bag contributes nothing
                    continue
                pos = jnp.arange(L, dtype=jnp.int32)[None, :]
                valid = (pos < lengths[:, None]) & (ids >= 0) & (ids < Vf)
                cols.append(jnp.where(valid, ids + vo, plan["sentinel"]))
            if cols:
                ids_all = jnp.concatenate(cols, axis=1)      # [B, sum(L_f)]
                fused = fused_group_embedding_bag(ids_all, plan["stacked_table"])
            else:
                # All bags empty: sum pooling yields zeros.
                fused = jnp.zeros((batch, plan["d_stack"]), jnp.float32)

        # KeyedTensor.regroup_as_dict: concat per group in config order;
        # consecutive sparse features are already one contiguous slice of the
        # fused output.
        group_tensors = {}
        for gname, layout in plan["group_layout"].items():
            parts = []
            for entry in layout:
                if entry[0] == "sparse":
                    parts.append(fused[:, entry[1]:entry[2]])
                else:
                    parts.append(dense_feature[entry[1]].astype(jnp.float32))
            group_tensors[gname] = (
                parts[0] if len(parts) == 1
                else jnp.concatenate(parts, axis=-1))
        return group_tensors


# --------------------------------- main ----------------------------------- #
if __name__ == "__main__":
    B, L = 200, 8   # B deliberately not a multiple of the batch tile

    features = [
        {"name": "cat_a", "is_sparse": True,
         "num_embeddings": 64, "embedding_dim": 16},
        {"name": "cat_b", "is_sparse": True,
         "num_embeddings": 32, "embedding_dim": 8},
        {"name": "dense_c", "is_sparse": False, "output_dim": 4},
    ]
    feature_groups = [
        {"group_name": "deep", "group_type": "DEEP",
         "feature_names": ["cat_a", "cat_b", "dense_c"]},
        {"group_name": "wide", "group_type": "WIDE",
         "feature_names": ["cat_a", "cat_b"]},
    ]

    module = EmbeddingGroupImplJax(features, feature_groups,
                                   wide_embedding_dim=4, seed=0)

    key = jax.random.PRNGKey(0)
    k1, k2, k3, k4, k5 = jax.random.split(key, 5)
    sparse_feature = {
        "cat_a": (jax.random.randint(k1, (B, L), 0, 64, jnp.int32),
                  jax.random.randint(k2, (B,), 1, L + 1, jnp.int32)),
        "cat_b": (jax.random.randint(k3, (B, L), 0, 32, jnp.int32),
                  jax.random.randint(k4, (B,), 1, L + 1, jnp.int32)),
    }
    dense_feature = {"dense_c": jax.random.normal(k5, (B, 4), jnp.float32)}

    out = module.forward(sparse_feature, dense_feature)
    out = jax.block_until_ready(out)

    # shape checks against module metadata
    assert out["deep"].shape == (B, module.group_total_dim("deep")) == (B, 28)
    assert out["wide"].shape == (B, module.group_total_dim("wide")) == (B, 8)

    # numerical check against a pure-JAX reference embedding bag + regroup
    def ref_bag(ids, lengths, table):
        L_ = ids.shape[1]
        mask = (jnp.arange(L_)[None, :] < lengths[:, None]).astype(jnp.float32)
        return jnp.sum(table[ids] * mask[:, :, None], axis=1)

    ids_a, len_a = sparse_feature["cat_a"]
    ids_b, len_b = sparse_feature["cat_b"]

    # Exact-path check: the kernel stores tables in bf16, so compare against a
    # reference built from the bf16-quantized tables (counts are exact ints).
    tq = {k: v.astype(jnp.bfloat16).astype(jnp.float32)
          for k, v in module.tables.items()}
    ref_deep_q = jnp.concatenate([
        ref_bag(ids_a, len_a, tq["emb_cat_a"]),
        ref_bag(ids_b, len_b, tq["emb_cat_b"]),
        dense_feature["dense_c"],
    ], axis=-1)
    ref_wide_q = jnp.concatenate([
        ref_bag(ids_a, len_a, tq["emb_cat_a_wide"]),
        ref_bag(ids_b, len_b, tq["emb_cat_b_wide"]),
    ], axis=-1)
    assert jnp.allclose(out["deep"], ref_deep_q, atol=1e-3), "deep group mismatch"
    assert jnp.allclose(out["wide"], ref_wide_q, atol=1e-3), "wide group mismatch"

    # Loose check against the full-precision f32 tables (bf16 table storage).
    ref_deep = jnp.concatenate([
        ref_bag(ids_a, len_a, module.tables["emb_cat_a"]),
        ref_bag(ids_b, len_b, module.tables["emb_cat_b"]),
        dense_feature["dense_c"],
    ], axis=-1)
    assert jnp.allclose(out["deep"], ref_deep, atol=1e-1), "deep f32 drift too large"

    print("KERNEL_OK")
</pallas_src>

<mosaic_0001>
module attributes {stable_mosaic.version = 11 : i64} {
  func.func @_fused_bag_kernel(%arg0: i32, %arg1: memref<200x16xi32, #tpu.memory_space<vmem>>, %arg2: memref<112x128xbf16, #tpu.memory_space<any>>, %arg3: memref<200x128xf32, #tpu.memory_space<vmem>>, %arg4: memref<112x128xbf16, #tpu.memory_space<vmem>>, %arg5: memref<!tpu.dma_semaphore, #tpu.memory_space<semaphore_mem>>) attributes {dimension_semantics = [#tpu.dimension_semantics<arbitrary>], iteration_bounds = array<i64: 1>, scalar_prefetch = 0 : i64, scratch_operands = 2 : i64, tpu.core_type = #tpu.core_type<tc>, window_params = [{transform_indices = @transform_0, window_bounds = array<i64: 200, 16>}, {}, {transform_indices = @transform_2, window_bounds = array<i64: 200, 128>}]} {
    %c0_i32 = arith.constant 0 : i32
    %0 = arith.cmpi eq, %arg0, %c0_i32 : i32
    %1 = arith.extui %0 : i1 to i32
    %c0_i32_0 = arith.constant 0 : i32
    %2 = arith.cmpi ne, %1, %c0_i32_0 : i32
    scf.if %2 {
      tpu.enqueue_dma source(%arg2 : memref<112x128xbf16, #tpu.memory_space<any>>) target(%arg4 : memref<112x128xbf16, #tpu.memory_space<vmem>>) target_semaphore(%arg5 : memref<!tpu.dma_semaphore, #tpu.memory_space<semaphore_mem>>)
    } else {
    }
    %c0 = arith.constant 0 : index
    %c0_1 = arith.constant 0 : index
    %3 = vector.load %arg1[%c0, %c0_1] : memref<200x16xi32, #tpu.memory_space<vmem>>, vector<200x16xi32>
    %4 = tpu.iota {dimensions = array<i32: 1>} : vector<200x112xi32>
    %cst = arith.constant 0.000000e+00 : f32
    %5 = vector.broadcast %cst : f32 to vector<200x112xf32>
    %6 = vector.extract_strided_slice %3 {offsets = [0, 0], sizes = [200, 1], strides = [1, 1]} : vector<200x16xi32> to vector<200x1xi32>
    %7 = vector.broadcast %6 : vector<200x1xi32> to vector<200x112xi32>
    %8 = arith.cmpi eq, %7, %4 : vector<200x112xi32>
    %9 = arith.extui %8 : vector<200x112xi1> to vector<200x112xi32>
    %10 = arith.sitofp %9 : vector<200x112xi32> to vector<200x112xf32>
    %11 = arith.addf %5, %10 : vector<200x112xf32>
    %12 = vector.extract_strided_slice %3 {offsets = [0, 1], sizes = [200, 1], strides = [1, 1]} : vector<200x16xi32> to vector<200x1xi32>
    %13 = vector.broadcast %12 : vector<200x1xi32> to vector<200x112xi32>
    %14 = arith.cmpi eq, %13, %4 : vector<200x112xi32>
    %15 = arith.extui %14 : vector<200x112xi1> to vector<200x112xi32>
    %16 = arith.sitofp %15 : vector<200x112xi32> to vector<200x112xf32>
    %17 = arith.addf %11, %16 : vector<200x112xf32>
    %18 = vector.extract_strided_slice %3 {offsets = [0, 2], sizes = [200, 1], strides = [1, 1]} : vector<200x16xi32> to vector<200x1xi32>
    %19 = vector.broadcast %18 : vector<200x1xi32> to vector<200x112xi32>
    %20 = arith.cmpi eq, %19, %4 : vector<200x112xi32>
    %21 = arith.extui %20 : vector<200x112xi1> to vector<200x112xi32>
    %22 = arith.sitofp %21 : vector<200x112xi32> to vector<200x112xf32>
    %23 = arith.addf %17, %22 : vector<200x112xf32>
    %24 = vector.extract_strided_slice %3 {offsets = [0, 3], sizes = [200, 1], strides = [1, 1]} : vector<200x16xi32> to vector<200x1xi32>
    %25 = vector.broadcast %24 : vector<200x1xi32> to vector<200x112xi32>
    %26 = arith.cmpi eq, %25, %4 : vector<200x112xi32>
    %27 = arith.extui %26 : vector<200x112xi1> to vector<200x112xi32>
    %28 = arith.sitofp %27 : vector<200x112xi32> to vector<200x112xf32>
    %29 = arith.addf %23, %28 : vector<200x112xf32>
    %30 = vector.extract_strided_slice %3 {offsets = [0, 4], sizes = [200, 1], strides = [1, 1]} : vector<200x16xi32> to vector<200x1xi32>
    %31 = vector.broadcast %30 : vector<200x1xi32> to vector<200x112xi32>
    %32 = arith.cmpi eq, %31, %4 : vector<200x112xi32>
    %33 = arith.extui %32 : vector<200x112xi1> to vector<200x112xi32>
    %34 = arith.sitofp %33 : vector<200x112xi32> to vector<200x112xf32>
    %35 = arith.addf %29, %34 : vector<200x112xf32>
    %36 = vector.extract_strided_slice %3 {offsets = [0, 5], sizes = [200, 1], strides = [1, 1]} : vector<200x16xi32> to vector<200x1xi32>
    %37 = vector.broadcast %36 : vector<200x1xi32> to vector<200x112xi32>
    %38 = arith.cmpi eq, %37, %4 : vector<200x112xi32>
    %39 = arith.extui %38 : vector<200x112xi1> to vector<200x112xi32>
    %40 = arith.sitofp %39 : vector<200x112xi32> to vector<200x112xf32>
    %41 = arith.addf %35, %40 : vector<200x112xf32>
    %42 = vector.extract_strided_slice %3 {offsets = [0, 6], sizes = [200, 1], strides = [1, 1]} : vector<200x16xi32> to vector<200x1xi32>
    %43 = vector.broadcast %42 : vector<200x1xi32> to vector<200x112xi32>
    %44 = arith.cmpi eq, %43, %4 : vector<200x112xi32>
    %45 = arith.extui %44 : vector<200x112xi1> to vector<200x112xi32>
    %46 = arith.sitofp %45 : vector<200x112xi32> to vector<200x112xf32>
    %47 = arith.addf %41, %46 : vector<200x112xf32>
    %48 = vector.extract_strided_slice %3 {offsets = [0, 7], sizes = [200, 1], strides = [1, 1]} : vector<200x16xi32> to vector<200x1xi32>
    %49 = vector.broadcast %48 : vector<200x1xi32> to vector<200x112xi32>
    %50 = arith.cmpi eq, %49, %4 : vector<200x112xi32>
    %51 = arith.extui %50 : vector<200x112xi1> to vector<200x112xi32>
    %52 = arith.sitofp %51 : vector<200x112xi32> to vector<200x112xf32>
    %53 = arith.addf %47, %52 : vector<200x112xf32>
    %54 = vector.extract_strided_slice %3 {offsets = [0, 8], sizes = [200, 1], strides = [1, 1]} : vector<200x16xi32> to vector<200x1xi32>
    %55 = vector.broadcast %54 : vector<200x1xi32> to vector<200x112xi32>
    %56 = arith.cmpi eq, %55, %4 : vector<200x112xi32>
    %57 = arith.extui %56 : vector<200x112xi1> to vector<200x112xi32>
    %58 = arith.sitofp %57 : vector<200x112xi32> to vector<200x112xf32>
    %59 = arith.addf %53, %58 : vector<200x112xf32>
    %60 = vector.extract_strided_slice %3 {offsets = [0, 9], sizes = [200, 1], strides = [1, 1]} : vector<200x16xi32> to vector<200x1xi32>
    %61 = vector.broadcast %60 : vector<200x1xi32> to vector<200x112xi32>
    %62 = arith.cmpi eq, %61, %4 : vector<200x112xi32>
    %63 = arith.extui %62 : vector<200x112xi1> to vector<200x112xi32>
    %64 = arith.sitofp %63 : vector<200x112xi32> to vector<200x112xf32>
    %65 = arith.addf %59, %64 : vector<200x112xf32>
    %66 = vector.extract_strided_slice %3 {offsets = [0, 10], sizes = [200, 1], strides = [1, 1]} : vector<200x16xi32> to vector<200x1xi32>
    %67 = vector.broadcast %66 : vector<200x1xi32> to vector<200x112xi32>
    %68 = arith.cmpi eq, %67, %4 : vector<200x112xi32>
    %69 = arith.extui %68 : vector<200x112xi1> to vector<200x112xi32>
    %70 = arith.sitofp %69 : vector<200x112xi32> to vector<200x112xf32>
    %71 = arith.addf %65, %70 : vector<200x112xf32>
    %72 = vector.extract_strided_slice %3 {offsets = [0, 11], sizes = [200, 1], strides = [1, 1]} : vector<200x16xi32> to vector<200x1xi32>
    %73 = vector.broadcast %72 : vector<200x1xi32> to vector<200x112xi32>
    %74 = arith.cmpi eq, %73, %4 : vector<200x112xi32>
    %75 = arith.extui %74 : vector<200x112xi1> to vector<200x112xi32>
    %76 = arith.sitofp %75 : vector<200x112xi32> to vector<200x112xf32>
    %77 = arith.addf %71, %76 : vector<200x112xf32>
    %78 = vector.extract_strided_slice %3 {offsets = [0, 12], sizes = [200, 1], strides = [1, 1]} : vector<200x16xi32> to vector<200x1xi32>
    %79 = vector.broadcast %78 : vector<200x1xi32> to vector<200x112xi32>
    %80 = arith.cmpi eq, %79, %4 : vector<200x112xi32>
    %81 = arith.extui %80 : vector<200x112xi1> to vector<200x112xi32>
    %82 = arith.sitofp %81 : vector<200x112xi32> to vector<200x112xf32>
    %83 = arith.addf %77, %82 : vector<200x112xf32>
    %84 = vector.extract_strided_slice %3 {offsets = [0, 13], sizes = [200, 1], strides = [1, 1]} : vector<200x16xi32> to vector<200x1xi32>
    %85 = vector.broadcast %84 : vector<200x1xi32> to vector<200x112xi32>
    %86 = arith.cmpi eq, %85, %4 : vector<200x112xi32>
    %87 = arith.extui %86 : vector<200x112xi1> to vector<200x112xi32>
    %88 = arith.sitofp %87 : vector<200x112xi32> to vector<200x112xf32>
    %89 = arith.addf %83, %88 : vector<200x112xf32>
    %90 = vector.extract_strided_slice %3 {offsets = [0, 14], sizes = [200, 1], strides = [1, 1]} : vector<200x16xi32> to vector<200x1xi32>
    %91 = vector.broadcast %90 : vector<200x1xi32> to vector<200x112xi32>
    %92 = arith.cmpi eq, %91, %4 : vector<200x112xi32>
    %93 = arith.extui %92 : vector<200x112xi1> to vector<200x112xi32>
    %94 = arith.sitofp %93 : vector<200x112xi32> to vector<200x112xf32>
    %95 = arith.addf %89, %94 : vector<200x112xf32>
    %96 = vector.extract_strided_slice %3 {offsets = [0, 15], sizes = [200, 1], strides = [1, 1]} : vector<200x16xi32> to vector<200x1xi32>
    %97 = vector.broadcast %96 : vector<200x1xi32> to vector<200x112xi32>
    %98 = arith.cmpi eq, %97, %4 : vector<200x112xi32>
    %99 = arith.extui %98 : vector<200x112xi1> to vector<200x112xi32>
    %100 = arith.sitofp %99 : vector<200x112xi32> to vector<200x112xf32>
    %101 = arith.addf %95, %100 : vector<200x112xf32>
    %102 = arith.truncf %101 : vector<200x112xf32> to vector<200x112xbf16>
    %c0_i32_2 = arith.constant 0 : i32
    %103 = arith.cmpi eq, %arg0, %c0_i32_2 : i32
    %104 = arith.extui %103 : i1 to i32
    %c0_i32_3 = arith.constant 0 : i32
    %105 = arith.cmpi ne, %104, %c0_i32_3 : i32
    scf.if %105 {
      tpu.wait_dma2 semaphore(%arg5 : memref<!tpu.dma_semaphore, #tpu.memory_space<semaphore_mem>>) src(%arg2 : memref<112x128xbf16, #tpu.memory_space<any>>) dst(%arg4 : memref<112x128xbf16, #tpu.memory_space<vmem>>)
    } else {
    }
    %c0_4 = arith.constant 0 : index
    %c0_5 = arith.constant 0 : index
    %106 = vector.load %arg4[%c0_4, %c0_5] : memref<112x128xbf16, #tpu.memory_space<vmem>>, vector<112x128xbf16>
    %cst_6 = arith.constant dense<0.000000e+00> : vector<200x128xf32>
    %107 = tpu.matmul %102, %106, %cst_6 {dimension_numbers = #tpu.dot_dimension_numbers<[1], [0], [0], [1], [0, 0, 1, 1], [], []>} : vector<200x112xbf16>, vector<112x128xbf16>, vector<200x128xf32> -> vector<200x128xf32>
    %c0_7 = arith.constant 0 : index
    %c0_8 = arith.constant 0 : index
    %108 = vector.load %arg3[%c0_7, %c0_8] : memref<200x128xf32, #tpu.memory_space<vmem>>, vector<200x128xf32>
    tpu.vector_store %arg3[%c0_7, %c0_8], %107 {strides = array<i32>} : memref<200x128xf32, #tpu.memory_space<vmem>>, vector<200x128xf32>,
    return
  }
  func.func @transform_0(%arg0: i32) -> (i32, i32) {
    %c0_i32 = arith.constant 0 : i32
    %c0_i32_0 = arith.constant 0 : i32
    return %arg0, %c0_i32 : i32, i32
  }
  func.func @transform_2(%arg0: i32) -> (i32, i32) {
    %c0_i32 = arith.constant 0 : i32
    %c0_i32_0 = arith.constant 0 : i32
    return %arg0, %c0_i32 : i32, i32
  }
}

</mosaic_0001>

<llo_original>
// kernel: tpu_custom_call.1
$region0: #{tpu_custom_call.1}
  #allocation0 [shape = 'u32[]', space=smem, size = 0x4, offset = 0x4, fixed_abs, tag = 'smem constant byte address 0x4 - core index']
  #allocation1 [shape = 'u32[72,128]{1,0:T(1,128)}', space=vmem, size = 0x9000, scoped, tag = 'internal scratch']
  #allocation2 [shape = 'bf16[112,128]{1,0:T(8,128)(2,1)}', space=vmem, size = 0x7000, scoped, tag = 'scratch operand']
  #allocation3 [shape = 's32[1]{0}', space=sflag, size = 0x4, scoped, tag = 'scratch operand']
  #allocation6 [shape = 's32[]', space=sflag, size = 0x4, offset = 0, fixed_abs, tag = 'sflag constant byte address 0x0 - dummy sync flag']
  %s0 = inlined_call_operand.vmem [shape: s32[200,16], index: 0, kind: input, shape index: {}]
  %s1 = inlined_call_operand.vmem [shape: bf16[112,128], index: 1, kind: input, shape index: {}]
  %s2 = inlined_call_operand.hbm [shape: f32[200,128], index: 2, kind: output, shape index: {}]
  %s3 = sld [smem:[#allocation0]]
  $region41: #{tpu_custom_call.1} parent=0
    _
  %s5 = ssub.s32 1, %s3
  %s6 = scalar_select 0, %s5, %s3
  $region1: #{tpu_custom_call.1} parent=0
    #allocation4 [shape = 'u8[102400]{0}', space=vmem, size = 0x19000, scoped, tag = 'output window, operand 0, single buffered']
    #allocation5 [shape = 's32[1]{0}', space=sflag, size = 0x4, scoped, tag = 'scoped memory for tpu_custom_call.1']
    %7 = vsyncpa [#allocation5], 0
    // Predicated region
    $region2: #{tpu_custom_call.1} parent=1 // pred_check
      _
    $region3: #{tpu_custom_call.1} parent=1 // pred_check_branch
      %9 = sbr.rel (0) target = $region5
    $region4: #{tpu_custom_call.1} parent=1 // pred_region
      _
    $region5: #{tpu_custom_call.1} parent=1 // pred_fallthru
      _
    %p11 = scmp.eq.s32.totalorder 0, 0
    // Predicated region
    $region6: #{tpu_custom_call.1} parent=1 // pred_check
      %p12 = pneg %p11
    $region7: #{tpu_custom_call.1} parent=1 // pred_check_branch
      %14 = sbr.rel (%p12) target = $region9
    $region8: #{tpu_custom_call.1} parent=1 // pred_region
      // Predicated region
      $region10: #{tpu_custom_call.1} parent=8 // pred_check
        _
      $region11: #{tpu_custom_call.1} parent=8 // pred_check_branch
        %16 = sbr.rel (0) target = $region13
      $region12: #{tpu_custom_call.1} parent=8 // pred_region
        loop: start=0, step=1, limit=1
        $region14: #{tpu_custom_call.1} parent=12 // loop_pre_header
          _
        $region15: #{tpu_custom_call.1} parent=12 // loop_header
          %s18 = sphi 0, %s22
          %p19 = scmp.ge.s32.totalorder %s18, 1
          %s23 = sphi %s1, %s1
          %s24 = sphi [#allocation2], [#allocation2]
        $region16: #{tpu_custom_call.1} parent=12 // loop_header_branch
          %21 = sbr.rel (%p19) target = $region20
        $region17: #{tpu_custom_call.1} parent=12 // loop_body
          %v25 = vld [vmem:[%s23] sm:$0xff]
          %26 = vst [vmem:[%s24] sm:$0xff] %v25
          %v27 = vld [vmem:[%s23 + $0x8] sm:$0xff]
          %28 = vst [vmem:[%s24 + $0x8] sm:$0xff] %v27
          %v29 = vld [vmem:[%s23 + $0x10] sm:$0xff]
          %30 = vst [vmem:[%s24 + $0x10] sm:$0xff] %v29
          %v31 = vld [vmem:[%s23 + $0x18] sm:$0xff]
          %32 = vst [vmem:[%s24 + $0x18] sm:$0xff] %v31
          %v33 = vld [vmem:[%s23 + $0x20] sm:$0xff]
          %34 = vst [vmem:[%s24 + $0x20] sm:$0xff] %v33
          %v35 = vld [vmem:[%s23 + $0x28] sm:$0xff]
          %36 = vst [vmem:[%s24 + $0x28] sm:$0xff] %v35
          %v37 = vld [vmem:[%s23 + $0x30] sm:$0xff]
          %38 = vst [vmem:[%s24 + $0x30] sm:$0xff] %v37
        $region18: #{tpu_custom_call.1} parent=12 // loop_footer
          %s22 = sadd.s32 1, %s18
        $region19: #{tpu_custom_call.1} parent=12 // loop_footer_branch
          %17 = sbr.rel target = $region15
        $region20: #{tpu_custom_call.1} parent=12 // loop_exit
          _
      $region13: #{tpu_custom_call.1} parent=8 // pred_fallthru
        _
      // Predicated region
      $region21: #{tpu_custom_call.1} parent=8 // pred_check
        _
      $region22: #{tpu_custom_call.1} parent=8 // pred_check_branch
        %40 = sbr.rel target = $region24
      $region23: #{tpu_custom_call.1} parent=8 // pred_region
        _
      $region24: #{tpu_custom_call.1} parent=8 // pred_fallthru
        _
      // Predicated region
      $region25: #{tpu_custom_call.1} parent=8 // pred_check
        _
      $region26: #{tpu_custom_call.1} parent=8 // pred_check_branch
        %43 = sbr.rel (0) target = $region28
      $region27: #{tpu_custom_call.1} parent=8 // pred_region
        %44 = vsyncadd [#allocation3], 896
      $region28: #{tpu_custom_call.1} parent=8 // pred_fallthru
        _
    $region9: #{tpu_custom_call.1} parent=1 // pred_fallthru
      _
    %v45 = vld [vmem:[%s0] sm:$0xff]
    %v46 = vld [vmem:[%s0 + $0x8] sm:$0xff]
    %v47 = vld [vmem:[%s0 + $0x10] sm:$0xff]
    %v48 = vld [vmem:[%s0 + $0x18] sm:$0xff]
    %v49 = vld [vmem:[%s0 + $0x20] sm:$0xff]
    %v50 = vld [vmem:[%s0 + $0x28] sm:$0xff]
    %v51 = vld [vmem:[%s0 + $0x30] sm:$0xff]
    %v52 = vld [vmem:[%s0 + $0x38] sm:$0xff]
    %v53 = vld [vmem:[%s0 + $0x40] sm:$0xff]
    %v54 = vld [vmem:[%s0 + $0x48] sm:$0xff]
    %v55 = vld [vmem:[%s0 + $0x50] sm:$0xff]
    %v56 = vld [vmem:[%s0 + $0x58] sm:$0xff]
    %v57 = vld [vmem:[%s0 + $0x60] sm:$0xff]
    %v58 = vld [vmem:[%s0 + $0x68] sm:$0xff]
    %v59 = vld [vmem:[%s0 + $0x70] sm:$0xff]
    %v60 = vld [vmem:[%s0 + $0x78] sm:$0xff]
    %v61 = vld [vmem:[%s0 + $0x80] sm:$0xff]
    %v62 = vld [vmem:[%s0 + $0x88] sm:$0xff]
    %v63 = vld [vmem:[%s0 + $0x90] sm:$0xff]
    %v64 = vld [vmem:[%s0 + $0x98] sm:$0xff]
    %v65 = vld [vmem:[%s0 + $0xa0] sm:$0xff]
    %v66 = vld [vmem:[%s0 + $0xa8] sm:$0xff]
    %v67 = vld [vmem:[%s0 + $0xb0] sm:$0xff]
    %v68 = vld [vmem:[%s0 + $0xb8] sm:$0xff]
    %v69 = vld [vmem:[%s0 + $0xc0] sm:$0xff]
    %v70 = vlaneseq
    %v71 = vand.u32 %v70, 127
    %72 = vset.pattern.permute.xlu0 0
    %73 = vperm.xlu0 %72, %v45
    %v74 = vpop.permute.xlu0 %73
    %75 = vset.pattern.permute.xlu0 0
    %76 = vperm.xlu0 %75, %v46
    %v77 = vpop.permute.xlu0 %76
    %78 = vset.pattern.permute.xlu0 0
    %79 = vperm.xlu0 %78, %v47
    %v80 = vpop.permute.xlu0 %79
    %81 = vset.pattern.permute.xlu0 0
    %82 = vperm.xlu0 %81, %v48
    %v83 = vpop.permute.xlu0 %82
    %84 = vset.pattern.permute.xlu0 0
    %85 = vperm.xlu0 %84, %v49
    %v86 = vpop.permute.xlu0 %85
    %87 = vset.pattern.permute.xlu0 0
    %88 = vperm.xlu0 %87, %v50
    %v89 = vpop.permute.xlu0 %88
    %90 = vset.pattern.permute.xlu0 0
    %91 = vperm.xlu0 %90, %v51
    %v92 = vpop.permute.xlu0 %91
    %93 = vset.pattern.permute.xlu0 0
    %94 = vperm.xlu0 %93, %v52
    %v95 = vpop.permute.xlu0 %94
    %96 = vset.pattern.permute.xlu0 0
    %97 = vperm.xlu0 %96, %v53
    %v98 = vpop.permute.xlu0 %97
    %99 = vset.pattern.permute.xlu0 0
    %100 = vperm.xlu0 %99, %v54
    %v101 = vpop.permute.xlu0 %100
    %102 = vset.pattern.permute.xlu0 0
    %103 = vperm.xlu0 %102, %v55
    %v104 = vpop.permute.xlu0 %103
    %105 = vset.pattern.permute.xlu0 0
    %106 = vperm.xlu0 %105, %v56
    %v107 = vpop.permute.xlu0 %106
    %108 = vset.pattern.permute.xlu0 0
    %109 = vperm.xlu0 %108, %v57
    %v110 = vpop.permute.xlu0 %109
    %111 = vset.pattern.permute.xlu0 0
    %112 = vperm.xlu0 %111, %v58
    %v113 = vpop.permute.xlu0 %112
    %114 = vset.pattern.permute.xlu0 0
    %115 = vperm.xlu0 %114, %v59
    %v116 = vpop.permute.xlu0 %115
    %117 = vset.pattern.permute.xlu0 0
    %118 = vperm.xlu0 %117, %v60
    %v119 = vpop.permute.xlu0 %118
    %120 = vset.pattern.permute.xlu0 0
    %121 = vperm.xlu0 %120, %v61
    %v122 = vpop.permute.xlu0 %121
    %123 = vset.pattern.permute.xlu0 0
    %124 = vperm.xlu0 %123, %v62
    %v125 = vpop.permute.xlu0 %124
    %126 = vset.pattern.permute.xlu0 0
    %127 = vperm.xlu0 %126, %v63
    %v128 = vpop.permute.xlu0 %127
    %129 = vset.pattern.permute.xlu0 0
    %130 = vperm.xlu0 %129, %v64
    %v131 = vpop.permute.xlu0 %130
    %132 = vset.pattern.permute.xlu0 0
    %133 = vperm.xlu0 %132, %v65
    %v134 = vpop.permute.xlu0 %133
    %135 = vset.pattern.permute.xlu0 0
    %136 = vperm.xlu0 %135, %v66
    %v137 = vpop.permute.xlu0 %136
    %138 = vset.pattern.permute.xlu0 0
    %139 = vperm.xlu0 %138, %v67
    %v140 = vpop.permute.xlu0 %139
    %141 = vset.pattern.permute.xlu0 0
    %142 = vperm.xlu0 %141, %v68
    %v143 = vpop.permute.xlu0 %142
    %144 = vset.pattern.permute.xlu0 0
    %145 = vperm.xlu0 %144, %v69
    %v146 = vpop.permute.xlu0 %145
    %vm147 = vcmp.eq.s32.totalorder %v74, %v71
    %vm148 = vcmp.eq.s32.totalorder %v77, %v71
    %vm149 = vcmp.eq.s32.totalorder %v80, %v71
    %vm150 = vcmp.eq.s32.totalorder %v83, %v71
    %vm151 = vcmp.eq.s32.totalorder %v86, %v71
    %vm152 = vcmp.eq.s32.totalorder %v89, %v71
    %vm153 = vcmp.eq.s32.totalorder %v92, %v71
    %vm154 = vcmp.eq.s32.totalorder %v95, %v71
    %vm155 = vcmp.eq.s32.totalorder %v98, %v71
    %vm156 = vcmp.eq.s32.totalorder %v101, %v71
    %vm157 = vcmp.eq.s32.totalorder %v104, %v71
    %vm158 = vcmp.eq.s32.totalorder %v107, %v71
    %vm159 = vcmp.eq.s32.totalorder %v110, %v71
    %vm160 = vcmp.eq.s32.totalorder %v113, %v71
    %vm161 = vcmp.eq.s32.totalorder %v116, %v71
    %vm162 = vcmp.eq.s32.totalorder %v119, %v71
    %vm163 = vcmp.eq.s32.totalorder %v122, %v71
    %vm164 = vcmp.eq.s32.totalorder %v125, %v71
    %vm165 = vcmp.eq.s32.totalorder %v128, %v71
    %vm166 = vcmp.eq.s32.totalorder %v131, %v71
    %vm167 = vcmp.eq.s32.totalorder %v134, %v71
    %vm168 = vcmp.eq.s32.totalorder %v137, %v71
    %vm169 = vcmp.eq.s32.totalorder %v140, %v71
    %vm170 = vcmp.eq.s32.totalorder %v143, %v71
    %vm171 = vcmp.eq.s32.totalorder %v146, %v71
    %v172 = vsel %vm147, 1, 0
    %v173 = vsel %vm148, 1, 0
    %v174 = vsel %vm149, 1, 0
    %v175 = vsel %vm150, 1, 0
    %v176 = vsel %vm151, 1, 0
    %v177 = vsel %vm152, 1, 0
    %v178 = vsel %vm153, 1, 0
    %v179 = vsel %vm154, 1, 0
    %v180 = vsel %vm155, 1, 0
    %v181 = vsel %vm156, 1, 0
    %v182 = vsel %vm157, 1, 0
    %v183 = vsel %vm158, 1, 0
    %v184 = vsel %vm159, 1, 0
    %v185 = vsel %vm160, 1, 0
    %v186 = vsel %vm161, 1, 0
    %v187 = vsel %vm162, 1, 0
    %v188 = vsel %vm163, 1, 0
    %v189 = vsel %vm164, 1, 0
    %v190 = vsel %vm165, 1, 0
    %v191 = vsel %vm166, 1, 0
    %v192 = vsel %vm167, 1, 0
    %v193 = vsel %vm168, 1, 0
    %v194 = vsel %vm169, 1, 0
    %v195 = vsel %vm170, 1, 0
    %v196 = vsel %vm171, 1, 0
    %v197 = vcvt.s32.f32 %v172
    %v198 = vcvt.s32.f32 %v173
    %v199 = vcvt.s32.f32 %v174
    %v200 = vcvt.s32.f32 %v175
    %v201 = vcvt.s32.f32 %v176
    %v202 = vcvt.s32.f32 %v177
    %v203 = vcvt.s32.f32 %v178
    %v204 = vcvt.s32.f32 %v179
    %v205 = vcvt.s32.f32 %v180
    %v206 = vcvt.s32.f32 %v181
    %v207 = vcvt.s32.f32 %v182
    %v208 = vcvt.s32.f32 %v183
    %v209 = vcvt.s32.f32 %v184
    %v210 = vcvt.s32.f32 %v185
    %v211 = vcvt.s32.f32 %v186
    %v212 = vcvt.s32.f32 %v187
    %v213 = vcvt.s32.f32 %v188
    %v214 = vcvt.s32.f32 %v189
    %v215 = vcvt.s32.f32 %v190
    %v216 = vcvt.s32.f32 %v191
    %v217 = vcvt.s32.f32 %v192
    %v218 = vcvt.s32.f32 %v193
    %v219 = vcvt.s32.f32 %v194
    %v220 = vcvt.s32.f32 %v195
    %v221 = vcvt.s32.f32 %v196
    %v222 = vadd.f32 %v197, 0.0
    %v223 = vadd.f32 %v198, 0.0
    %v224 = vadd.f32 %v199, 0.0
    %v225 = vadd.f32 %v200, 0.0
    %v226 = vadd.f32 %v201, 0.0
    %v227 = vadd.f32 %v202, 0.0
    %v228 = vadd.f32 %v203, 0.0
    %v229 = vadd.f32 %v204, 0.0
    %v230 = vadd.f32 %v205, 0.0
    %v231 = vadd.f32 %v206, 0.0
    %v232 = vadd.f32 %v207, 0.0
    %v233 = vadd.f32 %v208, 0.0
    %v234 = vadd.f32 %v209, 0.0
    %v235 = vadd.f32 %v210, 0.0
    %v236 = vadd.f32 %v211, 0.0
    %v237 = vadd.f32 %v212, 0.0
    %v238 = vadd.f32 %v213, 0.0
    %v239 = vadd.f32 %v214, 0.0
    %v240 = vadd.f32 %v215, 0.0
    %v241 = vadd.f32 %v216, 0.0
    %v242 = vadd.f32 %v217, 0.0
    %v243 = vadd.f32 %v218, 0.0
    %v244 = vadd.f32 %v219, 0.0
    %v245 = vadd.f32 %v220, 0.0
    %v246 = vadd.f32 %v221, 0.0
    %247 = vset.pattern.permute.xlu0 1
    %248 = vperm.xlu0 %247, %v45
    %v249 = vpop.permute.xlu0 %248
    %250 = vset.pattern.permute.xlu0 1
    %251 = vperm.xlu0 %250, %v46
    %v252 = vpop.permute.xlu0 %251
    %253 = vset.pattern.permute.xlu0 1
    %254 = vperm.xlu0 %253, %v47
    %v255 = vpop.permute.xlu0 %254
    %256 = vset.pattern.permute.xlu0 1
    %257 = vperm.xlu0 %256, %v48
    %v258 = vpop.permute.xlu0 %257
    %259 = vset.pattern.permute.xlu0 1
    %260 = vperm.xlu0 %259, %v49
    %v261 = vpop.permute.xlu0 %260
    %262 = vset.pattern.permute.xlu0 1
    %263 = vperm.xlu0 %262, %v50
    %v264 = vpop.permute.xlu0 %263
    %265 = vset.pattern.permute.xlu0 1
    %266 = vperm.xlu0 %265, %v51
    %v267 = vpop.permute.xlu0 %266
    %268 = vset.pattern.permute.xlu0 1
    %269 = vperm.xlu0 %268, %v52
    %v270 = vpop.permute.xlu0 %269
    %271 = vset.pattern.permute.xlu0 1
    %272 = vperm.xlu0 %271, %v53
    %v273 = vpop.permute.xlu0 %272
    %274 = vset.pattern.permute.xlu0 1
    %275 = vperm.xlu0 %274, %v54
    %v276 = vpop.permute.xlu0 %275
    %277 = vset.pattern.permute.xlu0 1
    %278 = vperm.xlu0 %277, %v55
    %v279 = vpop.permute.xlu0 %278
    %280 = vset.pattern.permute.xlu0 1
    %281 = vperm.xlu0 %280, %v56
    %v282 = vpop.permute.xlu0 %281
    %283 = vset.pattern.permute.xlu0 1
    %284 = vperm.xlu0 %283, %v57
    %v285 = vpop.permute.xlu0 %284
    %286 = vset.pattern.permute.xlu0 1
    %287 = vperm.xlu0 %286, %v58
    %v288 = vpop.permute.xlu0 %287
    %289 = vset.pattern.permute.xlu0 1
    %290 = vperm.xlu0 %289, %v59
    %v291 = vpop.permute.xlu0 %290
    %292 = vset.pattern.permute.xlu0 1
    %293 = vperm.xlu0 %292, %v60
    %v294 = vpop.permute.xlu0 %293
    %295 = vset.pattern.permute.xlu0 1
    %296 = vperm.xlu0 %295, %v61
    %v297 = vpop.permute.xlu0 %296
    %298 = vset.pattern.permute.xlu0 1
    %299 = vperm.xlu0 %298, %v62
    %v300 = vpop.permute.xlu0 %299
    %301 = vset.pattern.permute.xlu0 1
    %302 = vperm.xlu0 %301, %v63
    %v303 = vpop.permute.xlu0 %302
    %304 = vset.pattern.permute.xlu0 1
    %305 = vperm.xlu0 %304, %v64
    %v306 = vpop.permute.xlu0 %305
    %307 = vset.pattern.permute.xlu0 1
    %308 = vperm.xlu0 %307, %v65
    %v309 = vpop.permute.xlu0 %308
    %310 = vset.pattern.permute.xlu0 1
    %311 = vperm.xlu0 %310, %v66
    %v312 = vpop.permute.xlu0 %311
    %313 = vset.pattern.permute.xlu0 1
    %314 = vperm.xlu0 %313, %v67
    %v315 = vpop.permute.xlu0 %314
    %316 = vset.pattern.permute.xlu0 1
    %317 = vperm.xlu0 %316, %v68
    %v318 = vpop.permute.xlu0 %317
    %319 = vset.pattern.permute.xlu0 1
    %320 = vperm.xlu0 %319, %v69
    %v321 = vpop.permute.xlu0 %320
    %vm322 = vcmp.eq.s32.totalorder %v249, %v71
    %vm323 = vcmp.eq.s32.totalorder %v252, %v71
    %vm324 = vcmp.eq.s32.totalorder %v255, %v71
    %vm325 = vcmp.eq.s32.totalorder %v258, %v71
    %vm326 = vcmp.eq.s32.totalorder %v261, %v71
    %vm327 = vcmp.eq.s32.totalorder %v264, %v71
    %vm328 = vcmp.eq.s32.totalorder %v267, %v71
    %vm329 = vcmp.eq.s32.totalorder %v270, %v71
    %vm330 = vcmp.eq.s32.totalorder %v273, %v71
    %vm331 = vcmp.eq.s32.totalorder %v276, %v71
    %vm332 = vcmp.eq.s32.totalorder %v279, %v71
    %vm333 = vcmp.eq.s32.totalorder %v282, %v71
    %vm334 = vcmp.eq.s32.totalorder %v285, %v71
    %vm335 = vcmp.eq.s32.totalorder %v288, %v71
    %vm336 = vcmp.eq.s32.totalorder %v291, %v71
    %vm337 = vcmp.eq.s32.totalorder %v294, %v71
    %vm338 = vcmp.eq.s32.totalorder %v297, %v71
    %vm339 = vcmp.eq.s32.totalorder %v300, %v71
    %vm340 = vcmp.eq.s32.totalorder %v303, %v71
    %vm341 = vcmp.eq.s32.totalorder %v306, %v71
    %vm342 = vcmp.eq.s32.totalorder %v309, %v71
    %vm343 = vcmp.eq.s32.totalorder %v312, %v71
    %vm344 = vcmp.eq.s32.totalorder %v315, %v71
    %vm345 = vcmp.eq.s32.totalorder %v318, %v71
    %vm346 = vcmp.eq.s32.totalorder %v321, %v71
    %v347 = vsel %vm322, 1, 0
    %v348 = vsel %vm323, 1, 0
    %v349 = vsel %vm324, 1, 0
    %v350 = vsel %vm325, 1, 0
    %v351 = vsel %vm326, 1, 0
    %v352 = vsel %vm327, 1, 0
    %v353 = vsel %vm328, 1, 0
    %v354 = vsel %vm329, 1, 0
    %v355 = vsel %vm330, 1, 0
    %v356 = vsel %vm331, 1, 0
    %v357 = vsel %vm332, 1, 0
    %v358 = vsel %vm333, 1, 0
    %v359 = vsel %vm334, 1, 0
    %v360 = vsel %vm335, 1, 0
    %v361 = vsel %vm336, 1, 0
    %v362 = vsel %vm337, 1, 0
    %v363 = vsel %vm338, 1, 0
    %v364 = vsel %vm339, 1, 0
    %v365 = vsel %vm340, 1, 0
    %v366 = vsel %vm341, 1, 0
    %v367 = vsel %vm342, 1, 0
    %v368 = vsel %vm343, 1, 0
    %v369 = vsel %vm344, 1, 0
    %v370 = vsel %vm345, 1, 0
    %v371 = vsel %vm346, 1, 0
    %v372 = vcvt.s32.f32 %v347
    %v373 = vcvt.s32.f32 %v348
    %v374 = vcvt.s32.f32 %v349
    %v375 = vcvt.s32.f32 %v350
    %v376 = vcvt.s32.f32 %v351
    %v377 = vcvt.s32.f32 %v352
    %v378 = vcvt.s32.f32 %v353
    %v379 = vcvt.s32.f32 %v354
    %v380 = vcvt.s32.f32 %v355
    %v381 = vcvt.s32.f32 %v356
    %v382 = vcvt.s32.f32 %v357
    %v383 = vcvt.s32.f32 %v358
    %v384 = vcvt.s32.f32 %v359
    %v385 = vcvt.s32.f32 %v360
    %v386 = vcvt.s32.f32 %v361
    %v387 = vcvt.s32.f32 %v362
    %v388 = vcvt.s32.f32 %v363
    %v389 = vcvt.s32.f32 %v364
    %v390 = vcvt.s32.f32 %v365
    %v391 = vcvt.s32.f32 %v366
    %v392 = vcvt.s32.f32 %v367
    %v393 = vcvt.s32.f32 %v368
    %v394 = vcvt.s32.f32 %v369
    %v395 = vcvt.s32.f32 %v370
    %v396 = vcvt.s32.f32 %v371
    %v397 = vadd.f32 %v222, %v372
    %v398 = vadd.f32 %v223, %v373
    %v399 = vadd.f32 %v224, %v374
    %v400 = vadd.f32 %v225, %v375
    %v401 = vadd.f32 %v226, %v376
    %v402 = vadd.f32 %v227, %v377
    %v403 = vadd.f32 %v228, %v378
    %v404 = vadd.f32 %v229, %v379
    %v405 = vadd.f32 %v230, %v380
    %v406 = vadd.f32 %v231, %v381
    %v407 = vadd.f32 %v232, %v382
    %v408 = vadd.f32 %v233, %v383
    %v409 = vadd.f32 %v234, %v384
    %v410 = vadd.f32 %v235, %v385
    %v411 = vadd.f32 %v236, %v386
    %v412 = vadd.f32 %v237, %v387
    %v413 = vadd.f32 %v238, %v388
    %v414 = vadd.f32 %v239, %v389
    %v415 = vadd.f32 %v240, %v390
    %v416 = vadd.f32 %v241, %v391
    %v417 = vadd.f32 %v242, %v392
    %v418 = vadd.f32 %v243, %v393
    %v419 = vadd.f32 %v244, %v394
    %v420 = vadd.f32 %v245, %v395
    %v421 = vadd.f32 %v246, %v396
    %422 = vset.pattern.permute.xlu0 2
    %423 = vperm.xlu0 %422, %v45
    %v424 = vpop.permute.xlu0 %423
    %425 = vset.pattern.permute.xlu0 2
    %426 = vperm.xlu0 %425, %v46
    %v427 = vpop.permute.xlu0 %426
    %428 = vset.pattern.permute.xlu0 2
    %429 = vperm.xlu0 %428, %v47
    %v430 = vpop.permute.xlu0 %429
    %431 = vset.pattern.permute.xlu0 2
    %432 = vperm.xlu0 %431, %v48
    %v433 = vpop.permute.xlu0 %432
    %434 = vset.pattern.permute.xlu0 2
    %435 = vperm.xlu0 %434, %v49
    %v436 = vpop.permute.xlu0 %435
    %437 = vset.pattern.permute.xlu0 2
    %438 = vperm.xlu0 %437, %v50
    %v439 = vpop.permute.xlu0 %438
    %440 = vset.pattern.permute.xlu0 2
    %441 = vperm.xlu0 %440, %v51
    %v442 = vpop.permute.xlu0 %441
    %443 = vset.pattern.permute.xlu0 2
    %444 = vperm.xlu0 %443, %v52
    %v445 = vpop.permute.xlu0 %444
    %446 = vset.pattern.permute.xlu0 2
    %447 = vperm.xlu0 %446, %v53
    %v448 = vpop.permute.xlu0 %447
    %449 = vset.pattern.permute.xlu0 2
    %450 = vperm.xlu0 %449, %v54
    %v451 = vpop.permute.xlu0 %450
    %452 = vset.pattern.permute.xlu0 2
    %453 = vperm.xlu0 %452, %v55
    %v454 = vpop.permute.xlu0 %453
    %455 = vset.pattern.permute.xlu0 2
    %456 = vperm.xlu0 %455, %v56
    %v457 = vpop.permute.xlu0 %456
    %458 = vset.pattern.permute.xlu0 2
    %459 = vperm.xlu0 %458, %v57
    %v460 = vpop.permute.xlu0 %459
    %461 = vset.pattern.permute.xlu0 2
    %462 = vperm.xlu0 %461, %v58
    %v463 = vpop.permute.xlu0 %462
    %464 = vset.pattern.permute.xlu0 2
    %465 = vperm.xlu0 %464, %v59
    %v466 = vpop.permute.xlu0 %465
    %467 = vset.pattern.permute.xlu0 2
    %468 = vperm.xlu0 %467, %v60
    %v469 = vpop.permute.xlu0 %468
    %470 = vset.pattern.permute.xlu0 2
    %471 = vperm.xlu0 %470, %v61
    %v472 = vpop.permute.xlu0 %471
    %473 = vset.pattern.permute.xlu0 2
    %474 = vperm.xlu0 %473, %v62
    %v475 = vpop.permute.xlu0 %474
    %476 = vset.pattern.permute.xlu0 2
    %477 = vperm.xlu0 %476, %v63
    %v478 = vpop.permute.xlu0 %477
    %479 = vset.pattern.permute.xlu0 2
    %480 = vperm.xlu0 %479, %v64
    %v481 = vpop.permute.xlu0 %480
    %482 = vset.pattern.permute.xlu0 2
    %483 = vperm.xlu0 %482, %v65
    %v484 = vpop.permute.xlu0 %483
    %485 = vset.pattern.permute.xlu0 2
    %486 = vperm.xlu0 %485, %v66
    %v487 = vpop.permute.xlu0 %486
    %488 = vset.pattern.permute.xlu0 2
    %489 = vperm.xlu0 %488, %v67
    %v490 = vpop.permute.xlu0 %489
    %491 = vset.pattern.permute.xlu0 2
    %492 = vperm.xlu0 %491, %v68
    %v493 = vpop.permute.xlu0 %492
    %494 = vset.pattern.permute.xlu0 2
    %495 = vperm.xlu0 %494, %v69
    %v496 = vpop.permute.xlu0 %495
    %vm497 = vcmp.eq.s32.totalorder %v424, %v71
    %vm498 = vcmp.eq.s32.totalorder %v427, %v71
    %vm499 = vcmp.eq.s32.totalorder %v430, %v71
    %vm500 = vcmp.eq.s32.totalorder %v433, %v71
    %vm501 = vcmp.eq.s32.totalorder %v436, %v71
    %vm502 = vcmp.eq.s32.totalorder %v439, %v71
    %vm503 = vcmp.eq.s32.totalorder %v442, %v71
    %vm504 = vcmp.eq.s32.totalorder %v445, %v71
    %vm505 = vcmp.eq.s32.totalorder %v448, %v71
    %vm506 = vcmp.eq.s32.totalorder %v451, %v71
    %vm507 = vcmp.eq.s32.totalorder %v454, %v71
    %vm508 = vcmp.eq.s32.totalorder %v457, %v71
    %vm509 = vcmp.eq.s32.totalorder %v460, %v71
    %vm510 = vcmp.eq.s32.totalorder %v463, %v71
    %vm511 = vcmp.eq.s32.totalorder %v466, %v71
    %vm512 = vcmp.eq.s32.totalorder %v469, %v71
    %vm513 = vcmp.eq.s32.totalorder %v472, %v71
    %vm514 = vcmp.eq.s32.totalorder %v475, %v71
    %vm515 = vcmp.eq.s32.totalorder %v478, %v71
    %vm516 = vcmp.eq.s32.totalorder %v481, %v71
    %vm517 = vcmp.eq.s32.totalorder %v484, %v71
    %vm518 = vcmp.eq.s32.totalorder %v487, %v71
    %vm519 = vcmp.eq.s32.totalorder %v490, %v71
    %vm520 = vcmp.eq.s32.totalorder %v493, %v71
    %vm521 = vcmp.eq.s32.totalorder %v496, %v71
    %v522 = vsel %vm497, 1, 0
    %v523 = vsel %vm498, 1, 0
    %v524 = vsel %vm499, 1, 0
    %v525 = vsel %vm500, 1, 0
    %v526 = vsel %vm501, 1, 0
    %v527 = vsel %vm502, 1, 0
    %v528 = vsel %vm503, 1, 0
    %v529 = vsel %vm504, 1, 0
    %v530 = vsel %vm505, 1, 0
    %v531 = vsel %vm506, 1, 0
    %v532 = vsel %vm507, 1, 0
    %v533 = vsel %vm508, 1, 0
    %v534 = vsel %vm509, 1, 0
    %v535 = vsel %vm510, 1, 0
    %v536 = vsel %vm511, 1, 0
    %v537 = vsel %vm512, 1, 0
    %v538 = vsel %vm513, 1, 0
    %v539 = vsel %vm514, 1, 0
    %v540 = vsel %vm515, 1, 0
    %v541 = vsel %vm516, 1, 0
    %v542 = vsel %vm517, 1, 0
    %v543 = vsel %vm518, 1, 0
    %v544 = vsel %vm519, 1, 0
    %v545 = vsel %vm520, 1, 0
    %v546 = vsel %vm521, 1, 0
    %v547 = vcvt.s32.f32 %v522
    %v548 = vcvt.s32.f32 %v523
    %v549 = vcvt.s32.f32 %v524
    %v550 = vcvt.s32.f32 %v525
    %v551 = vcvt.s32.f32 %v526
    %v552 = vcvt.s32.f32 %v527
    %v553 = vcvt.s32.f32 %v528
    %v554 = vcvt.s32.f32 %v529
    %v555 = vcvt.s32.f32 %v530
    %v556 = vcvt.s32.f32 %v531
    %v557 = vcvt.s32.f32 %v532
    %v558 = vcvt.s32.f32 %v533
    %v559 = vcvt.s32.f32 %v534
    %v560 = vcvt.s32.f32 %v535
    %v561 = vcvt.s32.f32 %v536
    %v562 = vcvt.s32.f32 %v537
    %v563 = vcvt.s32.f32 %v538
    %v564 = vcvt.s32.f32 %v539
    %v565 = vcvt.s32.f32 %v540
    %v566 = vcvt.s32.f32 %v541
    %v567 = vcvt.s32.f32 %v542
    %v568 = vcvt.s32.f32 %v543
    %v569 = vcvt.s32.f32 %v544
    %v570 = vcvt.s32.f32 %v545
    %v571 = vcvt.s32.f32 %v546
    %v572 = vadd.f32 %v397, %v547
    %v573 = vadd.f32 %v398, %v548
    %v574 = vadd.f32 %v399, %v549
    %v575 = vadd.f32 %v400, %v550
    %v576 = vadd.f32 %v401, %v551
    %v577 = vadd.f32 %v402, %v552
    %v578 = vadd.f32 %v403, %v553
    %v579 = vadd.f32 %v404, %v554
    %v580 = vadd.f32 %v405, %v555
    %v581 = vadd.f32 %v406, %v556
    %v582 = vadd.f32 %v407, %v557
    %v583 = vadd.f32 %v408, %v558
    %v584 = vadd.f32 %v409, %v559
    %v585 = vadd.f32 %v410, %v560
    %v586 = vadd.f32 %v411, %v561
    %v587 = vadd.f32 %v412, %v562
    %v588 = vadd.f32 %v413, %v563
    %v589 = vadd.f32 %v414, %v564
    %v590 = vadd.f32 %v415, %v565
    %v591 = vadd.f32 %v416, %v566
    %v592 = vadd.f32 %v417, %v567
    %v593 = vadd.f32 %v418, %v568
    %v594 = vadd.f32 %v419, %v569
    %v595 = vadd.f32 %v420, %v570
    %v596 = vadd.f32 %v421, %v571
    %597 = vset.pattern.permute.xlu0 3
    %598 = vperm.xlu0 %597, %v45
    %v599 = vpop.permute.xlu0 %598
    %600 = vset.pattern.permute.xlu0 3
    %601 = vperm.xlu0 %600, %v46
    %v602 = vpop.permute.xlu0 %601
    %603 = vset.pattern.permute.xlu0 3
    %604 = vperm.xlu0 %603, %v47
    %v605 = vpop.permute.xlu0 %604
    %606 = vset.pattern.permute.xlu0 3
    %607 = vperm.xlu0 %606, %v48
    %v608 = vpop.permute.xlu0 %607
    %609 = vset.pattern.permute.xlu0 3
    %610 = vperm.xlu0 %609, %v49
    %v611 = vpop.permute.xlu0 %610
    %612 = vset.pattern.permute.xlu0 3
    %613 = vperm.xlu0 %612, %v50
    %v614 = vpop.permute.xlu0 %613
    %615 = vset.pattern.permute.xlu0 3
    %616 = vperm.xlu0 %615, %v51
    %v617 = vpop.permute.xlu0 %616
    %618 = vset.pattern.permute.xlu0 3
    %619 = vperm.xlu0 %618, %v52
    %v620 = vpop.permute.xlu0 %619
    %621 = vset.pattern.permute.xlu0 3
    %622 = vperm.xlu0 %621, %v53
    %v623 = vpop.permute.xlu0 %622
    %624 = vset.pattern.permute.xlu0 3
    %625 = vperm.xlu0 %624, %v54
    %v626 = vpop.permute.xlu0 %625
    %627 = vset.pattern.permute.xlu0 3
    %628 = vperm.xlu0 %627, %v55
    %v629 = vpop.permute.xlu0 %628
    %630 = vset.pattern.permute.xlu0 3
    %631 = vperm.xlu0 %630, %v56
    %v632 = vpop.permute.xlu0 %631
    %633 = vset.pattern.permute.xlu0 3
    %634 = vperm.xlu0 %633, %v57
    %v635 = vpop.permute.xlu0 %634
    %636 = vset.pattern.permute.xlu0 3
    %637 = vperm.xlu0 %636, %v58
    %v638 = vpop.permute.xlu0 %637
    %639 = vset.pattern.permute.xlu0 3
    %640 = vperm.xlu0 %639, %v59
    %v641 = vpop.permute.xlu0 %640
    %642 = vset.pattern.permute.xlu0 3
    %643 = vperm.xlu0 %642, %v60
    %v644 = vpop.permute.xlu0 %643
    %645 = vset.pattern.permute.xlu0 3
    %646 = vperm.xlu0 %645, %v61
    %v647 = vpop.permute.xlu0 %646
    %648 = vset.pattern.permute.xlu0 3
    %649 = vperm.xlu0 %648, %v62
    %v650 = vpop.permute.xlu0 %649
    %651 = vset.pattern.permute.xlu0 3
    %652 = vperm.xlu0 %651, %v63
    %v653 = vpop.permute.xlu0 %652
    %654 = vset.pattern.permute.xlu0 3
    %655 = vperm.xlu0 %654, %v64
    %v656 = vpop.permute.xlu0 %655
    %657 = vset.pattern.permute.xlu0 3
    %658 = vperm.xlu0 %657, %v65
    %v659 = vpop.permute.xlu0 %658
    %660 = vset.pattern.permute.xlu0 3
    %661 = vperm.xlu0 %660, %v66
    %v662 = vpop.permute.xlu0 %661
    %663 = vset.pattern.permute.xlu0 3
    %664 = vperm.xlu0 %663, %v67
    %v665 = vpop.permute.xlu0 %664
    %666 = vset.pattern.permute.xlu0 3
    %667 = vperm.xlu0 %666, %v68
    %v668 = vpop.permute.xlu0 %667
    %669 = vset.pattern.permute.xlu0 3
    %670 = vperm.xlu0 %669, %v69
    %v671 = vpop.permute.xlu0 %670
    %vm672 = vcmp.eq.s32.totalorder %v599, %v71
    %vm673 = vcmp.eq.s32.totalorder %v602, %v71
    %vm674 = vcmp.eq.s32.totalorder %v605, %v71
    %vm675 = vcmp.eq.s32.totalorder %v608, %v71
    %vm676 = vcmp.eq.s32.totalorder %v611, %v71
    %vm677 = vcmp.eq.s32.totalorder %v614, %v71
    %vm678 = vcmp.eq.s32.totalorder %v617, %v71
    %vm679 = vcmp.eq.s32.totalorder %v620, %v71
    %vm680 = vcmp.eq.s32.totalorder %v623, %v71
    %vm681 = vcmp.eq.s32.totalorder %v626, %v71
    %vm682 = vcmp.eq.s32.totalorder %v629, %v71
    %vm683 = vcmp.eq.s32.totalorder %v632, %v71
    %vm684 = vcmp.eq.s32.totalorder %v635, %v71
    %vm685 = vcmp.eq.s32.totalorder %v638, %v71
    %vm686 = vcmp.eq.s32.totalorder %v641, %v71
    %vm687 = vcmp.eq.s32.totalorder %v644, %v71
    %vm688 = vcmp.eq.s32.totalorder %v647, %v71
    %vm689 = vcmp.eq.s32.totalorder %v650, %v71
    %vm690 = vcmp.eq.s32.totalorder %v653, %v71
    %vm691 = vcmp.eq.s32.totalorder %v656, %v71
    %vm692 = vcmp.eq.s32.totalorder %v659, %v71
    %vm693 = vcmp.eq.s32.totalorder %v662, %v71
    %vm694 = vcmp.eq.s32.totalorder %v665, %v71
    %vm695 = vcmp.eq.s32.totalorder %v668, %v71
    %vm696 = vcmp.eq.s32.totalorder %v671, %v71
    %v697 = vsel %vm672, 1, 0
    %v698 = vsel %vm673, 1, 0
    %v699 = vsel %vm674, 1, 0
    %v700 = vsel %vm675, 1, 0
    %v701 = vsel %vm676, 1, 0
    %v702 = vsel %vm677, 1, 0
    %v703 = vsel %vm678, 1, 0
    %v704 = vsel %vm679, 1, 0
    %v705 = vsel %vm680, 1, 0
    %v706 = vsel %vm681, 1, 0
    %v707 = vsel %vm682, 1, 0
    %v708 = vsel %vm683, 1, 0
    %v709 = vsel %vm684, 1, 0
    %v710 = vsel %vm685, 1, 0
    %v711 = vsel %vm686, 1, 0
    %v712 = vsel %vm687, 1, 0
    %v713 = vsel %vm688, 1, 0
    %v714 = vsel %vm689, 1, 0
    %v715 = vsel %vm690, 1, 0
    %v716 = vsel %vm691, 1, 0
    %v717 = vsel %vm692, 1, 0
    %v718 = vsel %vm693, 1, 0
    %v719 = vsel %vm694, 1, 0
    %v720 = vsel %vm695, 1, 0
    %v721 = vsel %vm696, 1, 0
    %v722 = vcvt.s32.f32 %v697
    %v723 = vcvt.s32.f32 %v698
    %v724 = vcvt.s32.f32 %v699
    %v725 = vcvt.s32.f32 %v700
    %v726 = vcvt.s32.f32 %v701
    %v727 = vcvt.s32.f32 %v702
    %v728 = vcvt.s32.f32 %v703
    %v729 = vcvt.s32.f32 %v704
    %v730 = vcvt.s32.f32 %v705
    %v731 = vcvt.s32.f32 %v706
    %v732 = vcvt.s32.f32 %v707
    %v733 = vcvt.s32.f32 %v708
    %v734 = vcvt.s32.f32 %v709
    %v735 = vcvt.s32.f32 %v710
    %v736 = vcvt.s32.f32 %v711
    %v737 = vcvt.s32.f32 %v712
    %v738 = vcvt.s32.f32 %v713
    %v739 = vcvt.s32.f32 %v714
    %v740 = vcvt.s32.f32 %v715
    %v741 = vcvt.s32.f32 %v716
    %v742 = vcvt.s32.f32 %v717
    %v743 = vcvt.s32.f32 %v718
    %v744 = vcvt.s32.f32 %v719
    %v745 = vcvt.s32.f32 %v720
    %v746 = vcvt.s32.f32 %v721
    %v747 = vadd.f32 %v572, %v722
    %v748 = vadd.f32 %v573, %v723
    %v749 = vadd.f32 %v574, %v724
    %v750 = vadd.f32 %v575, %v725
    %v751 = vadd.f32 %v576, %v726
    %v752 = vadd.f32 %v577, %v727
    %v753 = vadd.f32 %v578, %v728
    %v754 = vadd.f32 %v579, %v729
    %v755 = vadd.f32 %v580, %v730
    %v756 = vadd.f32 %v581, %v731
    %v757 = vadd.f32 %v582, %v732
    %v758 = vadd.f32 %v583, %v733
    %v759 = vadd.f32 %v584, %v734
    %v760 = vadd.f32 %v585, %v735
    %v761 = vadd.f32 %v586, %v736
    %v762 = vadd.f32 %v587, %v737
    %v763 = vadd.f32 %v588, %v738
    %v764 = vadd.f32 %v589, %v739
    %v765 = vadd.f32 %v590, %v740
    %v766 = vadd.f32 %v591, %v741
    %v767 = vadd.f32 %v592, %v742
    %v768 = vadd.f32 %v593, %v743
    %v769 = vadd.f32 %v594, %v744
    %v770 = vadd.f32 %v595, %v745
    %v771 = vadd.f32 %v596, %v746
    %772 = vset.pattern.permute.xlu0 4
    %773 = vperm.xlu0 %772, %v45
    %v774 = vpop.permute.xlu0 %773
    %775 = vset.pattern.permute.xlu0 4
    %776 = vperm.xlu0 %775, %v46
    %v777 = vpop.permute.xlu0 %776
    %778 = vset.pattern.permute.xlu0 4
    %779 = vperm.xlu0 %778, %v47
    %v780 = vpop.permute.xlu0 %779
    %781 = vset.pattern.permute.xlu0 4
    %782 = vperm.xlu0 %781, %v48
    %v783 = vpop.permute.xlu0 %782
    %784 = vset.pattern.permute.xlu0 4
    %785 = vperm.xlu0 %784, %v49
    %v786 = vpop.permute.xlu0 %785
    %787 = vset.pattern.permute.xlu0 4
    %788 = vperm.xlu0 %787, %v50
    %v789 = vpop.permute.xlu0 %788
    %790 = vset.pattern.permute.xlu0 4
    %791 = vperm.xlu0 %790, %v51
    %v792 = vpop.permute.xlu0 %791
    %793 = vset.pattern.permute.xlu0 4
    %794 = vperm.xlu0 %793, %v52
    %v795 = vpop.permute.xlu0 %794
    %796 = vset.pattern.permute.xlu0 4
    %797 = vperm.xlu0 %796, %v53
    %v798 = vpop.permute.xlu0 %797
    %799 = vset.pattern.permute.xlu0 4
    %800 = vperm.xlu0 %799, %v54
    %v801 = vpop.permute.xlu0 %800
    %802 = vset.pattern.permute.xlu0 4
    %803 = vperm.xlu0 %802, %v55
    %v804 = vpop.permute.xlu0 %803
    %805 = vset.pattern.permute.xlu0 4
    %806 = vperm.xlu0 %805, %v56
    %v807 = vpop.permute.xlu0 %806
    %808 = vset.pattern.permute.xlu0 4
    %809 = vperm.xlu0 %808, %v57
    %v810 = vpop.permute.xlu0 %809
    %811 = vset.pattern.permute.xlu0 4
    %812 = vperm.xlu0 %811, %v58
    %v813 = vpop.permute.xlu0 %812
    %814 = vset.pattern.permute.xlu0 4
    %815 = vperm.xlu0 %814, %v59
    %v816 = vpop.permute.xlu0 %815
    %817 = vset.pattern.permute.xlu0 4
    %818 = vperm.xlu0 %817, %v60
    %v819 = vpop.permute.xlu0 %818
    %820 = vset.pattern.permute.xlu0 4
    %821 = vperm.xlu0 %820, %v61
    %v822 = vpop.permute.xlu0 %821
    %823 = vset.pattern.permute.xlu0 4
    %824 = vperm.xlu0 %823, %v62
    %v825 = vpop.permute.xlu0 %824
    %826 = vset.pattern.permute.xlu0 4
    %827 = vperm.xlu0 %826, %v63
    %v828 = vpop.permute.xlu0 %827
    %829 = vset.pattern.permute.xlu0 4
    %830 = vperm.xlu0 %829, %v64
    %v831 = vpop.permute.xlu0 %830
    %832 = vset.pattern.permute.xlu0 4
    %833 = vperm.xlu0 %832, %v65
    %v834 = vpop.permute.xlu0 %833
    %835 = vset.pattern.permute.xlu0 4
    %836 = vperm.xlu0 %835, %v66
    %v837 = vpop.permute.xlu0 %836
    %838 = vset.pattern.permute.xlu0 4
    %839 = vperm.xlu0 %838, %v67
    %v840 = vpop.permute.xlu0 %839
    %841 = vset.pattern.permute.xlu0 4
    %842 = vperm.xlu0 %841, %v68
    %v843 = vpop.permute.xlu0 %842
    %844 = vset.pattern.permute.xlu0 4
    %845 = vperm.xlu0 %844, %v69
    %v846 = vpop.permute.xlu0 %845
    %vm847 = vcmp.eq.s32.totalorder %v774, %v71
    %vm848 = vcmp.eq.s32.totalorder %v777, %v71
    %vm849 = vcmp.eq.s32.totalorder %v780, %v71
    %vm850 = vcmp.eq.s32.totalorder %v783, %v71
    %vm851 = vcmp.eq.s32.totalorder %v786, %v71
    %vm852 = vcmp.eq.s32.totalorder %v789, %v71
    %vm853 = vcmp.eq.s32.totalorder %v792, %v71
    %vm854 = vcmp.eq.s32.totalorder %v795, %v71
    %vm855 = vcmp.eq.s32.totalorder %v798, %v71
    %vm856 = vcmp.eq.s32.totalorder %v801, %v71
    %vm857 = vcmp.eq.s32.totalorder %v804, %v71
    %vm858 = vcmp.eq.s32.totalorder %v807, %v71
    %vm859 = vcmp.eq.s32.totalorder %v810, %v71
    %vm860 = vcmp.eq.s32.totalorder %v813, %v71
    %vm861 = vcmp.eq.s32.totalorder %v816, %v71
    %vm862 = vcmp.eq.s32.totalorder %v819, %v71
    %vm863 = vcmp.eq.s32.totalorder %v822, %v71
    %vm864 = vcmp.eq.s32.totalorder %v825, %v71
    %vm865 = vcmp.eq.s32.totalorder %v828, %v71
    %vm866 = vcmp.eq.s32.totalorder %v831, %v71
    %vm867 = vcmp.eq.s32.totalorder %v834, %v71
    %vm868 = vcmp.eq.s32.totalorder %v837, %v71
    %vm869 = vcmp.eq.s32.totalorder %v840, %v71
    %vm870 = vcmp.eq.s32.totalorder %v843, %v71
    %vm871 = vcmp.eq.s32.totalorder %v846, %v71
    %v872 = vsel %vm847, 1, 0
    %v873 = vsel %vm848, 1, 0
    %v874 = vsel %vm849, 1, 0
    %v875 = vsel %vm850, 1, 0
    %v876 = vsel %vm851, 1, 0
    %v877 = vsel %vm852, 1, 0
    %v878 = vsel %vm853, 1, 0
    %v879 = vsel %vm854, 1, 0
    %v880 = vsel %vm855, 1, 0
    %v881 = vsel %vm856, 1, 0
    %v882 = vsel %vm857, 1, 0
    %v883 = vsel %vm858, 1, 0
    %v884 = vsel %vm859, 1, 0
    %v885 = vsel %vm860, 1, 0
    %v886 = vsel %vm861, 1, 0
    %v887 = vsel %vm862, 1, 0
    %v888 = vsel %vm863, 1, 0
    %v889 = vsel %vm864, 1, 0
    %v890 = vsel %vm865, 1, 0
    %v891 = vsel %vm866, 1, 0
    %v892 = vsel %vm867, 1, 0
    %v893 = vsel %vm868, 1, 0
    %v894 = vsel %vm869, 1, 0
    %v895 = vsel %vm870, 1, 0
    %v896 = vsel %vm871, 1, 0
    %v897 = vcvt.s32.f32 %v872
    %v898 = vcvt.s32.f32 %v873
    %v899 = vcvt.s32.f32 %v874
    %v900 = vcvt.s32.f32 %v875
    %v901 = vcvt.s32.f32 %v876
    %v902 = vcvt.s32.f32 %v877
    %v903 = vcvt.s32.f32 %v878
    %v904 = vcvt.s32.f32 %v879
    %v905 = vcvt.s32.f32 %v880
    %v906 = vcvt.s32.f32 %v881
    %v907 = vcvt.s32.f32 %v882
    %v908 = vcvt.s32.f32 %v883
    %v909 = vcvt.s32.f32 %v884
    %v910 = vcvt.s32.f32 %v885
    %v911 = vcvt.s32.f32 %v886
    %v912 = vcvt.s32.f32 %v887
    %v913 = vcvt.s32.f32 %v888
    %v914 = vcvt.s32.f32 %v889
    %v915 = vcvt.s32.f32 %v890
    %v916 = vcvt.s32.f32 %v891
    %v917 = vcvt.s32.f32 %v892
    %v918 = vcvt.s32.f32 %v893
    %v919 = vcvt.s32.f32 %v894
    %v920 = vcvt.s32.f32 %v895
    %v921 = vcvt.s32.f32 %v896
    %v922 = vadd.f32 %v747, %v897
    %v923 = vadd.f32 %v748, %v898
    %v924 = vadd.f32 %v749, %v899
    %v925 = vadd.f32 %v750, %v900
    %v926 = vadd.f32 %v751, %v901
    %v927 = vadd.f32 %v752, %v902
    %v928 = vadd.f32 %v753, %v903
    %v929 = vadd.f32 %v754, %v904
    %v930 = vadd.f32 %v755, %v905
    %v931 = vadd.f32 %v756, %v906
    %v932 = vadd.f32 %v757, %v907
    %v933 = vadd.f32 %v758, %v908
    %v934 = vadd.f32 %v759, %v909
    %v935 = vadd.f32 %v760, %v910
    %v936 = vadd.f32 %v761, %v911
    %v937 = vadd.f32 %v762, %v912
    %v938 = vadd.f32 %v763, %v913
    %v939 = vadd.f32 %v764, %v914
    %v940 = vadd.f32 %v765, %v915
    %v941 = vadd.f32 %v766, %v916
    %v942 = vadd.f32 %v767, %v917
    %v943 = vadd.f32 %v768, %v918
    %v944 = vadd.f32 %v769, %v919
    %v945 = vadd.f32 %v770, %v920
    %v946 = vadd.f32 %v771, %v921
    %947 = vset.pattern.permute.xlu0 5
    %948 = vperm.xlu0 %947, %v45
    %v949 = vpop.permute.xlu0 %948
    %950 = vset.pattern.permute.xlu0 5
    %951 = vperm.xlu0 %950, %v46
    %v952 = vpop.permute.xlu0 %951
    %953 = vset.pattern.permute.xlu0 5
    %954 = vperm.xlu0 %953, %v47
    %v955 = vpop.permute.xlu0 %954
    %956 = vset.pattern.permute.xlu0 5
    %957 = vperm.xlu0 %956, %v48
    %v958 = vpop.permute.xlu0 %957
    %959 = vset.pattern.permute.xlu0 5
    %960 = vperm.xlu0 %959, %v49
    %v961 = vpop.permute.xlu0 %960
    %962 = vset.pattern.permute.xlu0 5
    %963 = vperm.xlu0 %962, %v50
    %v964 = vpop.permute.xlu0 %963
    %965 = vset.pattern.permute.xlu0 5
    %966 = vperm.xlu0 %965, %v51
    %v967 = vpop.permute.xlu0 %966
    %968 = vset.pattern.permute.xlu0 5
    %969 = vperm.xlu0 %968, %v52
    %v970 = vpop.permute.xlu0 %969
    %971 = vset.pattern.permute.xlu0 5
    %972 = vperm.xlu0 %971, %v53
    %v973 = vpop.permute.xlu0 %972
    %974 = vset.pattern.permute.xlu0 5
    %975 = vperm.xlu0 %974, %v54
    %v976 = vpop.permute.xlu0 %975
    %977 = vset.pattern.permute.xlu0 5
    %978 = vperm.xlu0 %977, %v55
    %v979 = vpop.permute.xlu0 %978
    %980 = vset.pattern.permute.xlu0 5
    %981 = vperm.xlu0 %980, %v56
    %v982 = vpop.permute.xlu0 %981
    %983 = vset.pattern.permute.xlu0 5
    %984 = vperm.xlu0 %983, %v57
    %v985 = vpop.permute.xlu0 %984
    %986 = vset.pattern.permute.xlu0 5
    %987 = vperm.xlu0 %986, %v58
    %v988 = vpop.permute.xlu0 %987
    %989 = vset.pattern.permute.xlu0 5
    %990 = vperm.xlu0 %989, %v59
    %v991 = vpop.permute.xlu0 %990
    %992 = vset.pattern.permute.xlu0 5
    %993 = vperm.xlu0 %992, %v60
    %v994 = vpop.permute.xlu0 %993
    %995 = vset.pattern.permute.xlu0 5
    %996 = vperm.xlu0 %995, %v61
    %v997 = vpop.permute.xlu0 %996
    %998 = vset.pattern.permute.xlu0 5
    %999 = vperm.xlu0 %998, %v62
    %v1000 = vpop.permute.xlu0 %999
    %1001 = vset.pattern.permute.xlu0 5
    %1002 = vperm.xlu0 %1001, %v63
    %v1003 = vpop.permute.xlu0 %1002
    %1004 = vset.pattern.permute.xlu0 5
    %1005 = vperm.xlu0 %1004, %v64
    %v1006 = vpop.permute.xlu0 %1005
    %1007 = vset.pattern.permute.xlu0 5
    %1008 = vperm.xlu0 %1007, %v65
    %v1009 = vpop.permute.xlu0 %1008
    %1010 = vset.pattern.permute.xlu0 5
    %1011 = vperm.xlu0 %1010, %v66
    %v1012 = vpop.permute.xlu0 %1011
    %1013 = vset.pattern.permute.xlu0 5
    %1014 = vperm.xlu0 %1013, %v67
    %v1015 = vpop.permute.xlu0 %1014
    %1016 = vset.pattern.permute.xlu0 5
    %1017 = vperm.xlu0 %1016, %v68
    %v1018 = vpop.permute.xlu0 %1017
    %1019 = vset.pattern.permute.xlu0 5
    %1020 = vperm.xlu0 %1019, %v69
    %v1021 = vpop.permute.xlu0 %1020
    %vm1022 = vcmp.eq.s32.totalorder %v949, %v71
    %vm1023 = vcmp.eq.s32.totalorder %v952, %v71
    %vm1024 = vcmp.eq.s32.totalorder %v955, %v71
    %vm1025 = vcmp.eq.s32.totalorder %v958, %v71
    %vm1026 = vcmp.eq.s32.totalorder %v961, %v71
    %vm1027 = vcmp.eq.s32.totalorder %v964, %v71
    %vm1028 = vcmp.eq.s32.totalorder %v967, %v71
    %vm1029 = vcmp.eq.s32.totalorder %v970, %v71
    %vm1030 = vcmp.eq.s32.totalorder %v973, %v71
    %vm1031 = vcmp.eq.s32.totalorder %v976, %v71
    %vm1032 = vcmp.eq.s32.totalorder %v979, %v71
    %vm1033 = vcmp.eq.s32.totalorder %v982, %v71
    %vm1034 = vcmp.eq.s32.totalorder %v985, %v71
    %vm1035 = vcmp.eq.s32.totalorder %v988, %v71
    %vm1036 = vcmp.eq.s32.totalorder %v991, %v71
    %vm1037 = vcmp.eq.s32.totalorder %v994, %v71
    %vm1038 = vcmp.eq.s32.totalorder %v997, %v71
    %vm1039 = vcmp.eq.s32.totalorder %v1000, %v71
    %vm1040 = vcmp.eq.s32.totalorder %v1003, %v71
    %vm1041 = vcmp.eq.s32.totalorder %v1006, %v71
    %vm1042 = vcmp.eq.s32.totalorder %v1009, %v71
    %vm1043 = vcmp.eq.s32.totalorder %v1012, %v71
    %vm1044 = vcmp.eq.s32.totalorder %v1015, %v71
    %vm1045 = vcmp.eq.s32.totalorder %v1018, %v71
    %vm1046 = vcmp.eq.s32.totalorder %v1021, %v71
    %v1047 = vsel %vm1022, 1, 0
    %v1048 = vsel %vm1023, 1, 0
    %v1049 = vsel %vm1024, 1, 0
    %v1050 = vsel %vm1025, 1, 0
    %v1051 = vsel %vm1026, 1, 0
    %v1052 = vsel %vm1027, 1, 0
    %v1053 = vsel %vm1028, 1, 0
    %v1054 = vsel %vm1029, 1, 0
    %v1055 = vsel %vm1030, 1, 0
    %v1056 = vsel %vm1031, 1, 0
    %v1057 = vsel %vm1032, 1, 0
    %v1058 = vsel %vm1033, 1, 0
    %v1059 = vsel %vm1034, 1, 0
    %v1060 = vsel %vm1035, 1, 0
    %v1061 = vsel %vm1036, 1, 0
    %v1062 = vsel %vm1037, 1, 0
    %v1063 = vsel %vm1038, 1, 0
    %v1064 = vsel %vm1039, 1, 0
    %v1065 = vsel %vm1040, 1, 0
    %v1066 = vsel %vm1041, 1, 0
    %v1067 = vsel %vm1042, 1, 0
    %v1068 = vsel %vm1043, 1, 0
    %v1069 = vsel %vm1044, 1, 0
    %v1070 = vsel %vm1045, 1, 0
    %v1071 = vsel %vm1046, 1, 0
    %v1072 = vcvt.s32.f32 %v1047
    %v1073 = vcvt.s32.f32 %v1048
    %v1074 = vcvt.s32.f32 %v1049
    %v1075 = vcvt.s32.f32 %v1050
    %v1076 = vcvt.s32.f32 %v1051
    %v1077 = vcvt.s32.f32 %v1052
    %v1078 = vcvt.s32.f32 %v1053
    %v1079 = vcvt.s32.f32 %v1054
    %v1080 = vcvt.s32.f32 %v1055
    %v1081 = vcvt.s32.f32 %v1056
    %v1082 = vcvt.s32.f32 %v1057
    %v1083 = vcvt.s32.f32 %v1058
    %v1084 = vcvt.s32.f32 %v1059
    %v1085 = vcvt.s32.f32 %v1060
    %v1086 = vcvt.s32.f32 %v1061
    %v1087 = vcvt.s32.f32 %v1062
    %v1088 = vcvt.s32.f32 %v1063
    %v1089 = vcvt.s32.f32 %v1064
    %v1090 = vcvt.s32.f32 %v1065
    %v1091 = vcvt.s32.f32 %v1066
    %v1092 = vcvt.s32.f32 %v1067
    %v1093 = vcvt.s32.f32 %v1068
    %v1094 = vcvt.s32.f32 %v1069
    %v1095 = vcvt.s32.f32 %v1070
    %v1096 = vcvt.s32.f32 %v1071
    %v1097 = vadd.f32 %v922, %v1072
    %v1098 = vadd.f32 %v923, %v1073
    %v1099 = vadd.f32 %v924, %v1074
    %v1100 = vadd.f32 %v925, %v1075
    %v1101 = vadd.f32 %v926, %v1076
    %v1102 = vadd.f32 %v927, %v1077
    %v1103 = vadd.f32 %v928, %v1078
    %v1104 = vadd.f32 %v929, %v1079
    %v1105 = vadd.f32 %v930, %v1080
    %v1106 = vadd.f32 %v931, %v1081
    %v1107 = vadd.f32 %v932, %v1082
    %v1108 = vadd.f32 %v933, %v1083
    %v1109 = vadd.f32 %v934, %v1084
    %v1110 = vadd.f32 %v935, %v1085
    %v1111 = vadd.f32 %v936, %v1086
    %v1112 = vadd.f32 %v937, %v1087
    %v1113 = vadd.f32 %v938, %v1088
    %v1114 = vadd.f32 %v939, %v1089
    %v1115 = vadd.f32 %v940, %v1090
    %v1116 = vadd.f32 %v941, %v1091
    %v1117 = vadd.f32 %v942, %v1092
    %v1118 = vadd.f32 %v943, %v1093
    %v1119 = vadd.f32 %v944, %v1094
    %v1120 = vadd.f32 %v945, %v1095
    %v1121 = vadd.f32 %v946, %v1096
    %1122 = vset.pattern.permute.xlu0 6
    %1123 = vperm.xlu0 %1122, %v45
    %v1124 = vpop.permute.xlu0 %1123
    %1125 = vset.pattern.permute.xlu0 6
    %1126 = vperm.xlu0 %1125, %v46
    %v1127 = vpop.permute.xlu0 %1126
    %1128 = vset.pattern.permute.xlu0 6
    %1129 = vperm.xlu0 %1128, %v47
    %v1130 = vpop.permute.xlu0 %1129
    %1131 = vset.pattern.permute.xlu0 6
    %1132 = vperm.xlu0 %1131, %v48
    %v1133 = vpop.permute.xlu0 %1132
    %1134 = vset.pattern.permute.xlu0 6
    %1135 = vperm.xlu0 %1134, %v49
    %v1136 = vpop.permute.xlu0 %1135
    %1137 = vset.pattern.permute.xlu0 6
    %1138 = vperm.xlu0 %1137, %v50
    %v1139 = vpop.permute.xlu0 %1138
    %1140 = vset.pattern.permute.xlu0 6
    %1141 = vperm.xlu0 %1140, %v51
    %v1142 = vpop.permute.xlu0 %1141
    %1143 = vset.pattern.permute.xlu0 6
    %1144 = vperm.xlu0 %1143, %v52
    %v1145 = vpop.permute.xlu0 %1144
    %1146 = vset.pattern.permute.xlu0 6
    %1147 = vperm.xlu0 %1146, %v53
    %v1148 = vpop.permute.xlu0 %1147
    %1149 = vset.pattern.permute.xlu0 6
    %1150 = vperm.xlu0 %1149, %v54
    %v1151 = vpop.permute.xlu0 %1150
    %1152 = vset.pattern.permute.xlu0 6
    %1153 = vperm.xlu0 %1152, %v55
    %v1154 = vpop.permute.xlu0 %1153
    %1155 = vset.pattern.permute.xlu0 6
    %1156 = vperm.xlu0 %1155, %v56
    %v1157 = vpop.permute.xlu0 %1156
    %1158 = vset.pattern.permute.xlu0 6
    %1159 = vperm.xlu0 %1158, %v57
    %v1160 = vpop.permute.xlu0 %1159
    %1161 = vset.pattern.permute.xlu0 6
    %1162 = vperm.xlu0 %1161, %v58
    %v1163 = vpop.permute.xlu0 %1162
    %1164 = vset.pattern.permute.xlu0 6
    %1165 = vperm.xlu0 %1164, %v59
    %v1166 = vpop.permute.xlu0 %1165
    %1167 = vset.pattern.permute.xlu0 6
    %1168 = vperm.xlu0 %1167, %v60
    %v1169 = vpop.permute.xlu0 %1168
    %1170 = vset.pattern.permute.xlu0 6
    %1171 = vperm.xlu0 %1170, %v61
    %v1172 = vpop.permute.xlu0 %1171
    %1173 = vset.pattern.permute.xlu0 6
    %1174 = vperm.xlu0 %1173, %v62
    %v1175 = vpop.permute.xlu0 %1174
    %1176 = vset.pattern.permute.xlu0 6
    %1177 = vperm.xlu0 %1176, %v63
    %v1178 = vpop.permute.xlu0 %1177
    %1179 = vset.pattern.permute.xlu0 6
    %1180 = vperm.xlu0 %1179, %v64
    %v1181 = vpop.permute.xlu0 %1180
    %1182 = vset.pattern.permute.xlu0 6
    %1183 = vperm.xlu0 %1182, %v65
    %v1184 = vpop.permute.xlu0 %1183
    %1185 = vset.pattern.permute.xlu0 6
    %1186 = vperm.xlu0 %1185, %v66
    %v1187 = vpop.permute.xlu0 %1186
    %1188 = vset.pattern.permute.xlu0 6
    %1189 = vperm.xlu0 %1188, %v67
    %v1190 = vpop.permute.xlu0 %1189
    %1191 = vset.pattern.permute.xlu0 6
    %1192 = vperm.xlu0 %1191, %v68
    %v1193 = vpop.permute.xlu0 %1192
    %1194 = vset.pattern.permute.xlu0 6
    %1195 = vperm.xlu0 %1194, %v69
    %v1196 = vpop.permute.xlu0 %1195
    %vm1197 = vcmp.eq.s32.totalorder %v1124, %v71
    %vm1198 = vcmp.eq.s32.totalorder %v1127, %v71
    %vm1199 = vcmp.eq.s32.totalorder %v1130, %v71
    %vm1200 = vcmp.eq.s32.totalorder %v1133, %v71
    %vm1201 = vcmp.eq.s32.totalorder %v1136, %v71
    %vm1202 = vcmp.eq.s32.totalorder %v1139, %v71
    %vm1203 = vcmp.eq.s32.totalorder %v1142, %v71
    %vm1204 = vcmp.eq.s32.totalorder %v1145, %v71
    %vm1205 = vcmp.eq.s32.totalorder %v1148, %v71
    %vm1206 = vcmp.eq.s32.totalorder %v1151, %v71
    %vm1207 = vcmp.eq.s32.totalorder %v1154, %v71
    %vm1208 = vcmp.eq.s32.totalorder %v1157, %v71
    %vm1209 = vcmp.eq.s32.totalorder %v1160, %v71
    %vm1210 = vcmp.eq.s32.totalorder %v1163, %v71
    %vm1211 = vcmp.eq.s32.totalorder %v1166, %v71
    %vm1212 = vcmp.eq.s32.totalorder %v1169, %v71
    %vm1213 = vcmp.eq.s32.totalorder %v1172, %v71
    %vm1214 = vcmp.eq.s32.totalorder %v1175, %v71
    %vm1215 = vcmp.eq.s32.totalorder %v1178, %v71
    %vm1216 = vcmp.eq.s32.totalorder %v1181, %v71
    %vm1217 = vcmp.eq.s32.totalorder %v1184, %v71
    %vm1218 = vcmp.eq.s32.totalorder %v1187, %v71
    %vm1219 = vcmp.eq.s32.totalorder %v1190, %v71
    %vm1220 = vcmp.eq.s32.totalorder %v1193, %v71
    %vm1221 = vcmp.eq.s32.totalorder %v1196, %v71
    %v1222 = vsel %vm1197, 1, 0
    %v1223 = vsel %vm1198, 1, 0
    %v1224 = vsel %vm1199, 1, 0
    %v1225 = vsel %vm1200, 1, 0
    %v1226 = vsel %vm1201, 1, 0
    %v1227 = vsel %vm1202, 1, 0
    %v1228 = vsel %vm1203, 1, 0
    %v1229 = vsel %vm1204, 1, 0
    %v1230 = vsel %vm1205, 1, 0
    %v1231 = vsel %vm1206, 1, 0
    %v1232 = vsel %vm1207, 1, 0
    %v1233 = vsel %vm1208, 1, 0
    %v1234 = vsel %vm1209, 1, 0
    %v1235 = vsel %vm1210, 1, 0
    %v1236 = vsel %vm1211, 1, 0
    %v1237 = vsel %vm1212, 1, 0
    %v1238 = vsel %vm1213, 1, 0
    %v1239 = vsel %vm1214, 1, 0
    %v1240 = vsel %vm1215, 1, 0
    %v1241 = vsel %vm1216, 1, 0
    %v1242 = vsel %vm1217, 1, 0
    %v1243 = vsel %vm1218, 1, 0
    %v1244 = vsel %vm1219, 1, 0
    %v1245 = vsel %vm1220, 1, 0
    %v1246 = vsel %vm1221, 1, 0
    %v1247 = vcvt.s32.f32 %v1222
    %v1248 = vcvt.s32.f32 %v1223
    %v1249 = vcvt.s32.f32 %v1224
    %v1250 = vcvt.s32.f32 %v1225
    %v1251 = vcvt.s32.f32 %v1226
    %v1252 = vcvt.s32.f32 %v1227
    %v1253 = vcvt.s32.f32 %v1228
    %v1254 = vcvt.s32.f32 %v1229
    %v1255 = vcvt.s32.f32 %v1230
    %v1256 = vcvt.s32.f32 %v1231
    %v1257 = vcvt.s32.f32 %v1232
    %v1258 = vcvt.s32.f32 %v1233
    %v1259 = vcvt.s32.f32 %v1234
    %v1260 = vcvt.s32.f32 %v1235
    %v1261 = vcvt.s32.f32 %v1236
    %v1262 = vcvt.s32.f32 %v1237
    %v1263 = vcvt.s32.f32 %v1238
    %v1264 = vcvt.s32.f32 %v1239
    %v1265 = vcvt.s32.f32 %v1240
    %v1266 = vcvt.s32.f32 %v1241
    %v1267 = vcvt.s32.f32 %v1242
    %v1268 = vcvt.s32.f32 %v1243
    %v1269 = vcvt.s32.f32 %v1244
    %v1270 = vcvt.s32.f32 %v1245
    %v1271 = vcvt.s32.f32 %v1246
    %v1272 = vadd.f32 %v1097, %v1247
    %v1273 = vadd.f32 %v1098, %v1248
    %v1274 = vadd.f32 %v1099, %v1249
    %v1275 = vadd.f32 %v1100, %v1250
    %v1276 = vadd.f32 %v1101, %v1251
    %v1277 = vadd.f32 %v1102, %v1252
    %v1278 = vadd.f32 %v1103, %v1253
    %v1279 = vadd.f32 %v1104, %v1254
    %v1280 = vadd.f32 %v1105, %v1255
    %v1281 = vadd.f32 %v1106, %v1256
    %v1282 = vadd.f32 %v1107, %v1257
    %v1283 = vadd.f32 %v1108, %v1258
    %v1284 = vadd.f32 %v1109, %v1259
    %v1285 = vadd.f32 %v1110, %v1260
    %v1286 = vadd.f32 %v1111, %v1261
    %v1287 = vadd.f32 %v1112, %v1262
    %v1288 = vadd.f32 %v1113, %v1263
    %v1289 = vadd.f32 %v1114, %v1264
    %v1290 = vadd.f32 %v1115, %v1265
    %v1291 = vadd.f32 %v1116, %v1266
    %v1292 = vadd.f32 %v1117, %v1267
    %v1293 = vadd.f32 %v1118, %v1268
    %v1294 = vadd.f32 %v1119, %v1269
    %v1295 = vadd.f32 %v1120, %v1270
    %v1296 = vadd.f32 %v1121, %v1271
    %1297 = vset.pattern.permute.xlu0 7
    %1298 = vperm.xlu0 %1297, %v45
    %v1299 = vpop.permute.xlu0 %1298
    %1300 = vset.pattern.permute.xlu0 7
    %1301 = vperm.xlu0 %1300, %v46
    %v1302 = vpop.permute.xlu0 %1301
    %1303 = vset.pattern.permute.xlu0 7
    %1304 = vperm.xlu0 %1303, %v47
    %v1305 = vpop.permute.xlu0 %1304
    %1306 = vset.pattern.permute.xlu0 7
    %1307 = vperm.xlu0 %1306, %v48
    %v1308 = vpop.permute.xlu0 %1307
    %1309 = vset.pattern.permute.xlu0 7
    %1310 = vperm.xlu0 %1309, %v49
    %v1311 = vpop.permute.xlu0 %1310
    %1312 = vset.pattern.permute.xlu0 7
    %1313 = vperm.xlu0 %1312, %v50
    %v1314 = vpop.permute.xlu0 %1313
    %1315 = vset.pattern.permute.xlu0 7
    %1316 = vperm.xlu0 %1315, %v51
    %v1317 = vpop.permute.xlu0 %1316
    %1318 = vset.pattern.permute.xlu0 7
    %1319 = vperm.xlu0 %1318, %v52
    %v1320 = vpop.permute.xlu0 %1319
    %1321 = vset.pattern.permute.xlu0 7
    %1322 = vperm.xlu0 %1321, %v53
    %v1323 = vpop.permute.xlu0 %1322
    %1324 = vset.pattern.permute.xlu0 7
    %1325 = vperm.xlu0 %1324, %v54
    %v1326 = vpop.permute.xlu0 %1325
    %1327 = vset.pattern.permute.xlu0 7
    %1328 = vperm.xlu0 %1327, %v55
    %v1329 = vpop.permute.xlu0 %1328
    %1330 = vset.pattern.permute.xlu0 7
    %1331 = vperm.xlu0 %1330, %v56
    %v1332 = vpop.permute.xlu0 %1331
    %1333 = vset.pattern.permute.xlu0 7
    %1334 = vperm.xlu0 %1333, %v57
    %v1335 = vpop.permute.xlu0 %1334
    %1336 = vset.pattern.permute.xlu0 7
    %1337 = vperm.xlu0 %1336, %v58
    %v1338 = vpop.permute.xlu0 %1337
    %1339 = vset.pattern.permute.xlu0 7
    %1340 = vperm.xlu0 %1339, %v59
    %v1341 = vpop.permute.xlu0 %1340
    %1342 = vset.pattern.permute.xlu0 7
    %1343 = vperm.xlu0 %1342, %v60
    %v1344 = vpop.permute.xlu0 %1343
    %1345 = vset.pattern.permute.xlu0 7
    %1346 = vperm.xlu0 %1345, %v61
    %v1347 = vpop.permute.xlu0 %1346
    %1348 = vset.pattern.permute.xlu0 7
    %1349 = vperm.xlu0 %1348, %v62
    %v1350 = vpop.permute.xlu0 %1349
    %1351 = vset.pattern.permute.xlu0 7
    %1352 = vperm.xlu0 %1351, %v63
    %v1353 = vpop.permute.xlu0 %1352
    %1354 = vset.pattern.permute.xlu0 7
    %1355 = vperm.xlu0 %1354, %v64
    %v1356 = vpop.permute.xlu0 %1355
    %1357 = vset.pattern.permute.xlu0 7
    %1358 = vperm.xlu0 %1357, %v65
    %v1359 = vpop.permute.xlu0 %1358
    %1360 = vset.pattern.permute.xlu0 7
    %1361 = vperm.xlu0 %1360, %v66
    %v1362 = vpop.permute.xlu0 %1361
    %1363 = vset.pattern.permute.xlu0 7
    %1364 = vperm.xlu0 %1363, %v67
    %v1365 = vpop.permute.xlu0 %1364
    %1366 = vset.pattern.permute.xlu0 7
    %1367 = vperm.xlu0 %1366, %v68
    %v1368 = vpop.permute.xlu0 %1367
    %1369 = vset.pattern.permute.xlu0 7
    %1370 = vperm.xlu0 %1369, %v69
    %v1371 = vpop.permute.xlu0 %1370
    %vm1372 = vcmp.eq.s32.totalorder %v1299, %v71
    %vm1373 = vcmp.eq.s32.totalorder %v1302, %v71
    %vm1374 = vcmp.eq.s32.totalorder %v1305, %v71
    %vm1375 = vcmp.eq.s32.totalorder %v1308, %v71
    %vm1376 = vcmp.eq.s32.totalorder %v1311, %v71
    %vm1377 = vcmp.eq.s32.totalorder %v1314, %v71
    %vm1378 = vcmp.eq.s32.totalorder %v1317, %v71
    %vm1379 = vcmp.eq.s32.totalorder %v1320, %v71
    %vm1380 = vcmp.eq.s32.totalorder %v1323, %v71
    %vm1381 = vcmp.eq.s32.totalorder %v1326, %v71
    %vm1382 = vcmp.eq.s32.totalorder %v1329, %v71
    %vm1383 = vcmp.eq.s32.totalorder %v1332, %v71
    %vm1384 = vcmp.eq.s32.totalorder %v1335, %v71
    %vm1385 = vcmp.eq.s32.totalorder %v1338, %v71
    %vm1386 = vcmp.eq.s32.totalorder %v1341, %v71
    %vm1387 = vcmp.eq.s32.totalorder %v1344, %v71
    %vm1388 = vcmp.eq.s32.totalorder %v1347, %v71
    %vm1389 = vcmp.eq.s32.totalorder %v1350, %v71
    %vm1390 = vcmp.eq.s32.totalorder %v1353, %v71
    %vm1391 = vcmp.eq.s32.totalorder %v1356, %v71
    %vm1392 = vcmp.eq.s32.totalorder %v1359, %v71
    %vm1393 = vcmp.eq.s32.totalorder %v1362, %v71
    %vm1394 = vcmp.eq.s32.totalorder %v1365, %v71
    %vm1395 = vcmp.eq.s32.totalorder %v1368, %v71
    %vm1396 = vcmp.eq.s32.totalorder %v1371, %v71
    %v1397 = vsel %vm1372, 1, 0
    %v1398 = vsel %vm1373, 1, 0
    %v1399 = vsel %vm1374, 1, 0
    %v1400 = vsel %vm1375, 1, 0
    %v1401 = vsel %vm1376, 1, 0
    %v1402 = vsel %vm1377, 1, 0
    %v1403 = vsel %vm1378, 1, 0
    %v1404 = vsel %vm1379, 1, 0
    %v1405 = vsel %vm1380, 1, 0
    %v1406 = vsel %vm1381, 1, 0
    %v1407 = vsel %vm1382, 1, 0
    %v1408 = vsel %vm1383, 1, 0
    %v1409 = vsel %vm1384, 1, 0
    %v1410 = vsel %vm1385, 1, 0
    %v1411 = vsel %vm1386, 1, 0
    %v1412 = vsel %vm1387, 1, 0
    %v1413 = vsel %vm1388, 1, 0
    %v1414 = vsel %vm1389, 1, 0
    %v1415 = vsel %vm1390, 1, 0
    %v1416 = vsel %vm1391, 1, 0
    %v1417 = vsel %vm1392, 1, 0
    %v1418 = vsel %vm1393, 1, 0
    %v1419 = vsel %vm1394, 1, 0
    %v1420 = vsel %vm1395, 1, 0
    %v1421 = vsel %vm1396, 1, 0
    %v1422 = vcvt.s32.f32 %v1397
    %v1423 = vcvt.s32.f32 %v1398
    %v1424 = vcvt.s32.f32 %v1399
    %v1425 = vcvt.s32.f32 %v1400
    %v1426 = vcvt.s32.f32 %v1401
    %v1427 = vcvt.s32.f32 %v1402
    %v1428 = vcvt.s32.f32 %v1403
    %v1429 = vcvt.s32.f32 %v1404
    %v1430 = vcvt.s32.f32 %v1405
    %v1431 = vcvt.s32.f32 %v1406
    %v1432 = vcvt.s32.f32 %v1407
    %v1433 = vcvt.s32.f32 %v1408
    %v1434 = vcvt.s32.f32 %v1409
    %v1435 = vcvt.s32.f32 %v1410
    %v1436 = vcvt.s32.f32 %v1411
    %v1437 = vcvt.s32.f32 %v1412
    %v1438 = vcvt.s32.f32 %v1413
    %v1439 = vcvt.s32.f32 %v1414
    %v1440 = vcvt.s32.f32 %v1415
    %v1441 = vcvt.s32.f32 %v1416
    %v1442 = vcvt.s32.f32 %v1417
    %v1443 = vcvt.s32.f32 %v1418
    %v1444 = vcvt.s32.f32 %v1419
    %v1445 = vcvt.s32.f32 %v1420
    %v1446 = vcvt.s32.f32 %v1421
    %v1447 = vadd.f32 %v1272, %v1422
    %v1448 = vadd.f32 %v1273, %v1423
    %v1449 = vadd.f32 %v1274, %v1424
    %v1450 = vadd.f32 %v1275, %v1425
    %v1451 = vadd.f32 %v1276, %v1426
    %v1452 = vadd.f32 %v1277, %v1427
    %v1453 = vadd.f32 %v1278, %v1428
    %v1454 = vadd.f32 %v1279, %v1429
    %v1455 = vadd.f32 %v1280, %v1430
    %v1456 = vadd.f32 %v1281, %v1431
    %v1457 = vadd.f32 %v1282, %v1432
    %v1458 = vadd.f32 %v1283, %v1433
    %v1459 = vadd.f32 %v1284, %v1434
    %v1460 = vadd.f32 %v1285, %v1435
    %v1461 = vadd.f32 %v1286, %v1436
    %v1462 = vadd.f32 %v1287, %v1437
    %v1463 = vadd.f32 %v1288, %v1438
    %v1464 = vadd.f32 %v1289, %v1439
    %v1465 = vadd.f32 %v1290, %v1440
    %v1466 = vadd.f32 %v1291, %v1441
    %v1467 = vadd.f32 %v1292, %v1442
    %v1468 = vadd.f32 %v1293, %v1443
    %v1469 = vadd.f32 %v1294, %v1444
    %v1470 = vadd.f32 %v1295, %v1445
    %v1471 = vadd.f32 %v1296, %v1446
    %1472 = vset.pattern.permute.xlu0 8
    %1473 = vperm.xlu0 %1472, %v45
    %v1474 = vpop.permute.xlu0 %1473
    %1475 = vset.pattern.permute.xlu0 8
    %1476 = vperm.xlu0 %1475, %v46
    %v1477 = vpop.permute.xlu0 %1476
    %1478 = vset.pattern.permute.xlu0 8
    %1479 = vperm.xlu0 %1478, %v47
    %v1480 = vpop.permute.xlu0 %1479
    %1481 = vset.pattern.permute.xlu0 8
    %1482 = vperm.xlu0 %1481, %v48
    %v1483 = vpop.permute.xlu0 %1482
    %1484 = vset.pattern.permute.xlu0 8
    %1485 = vperm.xlu0 %1484, %v49
    %v1486 = vpop.permute.xlu0 %1485
    %1487 = vset.pattern.permute.xlu0 8
    %1488 = vperm.xlu0 %1487, %v50
    %v1489 = vpop.permute.xlu0 %1488
    %1490 = vset.pattern.permute.xlu0 8
    %1491 = vperm.xlu0 %1490, %v51
    %v1492 = vpop.permute.xlu0 %1491
    %1493 = vset.pattern.permute.xlu0 8
    %1494 = vperm.xlu0 %1493, %v52
    %v1495 = vpop.permute.xlu0 %1494
    %1496 = vset.pattern.permute.xlu0 8
    %1497 = vperm.xlu0 %1496, %v53
    %v1498 = vpop.permute.xlu0 %1497
    %1499 = vset.pattern.permute.xlu0 8
    %1500 = vperm.xlu0 %1499, %v54
    %v1501 = vpop.permute.xlu0 %1500
    %1502 = vset.pattern.permute.xlu0 8
    %1503 = vperm.xlu0 %1502, %v55
    %v1504 = vpop.permute.xlu0 %1503
    %1505 = vset.pattern.permute.xlu0 8
    %1506 = vperm.xlu0 %1505, %v56
    %v1507 = vpop.permute.xlu0 %1506
    %1508 = vset.pattern.permute.xlu0 8
    %1509 = vperm.xlu0 %1508, %v57
    %v1510 = vpop.permute.xlu0 %1509
    %1511 = vset.pattern.permute.xlu0 8
    %1512 = vperm.xlu0 %1511, %v58
    %v1513 = vpop.permute.xlu0 %1512
    %1514 = vset.pattern.permute.xlu0 8
    %1515 = vperm.xlu0 %1514, %v59
    %v1516 = vpop.permute.xlu0 %1515
    %1517 = vset.pattern.permute.xlu0 8
    %1518 = vperm.xlu0 %1517, %v60
    %v1519 = vpop.permute.xlu0 %1518
    %1520 = vset.pattern.permute.xlu0 8
    %1521 = vperm.xlu0 %1520, %v61
    %v1522 = vpop.permute.xlu0 %1521
    %1523 = vset.pattern.permute.xlu0 8
    %1524 = vperm.xlu0 %1523, %v62
    %v1525 = vpop.permute.xlu0 %1524
    %1526 = vset.pattern.permute.xlu0 8
    %1527 = vperm.xlu0 %1526, %v63
    %v1528 = vpop.permute.xlu0 %1527
    %1529 = vset.pattern.permute.xlu0 8
    %1530 = vperm.xlu0 %1529, %v64
    %v1531 = vpop.permute.xlu0 %1530
    %1532 = vset.pattern.permute.xlu0 8
    %1533 = vperm.xlu0 %1532, %v65
    %v1534 = vpop.permute.xlu0 %1533
    %1535 = vset.pattern.permute.xlu0 8
    %1536 = vperm.xlu0 %1535, %v66
    %v1537 = vpop.permute.xlu0 %1536
    %1538 = vset.pattern.permute.xlu0 8
    %1539 = vperm.xlu0 %1538, %v67
    %v1540 = vpop.permute.xlu0 %1539
    %1541 = vset.pattern.permute.xlu0 8
    %1542 = vperm.xlu0 %1541, %v68
    %v1543 = vpop.permute.xlu0 %1542
    %1544 = vset.pattern.permute.xlu0 8
    %1545 = vperm.xlu0 %1544, %v69
    %v1546 = vpop.permute.xlu0 %1545
    %vm1547 = vcmp.eq.s32.totalorder %v1474, %v71
    %vm1548 = vcmp.eq.s32.totalorder %v1477, %v71
    %vm1549 = vcmp.eq.s32.totalorder %v1480, %v71
    %vm1550 = vcmp.eq.s32.totalorder %v1483, %v71
    %vm1551 = vcmp.eq.s32.totalorder %v1486, %v71
    %vm1552 = vcmp.eq.s32.totalorder %v1489, %v71
    %vm1553 = vcmp.eq.s32.totalorder %v1492, %v71
    %vm1554 = vcmp.eq.s32.totalorder %v1495, %v71
    %vm1555 = vcmp.eq.s32.totalorder %v1498, %v71
    %vm1556 = vcmp.eq.s32.totalorder %v1501, %v71
    %vm1557 = vcmp.eq.s32.totalorder %v1504, %v71
    %vm1558 = vcmp.eq.s32.totalorder %v1507, %v71
    %vm1559 = vcmp.eq.s32.totalorder %v1510, %v71
    %vm1560 = vcmp.eq.s32.totalorder %v1513, %v71
    %vm1561 = vcmp.eq.s32.totalorder %v1516, %v71
    %vm1562 = vcmp.eq.s32.totalorder %v1519, %v71
    %vm1563 = vcmp.eq.s32.totalorder %v1522, %v71
    %vm1564 = vcmp.eq.s32.totalorder %v1525, %v71
    %vm1565 = vcmp.eq.s32.totalorder %v1528, %v71
    %vm1566 = vcmp.eq.s32.totalorder %v1531, %v71
    %vm1567 = vcmp.eq.s32.totalorder %v1534, %v71
    %vm1568 = vcmp.eq.s32.totalorder %v1537, %v71
    %vm1569 = vcmp.eq.s32.totalorder %v1540, %v71
    %vm1570 = vcmp.eq.s32.totalorder %v1543, %v71
    %vm1571 = vcmp.eq.s32.totalorder %v1546, %v71
    %v1572 = vsel %vm1547, 1, 0
    %v1573 = vsel %vm1548, 1, 0
    %v1574 = vsel %vm1549, 1, 0
    %v1575 = vsel %vm1550, 1, 0
    %v1576 = vsel %vm1551, 1, 0
    %v1577 = vsel %vm1552, 1, 0
    %v1578 = vsel %vm1553, 1, 0
    %v1579 = vsel %vm1554, 1, 0
    %v1580 = vsel %vm1555, 1, 0
    %v1581 = vsel %vm1556, 1, 0
    %v1582 = vsel %vm1557, 1, 0
    %v1583 = vsel %vm1558, 1, 0
    %v1584 = vsel %vm1559, 1, 0
    %v1585 = vsel %vm1560, 1, 0
    %v1586 = vsel %vm1561, 1, 0
    %v1587 = vsel %vm1562, 1, 0
    %v1588 = vsel %vm1563, 1, 0
    %v1589 = vsel %vm1564, 1, 0
    %v1590 = vsel %vm1565, 1, 0
    %v1591 = vsel %vm1566, 1, 0
    %v1592 = vsel %vm1567, 1, 0
    %v1593 = vsel %vm1568, 1, 0
    %v1594 = vsel %vm1569, 1, 0
    %v1595 = vsel %vm1570, 1, 0
    %v1596 = vsel %vm1571, 1, 0
    %v1597 = vcvt.s32.f32 %v1572
    %v1598 = vcvt.s32.f32 %v1573
    %v1599 = vcvt.s32.f32 %v1574
    %v1600 = vcvt.s32.f32 %v1575
    %v1601 = vcvt.s32.f32 %v1576
    %v1602 = vcvt.s32.f32 %v1577
    %v1603 = vcvt.s32.f32 %v1578
    %v1604 = vcvt.s32.f32 %v1579
    %v1605 = vcvt.s32.f32 %v1580
    %v1606 = vcvt.s32.f32 %v1581
    %v1607 = vcvt.s32.f32 %v1582
    %v1608 = vcvt.s32.f32 %v1583
    %v1609 = vcvt.s32.f32 %v1584
    %v1610 = vcvt.s32.f32 %v1585
    %v1611 = vcvt.s32.f32 %v1586
    %v1612 = vcvt.s32.f32 %v1587
    %v1613 = vcvt.s32.f32 %v1588
    %v1614 = vcvt.s32.f32 %v1589
    %v1615 = vcvt.s32.f32 %v1590
    %v1616 = vcvt.s32.f32 %v1591
    %v1617 = vcvt.s32.f32 %v1592
    %v1618 = vcvt.s32.f32 %v1593
    %v1619 = vcvt.s32.f32 %v1594
    %v1620 = vcvt.s32.f32 %v1595
    %v1621 = vcvt.s32.f32 %v1596
    %v1622 = vadd.f32 %v1447, %v1597
    %v1623 = vadd.f32 %v1448, %v1598
    %v1624 = vadd.f32 %v1449, %v1599
    %v1625 = vadd.f32 %v1450, %v1600
    %v1626 = vadd.f32 %v1451, %v1601
    %v1627 = vadd.f32 %v1452, %v1602
    %v1628 = vadd.f32 %v1453, %v1603
    %v1629 = vadd.f32 %v1454, %v1604
    %v1630 = vadd.f32 %v1455, %v1605
    %v1631 = vadd.f32 %v1456, %v1606
    %v1632 = vadd.f32 %v1457, %v1607
    %v1633 = vadd.f32 %v1458, %v1608
    %v1634 = vadd.f32 %v1459, %v1609
    %v1635 = vadd.f32 %v1460, %v1610
    %v1636 = vadd.f32 %v1461, %v1611
    %v1637 = vadd.f32 %v1462, %v1612
    %v1638 = vadd.f32 %v1463, %v1613
    %v1639 = vadd.f32 %v1464, %v1614
    %v1640 = vadd.f32 %v1465, %v1615
    %v1641 = vadd.f32 %v1466, %v1616
    %v1642 = vadd.f32 %v1467, %v1617
    %v1643 = vadd.f32 %v1468, %v1618
    %v1644 = vadd.f32 %v1469, %v1619
    %v1645 = vadd.f32 %v1470, %v1620
    %v1646 = vadd.f32 %v1471, %v1621
    %1647 = vset.pattern.permute.xlu0 9
    %1648 = vperm.xlu0 %1647, %v45
    %v1649 = vpop.permute.xlu0 %1648
    %1650 = vset.pattern.permute.xlu0 9
    %1651 = vperm.xlu0 %1650, %v46
    %v1652 = vpop.permute.xlu0 %1651
    %1653 = vset.pattern.permute.xlu0 9
    %1654 = vperm.xlu0 %1653, %v47
    %v1655 = vpop.permute.xlu0 %1654
    %1656 = vset.pattern.permute.xlu0 9
    %1657 = vperm.xlu0 %1656, %v48
    %v1658 = vpop.permute.xlu0 %1657
    %1659 = vset.pattern.permute.xlu0 9
    %1660 = vperm.xlu0 %1659, %v49
    %v1661 = vpop.permute.xlu0 %1660
    %1662 = vset.pattern.permute.xlu0 9
    %1663 = vperm.xlu0 %1662, %v50
    %v1664 = vpop.permute.xlu0 %1663
    %1665 = vset.pattern.permute.xlu0 9
    %1666 = vperm.xlu0 %1665, %v51
    %v1667 = vpop.permute.xlu0 %1666
    %1668 = vset.pattern.permute.xlu0 9
    %1669 = vperm.xlu0 %1668, %v52
    %v1670 = vpop.permute.xlu0 %1669
    %1671 = vset.pattern.permute.xlu0 9
    %1672 = vperm.xlu0 %1671, %v53
    %v1673 = vpop.permute.xlu0 %1672
    %1674 = vset.pattern.permute.xlu0 9
    %1675 = vperm.xlu0 %1674, %v54
    %v1676 = vpop.permute.xlu0 %1675
    %1677 = vset.pattern.permute.xlu0 9
    %1678 = vperm.xlu0 %1677, %v55
    %v1679 = vpop.permute.xlu0 %1678
    %1680 = vset.pattern.permute.xlu0 9
    %1681 = vperm.xlu0 %1680, %v56
    %v1682 = vpop.permute.xlu0 %1681
    %1683 = vset.pattern.permute.xlu0 9
    %1684 = vperm.xlu0 %1683, %v57
    %v1685 = vpop.permute.xlu0 %1684
    %1686 = vset.pattern.permute.xlu0 9
    %1687 = vperm.xlu0 %1686, %v58
    %v1688 = vpop.permute.xlu0 %1687
    %1689 = vset.pattern.permute.xlu0 9
    %1690 = vperm.xlu0 %1689, %v59
    %v1691 = vpop.permute.xlu0 %1690
    %1692 = vset.pattern.permute.xlu0 9
    %1693 = vperm.xlu0 %1692, %v60
    %v1694 = vpop.permute.xlu0 %1693
    %1695 = vset.pattern.permute.xlu0 9
    %1696 = vperm.xlu0 %1695, %v61
    %v1697 = vpop.permute.xlu0 %1696
    %1698 = vset.pattern.permute.xlu0 9
    %1699 = vperm.xlu0 %1698, %v62
    %v1700 = vpop.permute.xlu0 %1699
    %1701 = vset.pattern.permute.xlu0 9
    %1702 = vperm.xlu0 %1701, %v63
    %v1703 = vpop.permute.xlu0 %1702
    %1704 = vset.pattern.permute.xlu0 9
    %1705 = vperm.xlu0 %1704, %v64
    %v1706 = vpop.permute.xlu0 %1705
    %1707 = vset.pattern.permute.xlu0 9
    %1708 = vperm.xlu0 %1707, %v65
    %v1709 = vpop.permute.xlu0 %1708
    %1710 = vset.pattern.permute.xlu0 9
    %1711 = vperm.xlu0 %1710, %v66
    %v1712 = vpop.permute.xlu0 %1711
    %1713 = vset.pattern.permute.xlu0 9
    %1714 = vperm.xlu0 %1713, %v67
    %v1715 = vpop.permute.xlu0 %1714
    %1716 = vset.pattern.permute.xlu0 9
    %1717 = vperm.xlu0 %1716, %v68
    %v1718 = vpop.permute.xlu0 %1717
    %1719 = vset.pattern.permute.xlu0 9
    %1720 = vperm.xlu0 %1719, %v69
    %v1721 = vpop.permute.xlu0 %1720
    %vm1722 = vcmp.eq.s32.totalorder %v1649, %v71
    %vm1723 = vcmp.eq.s32.totalorder %v1652, %v71
    %vm1724 = vcmp.eq.s32.totalorder %v1655, %v71
    %vm1725 = vcmp.eq.s32.totalorder %v1658, %v71
    %vm1726 = vcmp.eq.s32.totalorder %v1661, %v71
    %vm1727 = vcmp.eq.s32.totalorder %v1664, %v71
    %vm1728 = vcmp.eq.s32.totalorder %v1667, %v71
    %vm1729 = vcmp.eq.s32.totalorder %v1670, %v71
    %vm1730 = vcmp.eq.s32.totalorder %v1673, %v71
    %vm1731 = vcmp.eq.s32.totalorder %v1676, %v71
    %vm1732 = vcmp.eq.s32.totalorder %v1679, %v71
    %vm1733 = vcmp.eq.s32.totalorder %v1682, %v71
    %vm1734 = vcmp.eq.s32.totalorder %v1685, %v71
    %vm1735 = vcmp.eq.s32.totalorder %v1688, %v71
    %vm1736 = vcmp.eq.s32.totalorder %v1691, %v71
    %vm1737 = vcmp.eq.s32.totalorder %v1694, %v71
    %vm1738 = vcmp.eq.s32.totalorder %v1697, %v71
    %vm1739 = vcmp.eq.s32.totalorder %v1700, %v71
    %vm1740 = vcmp.eq.s32.totalorder %v1703, %v71
    %vm1741 = vcmp.eq.s32.totalorder %v1706, %v71
    %vm1742 = vcmp.eq.s32.totalorder %v1709, %v71
    %vm1743 = vcmp.eq.s32.totalorder %v1712, %v71
    %vm1744 = vcmp.eq.s32.totalorder %v1715, %v71
    %vm1745 = vcmp.eq.s32.totalorder %v1718, %v71
    %vm1746 = vcmp.eq.s32.totalorder %v1721, %v71
    %v1747 = vsel %vm1722, 1, 0
    %v1748 = vsel %vm1723, 1, 0
    %v1749 = vsel %vm1724, 1, 0
    %v1750 = vsel %vm1725, 1, 0
    %v1751 = vsel %vm1726, 1, 0
    %v1752 = vsel %vm1727, 1, 0
    %v1753 = vsel %vm1728, 1, 0
    %v1754 = vsel %vm1729, 1, 0
    %v1755 = vsel %vm1730, 1, 0
    %v1756 = vsel %vm1731, 1, 0
    %v1757 = vsel %vm1732, 1, 0
    %v1758 = vsel %vm1733, 1, 0
    %v1759 = vsel %vm1734, 1, 0
    %v1760 = vsel %vm1735, 1, 0
    %v1761 = vsel %vm1736, 1, 0
    %v1762 = vsel %vm1737, 1, 0
    %v1763 = vsel %vm1738, 1, 0
    %v1764 = vsel %vm1739, 1, 0
    %v1765 = vsel %vm1740, 1, 0
    %v1766 = vsel %vm1741, 1, 0
    %v1767 = vsel %vm1742, 1, 0
    %v1768 = vsel %vm1743, 1, 0
    %v1769 = vsel %vm1744, 1, 0
    %v1770 = vsel %vm1745, 1, 0
    %v1771 = vsel %vm1746, 1, 0
    %v1772 = vcvt.s32.f32 %v1747
    %v1773 = vcvt.s32.f32 %v1748
    %v1774 = vcvt.s32.f32 %v1749
    %v1775 = vcvt.s32.f32 %v1750
    %v1776 = vcvt.s32.f32 %v1751
    %v1777 = vcvt.s32.f32 %v1752
    %v1778 = vcvt.s32.f32 %v1753
    %v1779 = vcvt.s32.f32 %v1754
    %v1780 = vcvt.s32.f32 %v1755
    %v1781 = vcvt.s32.f32 %v1756
    %v1782 = vcvt.s32.f32 %v1757
    %v1783 = vcvt.s32.f32 %v1758
    %v1784 = vcvt.s32.f32 %v1759
    %v1785 = vcvt.s32.f32 %v1760
    %v1786 = vcvt.s32.f32 %v1761
    %v1787 = vcvt.s32.f32 %v1762
    %v1788 = vcvt.s32.f32 %v1763
    %v1789 = vcvt.s32.f32 %v1764
    %v1790 = vcvt.s32.f32 %v1765
    %v1791 = vcvt.s32.f32 %v1766
    %v1792 = vcvt.s32.f32 %v1767
    %v1793 = vcvt.s32.f32 %v1768
    %v1794 = vcvt.s32.f32 %v1769
    %v1795 = vcvt.s32.f32 %v1770
    %v1796 = vcvt.s32.f32 %v1771
    %v1797 = vadd.f32 %v1622, %v1772
    %v1798 = vadd.f32 %v1623, %v1773
    %v1799 = vadd.f32 %v1624, %v1774
    %v1800 = vadd.f32 %v1625, %v1775
    %v1801 = vadd.f32 %v1626, %v1776
    %v1802 = vadd.f32 %v1627, %v1777
    %v1803 = vadd.f32 %v1628, %v1778
    %v1804 = vadd.f32 %v1629, %v1779
    %v1805 = vadd.f32 %v1630, %v1780
    %v1806 = vadd.f32 %v1631, %v1781
    %v1807 = vadd.f32 %v1632, %v1782
    %v1808 = vadd.f32 %v1633, %v1783
    %v1809 = vadd.f32 %v1634, %v1784
    %v1810 = vadd.f32 %v1635, %v1785
    %v1811 = vadd.f32 %v1636, %v1786
    %v1812 = vadd.f32 %v1637, %v1787
    %v1813 = vadd.f32 %v1638, %v1788
    %v1814 = vadd.f32 %v1639, %v1789
    %v1815 = vadd.f32 %v1640, %v1790
    %v1816 = vadd.f32 %v1641, %v1791
    %v1817 = vadd.f32 %v1642, %v1792
    %v1818 = vadd.f32 %v1643, %v1793
    %v1819 = vadd.f32 %v1644, %v1794
    %v1820 = vadd.f32 %v1645, %v1795
    %v1821 = vadd.f32 %v1646, %v1796
    %1822 = vset.pattern.permute.xlu0 10
    %1823 = vperm.xlu0 %1822, %v45
    %v1824 = vpop.permute.xlu0 %1823
    %1825 = vset.pattern.permute.xlu0 10
    %1826 = vperm.xlu0 %1825, %v46
    %v1827 = vpop.permute.xlu0 %1826
    %1828 = vset.pattern.permute.xlu0 10
    %1829 = vperm.xlu0 %1828, %v47
    %v1830 = vpop.permute.xlu0 %1829
    %1831 = vset.pattern.permute.xlu0 10
    %1832 = vperm.xlu0 %1831, %v48
    %v1833 = vpop.permute.xlu0 %1832
    %1834 = vset.pattern.permute.xlu0 10
    %1835 = vperm.xlu0 %1834, %v49
    %v1836 = vpop.permute.xlu0 %1835
    %1837 = vset.pattern.permute.xlu0 10
    %1838 = vperm.xlu0 %1837, %v50
    %v1839 = vpop.permute.xlu0 %1838
    %1840 = vset.pattern.permute.xlu0 10
    %1841 = vperm.xlu0 %1840, %v51
    %v1842 = vpop.permute.xlu0 %1841
    %1843 = vset.pattern.permute.xlu0 10
    %1844 = vperm.xlu0 %1843, %v52
    %v1845 = vpop.permute.xlu0 %1844
    %1846 = vset.pattern.permute.xlu0 10
    %1847 = vperm.xlu0 %1846, %v53
    %v1848 = vpop.permute.xlu0 %1847
    %1849 = vset.pattern.permute.xlu0 10
    %1850 = vperm.xlu0 %1849, %v54
    %v1851 = vpop.permute.xlu0 %1850
    %1852 = vset.pattern.permute.xlu0 10
    %1853 = vperm.xlu0 %1852, %v55
    %v1854 = vpop.permute.xlu0 %1853
    %1855 = vset.pattern.permute.xlu0 10
    %1856 = vperm.xlu0 %1855, %v56
    %v1857 = vpop.permute.xlu0 %1856
    %1858 = vset.pattern.permute.xlu0 10
    %1859 = vperm.xlu0 %1858, %v57
    %v1860 = vpop.permute.xlu0 %1859
    %1861 = vset.pattern.permute.xlu0 10
    %1862 = vperm.xlu0 %1861, %v58
    %v1863 = vpop.permute.xlu0 %1862
    %1864 = vset.pattern.permute.xlu0 10
    %1865 = vperm.xlu0 %1864, %v59
    %v1866 = vpop.permute.xlu0 %1865
    %1867 = vset.pattern.permute.xlu0 10
    %1868 = vperm.xlu0 %1867, %v60
    %v1869 = vpop.permute.xlu0 %1868
    %1870 = vset.pattern.permute.xlu0 10
    %1871 = vperm.xlu0 %1870, %v61
    %v1872 = vpop.permute.xlu0 %1871
    %1873 = vset.pattern.permute.xlu0 10
    %1874 = vperm.xlu0 %1873, %v62
    %v1875 = vpop.permute.xlu0 %1874
    %1876 = vset.pattern.permute.xlu0 10
    %1877 = vperm.xlu0 %1876, %v63
    %v1878 = vpop.permute.xlu0 %1877
    %1879 = vset.pattern.permute.xlu0 10
    %1880 = vperm.xlu0 %1879, %v64
    %v1881 = vpop.permute.xlu0 %1880
    %1882 = vset.pattern.permute.xlu0 10
    %1883 = vperm.xlu0 %1882, %v65
    %v1884 = vpop.permute.xlu0 %1883
    %1885 = vset.pattern.permute.xlu0 10
    %1886 = vperm.xlu0 %1885, %v66
    %v1887 = vpop.permute.xlu0 %1886
    %1888 = vset.pattern.permute.xlu0 10
    %1889 = vperm.xlu0 %1888, %v67
    %v1890 = vpop.permute.xlu0 %1889
    %1891 = vset.pattern.permute.xlu0 10
    %1892 = vperm.xlu0 %1891, %v68
    %v1893 = vpop.permute.xlu0 %1892
    %1894 = vset.pattern.permute.xlu0 10
    %1895 = vperm.xlu0 %1894, %v69
    %v1896 = vpop.permute.xlu0 %1895
    %vm1897 = vcmp.eq.s32.totalorder %v1824, %v71
    %vm1898 = vcmp.eq.s32.totalorder %v1827, %v71
    %vm1899 = vcmp.eq.s32.totalorder %v1830, %v71
    %vm1900 = vcmp.eq.s32.totalorder %v1833, %v71
    %vm1901 = vcmp.eq.s32.totalorder %v1836, %v71
    %vm1902 = vcmp.eq.s32.totalorder %v1839, %v71
    %vm1903 = vcmp.eq.s32.totalorder %v1842, %v71
    %vm1904 = vcmp.eq.s32.totalorder %v1845, %v71
    %vm1905 = vcmp.eq.s32.totalorder %v1848, %v71
    %vm1906 = vcmp.eq.s32.totalorder %v1851, %v71
    %vm1907 = vcmp.eq.s32.totalorder %v1854, %v71
    %vm1908 = vcmp.eq.s32.totalorder %v1857, %v71
    %vm1909 = vcmp.eq.s32.totalorder %v1860, %v71
    %vm1910 = vcmp.eq.s32.totalorder %v1863, %v71
    %vm1911 = vcmp.eq.s32.totalorder %v1866, %v71
    %vm1912 = vcmp.eq.s32.totalorder %v1869, %v71
    %vm1913 = vcmp.eq.s32.totalorder %v1872, %v71
    %vm1914 = vcmp.eq.s32.totalorder %v1875, %v71
    %vm1915 = vcmp.eq.s32.totalorder %v1878, %v71
    %vm1916 = vcmp.eq.s32.totalorder %v1881, %v71
    %vm1917 = vcmp.eq.s32.totalorder %v1884, %v71
    %vm1918 = vcmp.eq.s32.totalorder %v1887, %v71
    %vm1919 = vcmp.eq.s32.totalorder %v1890, %v71
    %vm1920 = vcmp.eq.s32.totalorder %v1893, %v71
    %vm1921 = vcmp.eq.s32.totalorder %v1896, %v71
    %v1922 = vsel %vm1897, 1, 0
    %v1923 = vsel %vm1898, 1, 0
    %v1924 = vsel %vm1899, 1, 0
    %v1925 = vsel %vm1900, 1, 0
    %v1926 = vsel %vm1901, 1, 0
    %v1927 = vsel %vm1902, 1, 0
    %v1928 = vsel %vm1903, 1, 0
    %v1929 = vsel %vm1904, 1, 0
    %v1930 = vsel %vm1905, 1, 0
    %v1931 = vsel %vm1906, 1, 0
    %v1932 = vsel %vm1907, 1, 0
    %v1933 = vsel %vm1908, 1, 0
    %v1934 = vsel %vm1909, 1, 0
    %v1935 = vsel %vm1910, 1, 0
    %v1936 = vsel %vm1911, 1, 0
    %v1937 = vsel %vm1912, 1, 0
    %v1938 = vsel %vm1913, 1, 0
    %v1939 = vsel %vm1914, 1, 0
    %v1940 = vsel %vm1915, 1, 0
    %v1941 = vsel %vm1916, 1, 0
    %v1942 = vsel %vm1917, 1, 0
    %v1943 = vsel %vm1918, 1, 0
    %v1944 = vsel %vm1919, 1, 0
    %v1945 = vsel %vm1920, 1, 0
    %v1946 = vsel %vm1921, 1, 0
    %v1947 = vcvt.s32.f32 %v1922
    %v1948 = vcvt.s32.f32 %v1923
    %v1949 = vcvt.s32.f32 %v1924
    %v1950 = vcvt.s32.f32 %v1925
    %v1951 = vcvt.s32.f32 %v1926
    %v1952 = vcvt.s32.f32 %v1927
    %v1953 = vcvt.s32.f32 %v1928
    %v1954 = vcvt.s32.f32 %v1929
    %v1955 = vcvt.s32.f32 %v1930
    %v1956 = vcvt.s32.f32 %v1931
    %v1957 = vcvt.s32.f32 %v1932
    %v1958 = vcvt.s32.f32 %v1933
    %v1959 = vcvt.s32.f32 %v1934
    %v1960 = vcvt.s32.f32 %v1935
    %v1961 = vcvt.s32.f32 %v1936
    %v1962 = vcvt.s32.f32 %v1937
    %v1963 = vcvt.s32.f32 %v1938
    %v1964 = vcvt.s32.f32 %v1939
    %v1965 = vcvt.s32.f32 %v1940
    %v1966 = vcvt.s32.f32 %v1941
    %v1967 = vcvt.s32.f32 %v1942
    %v1968 = vcvt.s32.f32 %v1943
    %v1969 = vcvt.s32.f32 %v1944
    %v1970 = vcvt.s32.f32 %v1945
    %v1971 = vcvt.s32.f32 %v1946
    %v1972 = vadd.f32 %v1797, %v1947
    %v1973 = vadd.f32 %v1798, %v1948
    %v1974 = vadd.f32 %v1799, %v1949
    %v1975 = vadd.f32 %v1800, %v1950
    %v1976 = vadd.f32 %v1801, %v1951
    %v1977 = vadd.f32 %v1802, %v1952
    %v1978 = vadd.f32 %v1803, %v1953
    %v1979 = vadd.f32 %v1804, %v1954
    %v1980 = vadd.f32 %v1805, %v1955
    %v1981 = vadd.f32 %v1806, %v1956
    %v1982 = vadd.f32 %v1807, %v1957
    %v1983 = vadd.f32 %v1808, %v1958
    %v1984 = vadd.f32 %v1809, %v1959
    %v1985 = vadd.f32 %v1810, %v1960
    %v1986 = vadd.f32 %v1811, %v1961
    %v1987 = vadd.f32 %v1812, %v1962
    %v1988 = vadd.f32 %v1813, %v1963
    %v1989 = vadd.f32 %v1814, %v1964
    %v1990 = vadd.f32 %v1815, %v1965
    %v1991 = vadd.f32 %v1816, %v1966
    %v1992 = vadd.f32 %v1817, %v1967
    %v1993 = vadd.f32 %v1818, %v1968
    %v1994 = vadd.f32 %v1819, %v1969
    %v1995 = vadd.f32 %v1820, %v1970
    %v1996 = vadd.f32 %v1821, %v1971
    %1997 = vset.pattern.permute.xlu0 11
    %1998 = vperm.xlu0 %1997, %v45
    %v1999 = vpop.permute.xlu0 %1998
    %2000 = vset.pattern.permute.xlu0 11
    %2001 = vperm.xlu0 %2000, %v46
    %v2002 = vpop.permute.xlu0 %2001
    %2003 = vset.pattern.permute.xlu0 11
    %2004 = vperm.xlu0 %2003, %v47
    %v2005 = vpop.permute.xlu0 %2004
    %2006 = vset.pattern.permute.xlu0 11
    %2007 = vperm.xlu0 %2006, %v48
    %v2008 = vpop.permute.xlu0 %2007
    %2009 = vset.pattern.permute.xlu0 11
    %2010 = vperm.xlu0 %2009, %v49
    %v2011 = vpop.permute.xlu0 %2010
    %2012 = vset.pattern.permute.xlu0 11
    %2013 = vperm.xlu0 %2012, %v50
    %v2014 = vpop.permute.xlu0 %2013
    %2015 = vset.pattern.permute.xlu0 11
    %2016 = vperm.xlu0 %2015, %v51
    %v2017 = vpop.permute.xlu0 %2016
    %2018 = vset.pattern.permute.xlu0 11
    %2019 = vperm.xlu0 %2018, %v52
    %v2020 = vpop.permute.xlu0 %2019
    %2021 = vset.pattern.permute.xlu0 11
    %2022 = vperm.xlu0 %2021, %v53
    %v2023 = vpop.permute.xlu0 %2022
    %2024 = vset.pattern.permute.xlu0 11
    %2025 = vperm.xlu0 %2024, %v54
    %v2026 = vpop.permute.xlu0 %2025
    %2027 = vset.pattern.permute.xlu0 11
    %2028 = vperm.xlu0 %2027, %v55
    %v2029 = vpop.permute.xlu0 %2028
    %2030 = vset.pattern.permute.xlu0 11
    %2031 = vperm.xlu0 %2030, %v56
    %v2032 = vpop.permute.xlu0 %2031
    %2033 = vset.pattern.permute.xlu0 11
    %2034 = vperm.xlu0 %2033, %v57
    %v2035 = vpop.permute.xlu0 %2034
    %2036 = vset.pattern.permute.xlu0 11
    %2037 = vperm.xlu0 %2036, %v58
    %v2038 = vpop.permute.xlu0 %2037
    %2039 = vset.pattern.permute.xlu0 11
    %2040 = vperm.xlu0 %2039, %v59
    %v2041 = vpop.permute.xlu0 %2040
    %2042 = vset.pattern.permute.xlu0 11
    %2043 = vperm.xlu0 %2042, %v60
    %v2044 = vpop.permute.xlu0 %2043
    %2045 = vset.pattern.permute.xlu0 11
    %2046 = vperm.xlu0 %2045, %v61
    %v2047 = vpop.permute.xlu0 %2046
    %2048 = vset.pattern.permute.xlu0 11
    %2049 = vperm.xlu0 %2048, %v62
    %v2050 = vpop.permute.xlu0 %2049
    %2051 = vset.pattern.permute.xlu0 11
    %2052 = vperm.xlu0 %2051, %v63
    %v2053 = vpop.permute.xlu0 %2052
    %2054 = vset.pattern.permute.xlu0 11
    %2055 = vperm.xlu0 %2054, %v64
    %v2056 = vpop.permute.xlu0 %2055
    %2057 = vset.pattern.permute.xlu0 11
    %2058 = vperm.xlu0 %2057, %v65
    %v2059 = vpop.permute.xlu0 %2058
    %2060 = vset.pattern.permute.xlu0 11
    %2061 = vperm.xlu0 %2060, %v66
    %v2062 = vpop.permute.xlu0 %2061
    %2063 = vset.pattern.permute.xlu0 11
    %2064 = vperm.xlu0 %2063, %v67
    %v2065 = vpop.permute.xlu0 %2064
    %2066 = vset.pattern.permute.xlu0 11
    %2067 = vperm.xlu0 %2066, %v68
    %v2068 = vpop.permute.xlu0 %2067
    %2069 = vset.pattern.permute.xlu0 11
    %2070 = vperm.xlu0 %2069, %v69
    %v2071 = vpop.permute.xlu0 %2070
    %vm2072 = vcmp.eq.s32.totalorder %v1999, %v71
    %vm2073 = vcmp.eq.s32.totalorder %v2002, %v71
    %vm2074 = vcmp.eq.s32.totalorder %v2005, %v71
    %vm2075 = vcmp.eq.s32.totalorder %v2008, %v71
    %vm2076 = vcmp.eq.s32.totalorder %v2011, %v71
    %vm2077 = vcmp.eq.s32.totalorder %v2014, %v71
    %vm2078 = vcmp.eq.s32.totalorder %v2017, %v71
    %vm2079 = vcmp.eq.s32.totalorder %v2020, %v71
    %vm2080 = vcmp.eq.s32.totalorder %v2023, %v71
    %vm2081 = vcmp.eq.s32.totalorder %v2026, %v71
    %vm2082 = vcmp.eq.s32.totalorder %v2029, %v71
    %vm2083 = vcmp.eq.s32.totalorder %v2032, %v71
    %vm2084 = vcmp.eq.s32.totalorder %v2035, %v71
    %vm2085 = vcmp.eq.s32.totalorder %v2038, %v71
    %vm2086 = vcmp.eq.s32.totalorder %v2041, %v71
    %vm2087 = vcmp.eq.s32.totalorder %v2044, %v71
    %vm2088 = vcmp.eq.s32.totalorder %v2047, %v71
    %vm2089 = vcmp.eq.s32.totalorder %v2050, %v71
    %vm2090 = vcmp.eq.s32.totalorder %v2053, %v71
    %vm2091 = vcmp.eq.s32.totalorder %v2056, %v71
    %vm2092 = vcmp.eq.s32.totalorder %v2059, %v71
    %vm2093 = vcmp.eq.s32.totalorder %v2062, %v71
    %vm2094 = vcmp.eq.s32.totalorder %v2065, %v71
    %vm2095 = vcmp.eq.s32.totalorder %v2068, %v71
    %vm2096 = vcmp.eq.s32.totalorder %v2071, %v71
    %v2097 = vsel %vm2072, 1, 0
    %v2098 = vsel %vm2073, 1, 0
    %v2099 = vsel %vm2074, 1, 0
    %v2100 = vsel %vm2075, 1, 0
    %v2101 = vsel %vm2076, 1, 0
    %v2102 = vsel %vm2077, 1, 0
    %v2103 = vsel %vm2078, 1, 0
    %v2104 = vsel %vm2079, 1, 0
    %v2105 = vsel %vm2080, 1, 0
    %v2106 = vsel %vm2081, 1, 0
    %v2107 = vsel %vm2082, 1, 0
    %v2108 = vsel %vm2083, 1, 0
    %v2109 = vsel %vm2084, 1, 0
    %v2110 = vsel %vm2085, 1, 0
    %v2111 = vsel %vm2086, 1, 0
    %v2112 = vsel %vm2087, 1, 0
    %v2113 = vsel %vm2088, 1, 0
    %v2114 = vsel %vm2089, 1, 0
    %v2115 = vsel %vm2090, 1, 0
    %v2116 = vsel %vm2091, 1, 0
    %v2117 = vsel %vm2092, 1, 0
    %v2118 = vsel %vm2093, 1, 0
    %v2119 = vsel %vm2094, 1, 0
    %v2120 = vsel %vm2095, 1, 0
    %v2121 = vsel %vm2096, 1, 0
    %v2122 = vcvt.s32.f32 %v2097
    %v2123 = vcvt.s32.f32 %v2098
    %v2124 = vcvt.s32.f32 %v2099
    %v2125 = vcvt.s32.f32 %v2100
    %v2126 = vcvt.s32.f32 %v2101
    %v2127 = vcvt.s32.f32 %v2102
    %v2128 = vcvt.s32.f32 %v2103
    %v2129 = vcvt.s32.f32 %v2104
    %v2130 = vcvt.s32.f32 %v2105
    %v2131 = vcvt.s32.f32 %v2106
    %v2132 = vcvt.s32.f32 %v2107
    %v2133 = vcvt.s32.f32 %v2108
    %v2134 = vcvt.s32.f32 %v2109
    %v2135 = vcvt.s32.f32 %v2110
    %v2136 = vcvt.s32.f32 %v2111
    %v2137 = vcvt.s32.f32 %v2112
    %v2138 = vcvt.s32.f32 %v2113
    %v2139 = vcvt.s32.f32 %v2114
    %v2140 = vcvt.s32.f32 %v2115
    %v2141 = vcvt.s32.f32 %v2116
    %v2142 = vcvt.s32.f32 %v2117
    %v2143 = vcvt.s32.f32 %v2118
    %v2144 = vcvt.s32.f32 %v2119
    %v2145 = vcvt.s32.f32 %v2120
    %v2146 = vcvt.s32.f32 %v2121
    %v2147 = vadd.f32 %v1972, %v2122
    %v2148 = vadd.f32 %v1973, %v2123
    %v2149 = vadd.f32 %v1974, %v2124
    %v2150 = vadd.f32 %v1975, %v2125
    %v2151 = vadd.f32 %v1976, %v2126
    %v2152 = vadd.f32 %v1977, %v2127
    %v2153 = vadd.f32 %v1978, %v2128
    %v2154 = vadd.f32 %v1979, %v2129
    %v2155 = vadd.f32 %v1980, %v2130
    %v2156 = vadd.f32 %v1981, %v2131
    %v2157 = vadd.f32 %v1982, %v2132
    %v2158 = vadd.f32 %v1983, %v2133
    %v2159 = vadd.f32 %v1984, %v2134
    %v2160 = vadd.f32 %v1985, %v2135
    %v2161 = vadd.f32 %v1986, %v2136
    %v2162 = vadd.f32 %v1987, %v2137
    %v2163 = vadd.f32 %v1988, %v2138
    %v2164 = vadd.f32 %v1989, %v2139
    %v2165 = vadd.f32 %v1990, %v2140
    %v2166 = vadd.f32 %v1991, %v2141
    %v2167 = vadd.f32 %v1992, %v2142
    %v2168 = vadd.f32 %v1993, %v2143
    %v2169 = vadd.f32 %v1994, %v2144
    %v2170 = vadd.f32 %v1995, %v2145
    %v2171 = vadd.f32 %v1996, %v2146
    %2172 = vset.pattern.permute.xlu0 12
    %2173 = vperm.xlu0 %2172, %v45
    %v2174 = vpop.permute.xlu0 %2173
    %2175 = vset.pattern.permute.xlu0 12
    %2176 = vperm.xlu0 %2175, %v46
    %v2177 = vpop.permute.xlu0 %2176
    %2178 = vset.pattern.permute.xlu0 12
    %2179 = vperm.xlu0 %2178, %v47
    %v2180 = vpop.permute.xlu0 %2179
    %2181 = vset.pattern.permute.xlu0 12
    %2182 = vperm.xlu0 %2181, %v48
    %v2183 = vpop.permute.xlu0 %2182
    %2184 = vset.pattern.permute.xlu0 12
    %2185 = vperm.xlu0 %2184, %v49
    %v2186 = vpop.permute.xlu0 %2185
    %2187 = vset.pattern.permute.xlu0 12
    %2188 = vperm.xlu0 %2187, %v50
    %v2189 = vpop.permute.xlu0 %2188
    %2190 = vset.pattern.permute.xlu0 12
    %2191 = vperm.xlu0 %2190, %v51
    %v2192 = vpop.permute.xlu0 %2191
    %2193 = vset.pattern.permute.xlu0 12
    %2194 = vperm.xlu0 %2193, %v52
    %v2195 = vpop.permute.xlu0 %2194
    %2196 = vset.pattern.permute.xlu0 12
    %2197 = vperm.xlu0 %2196, %v53
    %v2198 = vpop.permute.xlu0 %2197
    %2199 = vset.pattern.permute.xlu0 12
    %2200 = vperm.xlu0 %2199, %v54
    %v2201 = vpop.permute.xlu0 %2200
    %2202 = vset.pattern.permute.xlu0 12
    %2203 = vperm.xlu0 %2202, %v55
    %v2204 = vpop.permute.xlu0 %2203
    %2205 = vset.pattern.permute.xlu0 12
    %2206 = vperm.xlu0 %2205, %v56
    %v2207 = vpop.permute.xlu0 %2206
    %2208 = vset.pattern.permute.xlu0 12
    %2209 = vperm.xlu0 %2208, %v57
    %v2210 = vpop.permute.xlu0 %2209
    %2211 = vset.pattern.permute.xlu0 12
    %2212 = vperm.xlu0 %2211, %v58
    %v2213 = vpop.permute.xlu0 %2212
    %2214 = vset.pattern.permute.xlu0 12
    %2215 = vperm.xlu0 %2214, %v59
    %v2216 = vpop.permute.xlu0 %2215
    %2217 = vset.pattern.permute.xlu0 12
    %2218 = vperm.xlu0 %2217, %v60
    %v2219 = vpop.permute.xlu0 %2218
    %2220 = vset.pattern.permute.xlu0 12
    %2221 = vperm.xlu0 %2220, %v61
    %v2222 = vpop.permute.xlu0 %2221
    %2223 = vset.pattern.permute.xlu0 12
    %2224 = vperm.xlu0 %2223, %v62
    %v2225 = vpop.permute.xlu0 %2224
    %2226 = vset.pattern.permute.xlu0 12
    %2227 = vperm.xlu0 %2226, %v63
    %v2228 = vpop.permute.xlu0 %2227
    %2229 = vset.pattern.permute.xlu0 12
    %2230 = vperm.xlu0 %2229, %v64
    %v2231 = vpop.permute.xlu0 %2230
    %2232 = vset.pattern.permute.xlu0 12
    %2233 = vperm.xlu0 %2232, %v65
    %v2234 = vpop.permute.xlu0 %2233
    %2235 = vset.pattern.permute.xlu0 12
    %2236 = vperm.xlu0 %2235, %v66
    %v2237 = vpop.permute.xlu0 %2236
    %2238 = vset.pattern.permute.xlu0 12
    %2239 = vperm.xlu0 %2238, %v67
    %v2240 = vpop.permute.xlu0 %2239
    %2241 = vset.pattern.permute.xlu0 12
    %2242 = vperm.xlu0 %2241, %v68
    %v2243 = vpop.permute.xlu0 %2242
    %2244 = vset.pattern.permute.xlu0 12
    %2245 = vperm.xlu0 %2244, %v69
    %v2246 = vpop.permute.xlu0 %2245
    %vm2247 = vcmp.eq.s32.totalorder %v2174, %v71
    %vm2248 = vcmp.eq.s32.totalorder %v2177, %v71
    %vm2249 = vcmp.eq.s32.totalorder %v2180, %v71
    %vm2250 = vcmp.eq.s32.totalorder %v2183, %v71
    %vm2251 = vcmp.eq.s32.totalorder %v2186, %v71
    %vm2252 = vcmp.eq.s32.totalorder %v2189, %v71
    %vm2253 = vcmp.eq.s32.totalorder %v2192, %v71
    %vm2254 = vcmp.eq.s32.totalorder %v2195, %v71
    %vm2255 = vcmp.eq.s32.totalorder %v2198, %v71
    %vm2256 = vcmp.eq.s32.totalorder %v2201, %v71
    %vm2257 = vcmp.eq.s32.totalorder %v2204, %v71
    %vm2258 = vcmp.eq.s32.totalorder %v2207, %v71
    %vm2259 = vcmp.eq.s32.totalorder %v2210, %v71
    %vm2260 = vcmp.eq.s32.totalorder %v2213, %v71
    %vm2261 = vcmp.eq.s32.totalorder %v2216, %v71
    %vm2262 = vcmp.eq.s32.totalorder %v2219, %v71
    %vm2263 = vcmp.eq.s32.totalorder %v2222, %v71
    %vm2264 = vcmp.eq.s32.totalorder %v2225, %v71
    %vm2265 = vcmp.eq.s32.totalorder %v2228, %v71
    %vm2266 = vcmp.eq.s32.totalorder %v2231, %v71
    %vm2267 = vcmp.eq.s32.totalorder %v2234, %v71
    %vm2268 = vcmp.eq.s32.totalorder %v2237, %v71
    %vm2269 = vcmp.eq.s32.totalorder %v2240, %v71
    %vm2270 = vcmp.eq.s32.totalorder %v2243, %v71
    %vm2271 = vcmp.eq.s32.totalorder %v2246, %v71
    %v2272 = vsel %vm2247, 1, 0
    %v2273 = vsel %vm2248, 1, 0
    %v2274 = vsel %vm2249, 1, 0
    %v2275 = vsel %vm2250, 1, 0
    %v2276 = vsel %vm2251, 1, 0
    %v2277 = vsel %vm2252, 1, 0
    %v2278 = vsel %vm2253, 1, 0
    %v2279 = vsel %vm2254, 1, 0
    %v2280 = vsel %vm2255, 1, 0
    %v2281 = vsel %vm2256, 1, 0
    %v2282 = vsel %vm2257, 1, 0
    %v2283 = vsel %vm2258, 1, 0
    %v2284 = vsel %vm2259, 1, 0
    %v2285 = vsel %vm2260, 1, 0
    %v2286 = vsel %vm2261, 1, 0
    %v2287 = vsel %vm2262, 1, 0
    %v2288 = vsel %vm2263, 1, 0
    %v2289 = vsel %vm2264, 1, 0
    %v2290 = vsel %vm2265, 1, 0
    %v2291 = vsel %vm2266, 1, 0
    %v2292 = vsel %vm2267, 1, 0
    %v2293 = vsel %vm2268, 1, 0
    %v2294 = vsel %vm2269, 1, 0
    %v2295 = vsel %vm2270, 1, 0
    %v2296 = vsel %vm2271, 1, 0
    %v2297 = vcvt.s32.f32 %v2272
    %v2298 = vcvt.s32.f32 %v2273
    %v2299 = vcvt.s32.f32 %v2274
    %v2300 = vcvt.s32.f32 %v2275
    %v2301 = vcvt.s32.f32 %v2276
    %v2302 = vcvt.s32.f32 %v2277
    %v2303 = vcvt.s32.f32 %v2278
    %v2304 = vcvt.s32.f32 %v2279
    %v2305 = vcvt.s32.f32 %v2280
    %v2306 = vcvt.s32.f32 %v2281
    %v2307 = vcvt.s32.f32 %v2282
    %v2308 = vcvt.s32.f32 %v2283
    %v2309 = vcvt.s32.f32 %v2284
    %v2310 = vcvt.s32.f32 %v2285
    %v2311 = vcvt.s32.f32 %v2286
    %v2312 = vcvt.s32.f32 %v2287
    %v2313 = vcvt.s32.f32 %v2288
    %v2314 = vcvt.s32.f32 %v2289
    %v2315 = vcvt.s32.f32 %v2290
    %v2316 = vcvt.s32.f32 %v2291
    %v2317 = vcvt.s32.f32 %v2292
    %v2318 = vcvt.s32.f32 %v2293
    %v2319 = vcvt.s32.f32 %v2294
    %v2320 = vcvt.s32.f32 %v2295
    %v2321 = vcvt.s32.f32 %v2296
    %v2322 = vadd.f32 %v2147, %v2297
    %v2323 = vadd.f32 %v2148, %v2298
    %v2324 = vadd.f32 %v2149, %v2299
    %v2325 = vadd.f32 %v2150, %v2300
    %v2326 = vadd.f32 %v2151, %v2301
    %v2327 = vadd.f32 %v2152, %v2302
    %v2328 = vadd.f32 %v2153, %v2303
    %v2329 = vadd.f32 %v2154, %v2304
    %v2330 = vadd.f32 %v2155, %v2305
    %v2331 = vadd.f32 %v2156, %v2306
    %v2332 = vadd.f32 %v2157, %v2307
    %v2333 = vadd.f32 %v2158, %v2308
    %v2334 = vadd.f32 %v2159, %v2309
    %v2335 = vadd.f32 %v2160, %v2310
    %v2336 = vadd.f32 %v2161, %v2311
    %v2337 = vadd.f32 %v2162, %v2312
    %v2338 = vadd.f32 %v2163, %v2313
    %v2339 = vadd.f32 %v2164, %v2314
    %v2340 = vadd.f32 %v2165, %v2315
    %v2341 = vadd.f32 %v2166, %v2316
    %v2342 = vadd.f32 %v2167, %v2317
    %v2343 = vadd.f32 %v2168, %v2318
    %v2344 = vadd.f32 %v2169, %v2319
    %v2345 = vadd.f32 %v2170, %v2320
    %v2346 = vadd.f32 %v2171, %v2321
    %2347 = vset.pattern.permute.xlu0 13
    %2348 = vperm.xlu0 %2347, %v45
    %v2349 = vpop.permute.xlu0 %2348
    %2350 = vset.pattern.permute.xlu0 13
    %2351 = vperm.xlu0 %2350, %v46
    %v2352 = vpop.permute.xlu0 %2351
    %2353 = vset.pattern.permute.xlu0 13
    %2354 = vperm.xlu0 %2353, %v47
    %v2355 = vpop.permute.xlu0 %2354
    %2356 = vset.pattern.permute.xlu0 13
    %2357 = vperm.xlu0 %2356, %v48
    %v2358 = vpop.permute.xlu0 %2357
    %2359 = vset.pattern.permute.xlu0 13
    %2360 = vperm.xlu0 %2359, %v49
    %v2361 = vpop.permute.xlu0 %2360
    %2362 = vset.pattern.permute.xlu0 13
    %2363 = vperm.xlu0 %2362, %v50
    %v2364 = vpop.permute.xlu0 %2363
    %2365 = vset.pattern.permute.xlu0 13
    %2366 = vperm.xlu0 %2365, %v51
    %v2367 = vpop.permute.xlu0 %2366
    %2368 = vset.pattern.permute.xlu0 13
    %2369 = vperm.xlu0 %2368, %v52
    %v2370 = vpop.permute.xlu0 %2369
    %2371 = vset.pattern.permute.xlu0 13
    %2372 = vperm.xlu0 %2371, %v53
    %v2373 = vpop.permute.xlu0 %2372
    %2374 = vset.pattern.permute.xlu0 13
    %2375 = vperm.xlu0 %2374, %v54
    %v2376 = vpop.permute.xlu0 %2375
    %2377 = vset.pattern.permute.xlu0 13
    %2378 = vperm.xlu0 %2377, %v55
    %v2379 = vpop.permute.xlu0 %2378
    %2380 = vset.pattern.permute.xlu0 13
    %2381 = vperm.xlu0 %2380, %v56
    %v2382 = vpop.permute.xlu0 %2381
    %2383 = vset.pattern.permute.xlu0 13
    %2384 = vperm.xlu0 %2383, %v57
    %v2385 = vpop.permute.xlu0 %2384
    %2386 = vset.pattern.permute.xlu0 13
    %2387 = vperm.xlu0 %2386, %v58
    %v2388 = vpop.permute.xlu0 %2387
    %2389 = vset.pattern.permute.xlu0 13
    %2390 = vperm.xlu0 %2389, %v59
    %v2391 = vpop.permute.xlu0 %2390
    %2392 = vset.pattern.permute.xlu0 13
    %2393 = vperm.xlu0 %2392, %v60
    %v2394 = vpop.permute.xlu0 %2393
    %2395 = vset.pattern.permute.xlu0 13
    %2396 = vperm.xlu0 %2395, %v61
    %v2397 = vpop.permute.xlu0 %2396
    %2398 = vset.pattern.permute.xlu0 13
    %2399 = vperm.xlu0 %2398, %v62
    %v2400 = vpop.permute.xlu0 %2399
    %2401 = vset.pattern.permute.xlu0 13
    %2402 = vperm.xlu0 %2401, %v63
    %v2403 = vpop.permute.xlu0 %2402
    %2404 = vset.pattern.permute.xlu0 13
    %2405 = vperm.xlu0 %2404, %v64
    %v2406 = vpop.permute.xlu0 %2405
    %2407 = vset.pattern.permute.xlu0 13
    %2408 = vperm.xlu0 %2407, %v65
    %v2409 = vpop.permute.xlu0 %2408
    %2410 = vset.pattern.permute.xlu0 13
    %2411 = vperm.xlu0 %2410, %v66
    %v2412 = vpop.permute.xlu0 %2411
    %2413 = vset.pattern.permute.xlu0 13
    %2414 = vperm.xlu0 %2413, %v67
    %v2415 = vpop.permute.xlu0 %2414
    %2416 = vset.pattern.permute.xlu0 13
    %2417 = vperm.xlu0 %2416, %v68
    %v2418 = vpop.permute.xlu0 %2417
    %2419 = vset.pattern.permute.xlu0 13
    %2420 = vperm.xlu0 %2419, %v69
    %v2421 = vpop.permute.xlu0 %2420
    %vm2422 = vcmp.eq.s32.totalorder %v2349, %v71
    %vm2423 = vcmp.eq.s32.totalorder %v2352, %v71
    %vm2424 = vcmp.eq.s32.totalorder %v2355, %v71
    %vm2425 = vcmp.eq.s32.totalorder %v2358, %v71
    %vm2426 = vcmp.eq.s32.totalorder %v2361, %v71
    %vm2427 = vcmp.eq.s32.totalorder %v2364, %v71
    %vm2428 = vcmp.eq.s32.totalorder %v2367, %v71
    %vm2429 = vcmp.eq.s32.totalorder %v2370, %v71
    %vm2430 = vcmp.eq.s32.totalorder %v2373, %v71
    %vm2431 = vcmp.eq.s32.totalorder %v2376, %v71
    %vm2432 = vcmp.eq.s32.totalorder %v2379, %v71
    %vm2433 = vcmp.eq.s32.totalorder %v2382, %v71
    %vm2434 = vcmp.eq.s32.totalorder %v2385, %v71
    %vm2435 = vcmp.eq.s32.totalorder %v2388, %v71
    %vm2436 = vcmp.eq.s32.totalorder %v2391, %v71
    %vm2437 = vcmp.eq.s32.totalorder %v2394, %v71
    %vm2438 = vcmp.eq.s32.totalorder %v2397, %v71
    %vm2439 = vcmp.eq.s32.totalorder %v2400, %v71
    %vm2440 = vcmp.eq.s32.totalorder %v2403, %v71
    %vm2441 = vcmp.eq.s32.totalorder %v2406, %v71
    %vm2442 = vcmp.eq.s32.totalorder %v2409, %v71
    %vm2443 = vcmp.eq.s32.totalorder %v2412, %v71
    %vm2444 = vcmp.eq.s32.totalorder %v2415, %v71
    %vm2445 = vcmp.eq.s32.totalorder %v2418, %v71
    %vm2446 = vcmp.eq.s32.totalorder %v2421, %v71
    %v2447 = vsel %vm2422, 1, 0
    %v2448 = vsel %vm2423, 1, 0
    %v2449 = vsel %vm2424, 1, 0
    %v2450 = vsel %vm2425, 1, 0
    %v2451 = vsel %vm2426, 1, 0
    %v2452 = vsel %vm2427, 1, 0
    %v2453 = vsel %vm2428, 1, 0
    %v2454 = vsel %vm2429, 1, 0
    %v2455 = vsel %vm2430, 1, 0
    %v2456 = vsel %vm2431, 1, 0
    %v2457 = vsel %vm2432, 1, 0
    %v2458 = vsel %vm2433, 1, 0
    %v2459 = vsel %vm2434, 1, 0
    %v2460 = vsel %vm2435, 1, 0
    %v2461 = vsel %vm2436, 1, 0
    %v2462 = vsel %vm2437, 1, 0
    %v2463 = vsel %vm2438, 1, 0
    %v2464 = vsel %vm2439, 1, 0
    %v2465 = vsel %vm2440, 1, 0
    %v2466 = vsel %vm2441, 1, 0
    %v2467 = vsel %vm2442, 1, 0
    %v2468 = vsel %vm2443, 1, 0
    %v2469 = vsel %vm2444, 1, 0
    %v2470 = vsel %vm2445, 1, 0
    %v2471 = vsel %vm2446, 1, 0
    %v2472 = vcvt.s32.f32 %v2447
    %v2473 = vcvt.s32.f32 %v2448
    %v2474 = vcvt.s32.f32 %v2449
    %v2475 = vcvt.s32.f32 %v2450
    %v2476 = vcvt.s32.f32 %v2451
    %v2477 = vcvt.s32.f32 %v2452
    %v2478 = vcvt.s32.f32 %v2453
    %v2479 = vcvt.s32.f32 %v2454
    %v2480 = vcvt.s32.f32 %v2455
    %v2481 = vcvt.s32.f32 %v2456
    %v2482 = vcvt.s32.f32 %v2457
    %v2483 = vcvt.s32.f32 %v2458
    %v2484 = vcvt.s32.f32 %v2459
    %v2485 = vcvt.s32.f32 %v2460
    %v2486 = vcvt.s32.f32 %v2461
    %v2487 = vcvt.s32.f32 %v2462
    %v2488 = vcvt.s32.f32 %v2463
    %v2489 = vcvt.s32.f32 %v2464
    %v2490 = vcvt.s32.f32 %v2465
    %v2491 = vcvt.s32.f32 %v2466
    %v2492 = vcvt.s32.f32 %v2467
    %v2493 = vcvt.s32.f32 %v2468
    %v2494 = vcvt.s32.f32 %v2469
    %v2495 = vcvt.s32.f32 %v2470
    %v2496 = vcvt.s32.f32 %v2471
    %v2497 = vadd.f32 %v2322, %v2472
    %v2498 = vadd.f32 %v2323, %v2473
    %v2499 = vadd.f32 %v2324, %v2474
    %v2500 = vadd.f32 %v2325, %v2475
    %v2501 = vadd.f32 %v2326, %v2476
    %v2502 = vadd.f32 %v2327, %v2477
    %v2503 = vadd.f32 %v2328, %v2478
    %v2504 = vadd.f32 %v2329, %v2479
    %v2505 = vadd.f32 %v2330, %v2480
    %v2506 = vadd.f32 %v2331, %v2481
    %v2507 = vadd.f32 %v2332, %v2482
    %v2508 = vadd.f32 %v2333, %v2483
    %v2509 = vadd.f32 %v2334, %v2484
    %v2510 = vadd.f32 %v2335, %v2485
    %v2511 = vadd.f32 %v2336, %v2486
    %v2512 = vadd.f32 %v2337, %v2487
    %v2513 = vadd.f32 %v2338, %v2488
    %v2514 = vadd.f32 %v2339, %v2489
    %v2515 = vadd.f32 %v2340, %v2490
    %v2516 = vadd.f32 %v2341, %v2491
    %v2517 = vadd.f32 %v2342, %v2492
    %v2518 = vadd.f32 %v2343, %v2493
    %v2519 = vadd.f32 %v2344, %v2494
    %v2520 = vadd.f32 %v2345, %v2495
    %v2521 = vadd.f32 %v2346, %v2496
    %2522 = vset.pattern.permute.xlu0 14
    %2523 = vperm.xlu0 %2522, %v45
    %v2524 = vpop.permute.xlu0 %2523
    %2525 = vset.pattern.permute.xlu0 14
    %2526 = vperm.xlu0 %2525, %v46
    %v2527 = vpop.permute.xlu0 %2526
    %2528 = vset.pattern.permute.xlu0 14
    %2529 = vperm.xlu0 %2528, %v47
    %v2530 = vpop.permute.xlu0 %2529
    %2531 = vset.pattern.permute.xlu0 14
    %2532 = vperm.xlu0 %2531, %v48
    %v2533 = vpop.permute.xlu0 %2532
    %2534 = vset.pattern.permute.xlu0 14
    %2535 = vperm.xlu0 %2534, %v49
    %v2536 = vpop.permute.xlu0 %2535
    %2537 = vset.pattern.permute.xlu0 14
    %2538 = vperm.xlu0 %2537, %v50
    %v2539 = vpop.permute.xlu0 %2538
    %2540 = vset.pattern.permute.xlu0 14
    %2541 = vperm.xlu0 %2540, %v51
    %v2542 = vpop.permute.xlu0 %2541
    %2543 = vset.pattern.permute.xlu0 14
    %2544 = vperm.xlu0 %2543, %v52
    %v2545 = vpop.permute.xlu0 %2544
    %2546 = vset.pattern.permute.xlu0 14
    %2547 = vperm.xlu0 %2546, %v53
    %v2548 = vpop.permute.xlu0 %2547
    %2549 = vset.pattern.permute.xlu0 14
    %2550 = vperm.xlu0 %2549, %v54
    %v2551 = vpop.permute.xlu0 %2550
    %2552 = vset.pattern.permute.xlu0 14
    %2553 = vperm.xlu0 %2552, %v55
    %v2554 = vpop.permute.xlu0 %2553
    %2555 = vset.pattern.permute.xlu0 14
    %2556 = vperm.xlu0 %2555, %v56
    %v2557 = vpop.permute.xlu0 %2556
    %2558 = vset.pattern.permute.xlu0 14
    %2559 = vperm.xlu0 %2558, %v57
    %v2560 = vpop.permute.xlu0 %2559
    %2561 = vset.pattern.permute.xlu0 14
    %2562 = vperm.xlu0 %2561, %v58
    %v2563 = vpop.permute.xlu0 %2562
    %2564 = vset.pattern.permute.xlu0 14
    %2565 = vperm.xlu0 %2564, %v59
    %v2566 = vpop.permute.xlu0 %2565
    %2567 = vset.pattern.permute.xlu0 14
    %2568 = vperm.xlu0 %2567, %v60
    %v2569 = vpop.permute.xlu0 %2568
    %2570 = vset.pattern.permute.xlu0 14
    %2571 = vperm.xlu0 %2570, %v61
    %v2572 = vpop.permute.xlu0 %2571
    %2573 = vset.pattern.permute.xlu0 14
    %2574 = vperm.xlu0 %2573, %v62
    %v2575 = vpop.permute.xlu0 %2574
    %2576 = vset.pattern.permute.xlu0 14
    %2577 = vperm.xlu0 %2576, %v63
    %v2578 = vpop.permute.xlu0 %2577
    %2579 = vset.pattern.permute.xlu0 14
    %2580 = vperm.xlu0 %2579, %v64
    %v2581 = vpop.permute.xlu0 %2580
    %2582 = vset.pattern.permute.xlu0 14
    %2583 = vperm.xlu0 %2582, %v65
    %v2584 = vpop.permute.xlu0 %2583
    %2585 = vset.pattern.permute.xlu0 14
    %2586 = vperm.xlu0 %2585, %v66
    %v2587 = vpop.permute.xlu0 %2586
    %2588 = vset.pattern.permute.xlu0 14
    %2589 = vperm.xlu0 %2588, %v67
    %v2590 = vpop.permute.xlu0 %2589
    %2591 = vset.pattern.permute.xlu0 14
    %2592 = vperm.xlu0 %2591, %v68
    %v2593 = vpop.permute.xlu0 %2592
    %2594 = vset.pattern.permute.xlu0 14
    %2595 = vperm.xlu0 %2594, %v69
    %v2596 = vpop.permute.xlu0 %2595
    %vm2597 = vcmp.eq.s32.totalorder %v2524, %v71
    %vm2598 = vcmp.eq.s32.totalorder %v2527, %v71
    %vm2599 = vcmp.eq.s32.totalorder %v2530, %v71
    %vm2600 = vcmp.eq.s32.totalorder %v2533, %v71
    %vm2601 = vcmp.eq.s32.totalorder %v2536, %v71
    %vm2602 = vcmp.eq.s32.totalorder %v2539, %v71
    %vm2603 = vcmp.eq.s32.totalorder %v2542, %v71
    %vm2604 = vcmp.eq.s32.totalorder %v2545, %v71
    %vm2605 = vcmp.eq.s32.totalorder %v2548, %v71
    %vm2606 = vcmp.eq.s32.totalorder %v2551, %v71
    %vm2607 = vcmp.eq.s32.totalorder %v2554, %v71
    %vm2608 = vcmp.eq.s32.totalorder %v2557, %v71
    %vm2609 = vcmp.eq.s32.totalorder %v2560, %v71
    %vm2610 = vcmp.eq.s32.totalorder %v2563, %v71
    %vm2611 = vcmp.eq.s32.totalorder %v2566, %v71
    %vm2612 = vcmp.eq.s32.totalorder %v2569, %v71
    %vm2613 = vcmp.eq.s32.totalorder %v2572, %v71
    %vm2614 = vcmp.eq.s32.totalorder %v2575, %v71
    %vm2615 = vcmp.eq.s32.totalorder %v2578, %v71
    %vm2616 = vcmp.eq.s32.totalorder %v2581, %v71
    %vm2617 = vcmp.eq.s32.totalorder %v2584, %v71
    %vm2618 = vcmp.eq.s32.totalorder %v2587, %v71
    %vm2619 = vcmp.eq.s32.totalorder %v2590, %v71
    %vm2620 = vcmp.eq.s32.totalorder %v2593, %v71
    %vm2621 = vcmp.eq.s32.totalorder %v2596, %v71
    %v2622 = vsel %vm2597, 1, 0
    %v2623 = vsel %vm2598, 1, 0
    %v2624 = vsel %vm2599, 1, 0
    %v2625 = vsel %vm2600, 1, 0
    %v2626 = vsel %vm2601, 1, 0
    %v2627 = vsel %vm2602, 1, 0
    %v2628 = vsel %vm2603, 1, 0
    %v2629 = vsel %vm2604, 1, 0
    %v2630 = vsel %vm2605, 1, 0
    %v2631 = vsel %vm2606, 1, 0
    %v2632 = vsel %vm2607, 1, 0
    %v2633 = vsel %vm2608, 1, 0
    %v2634 = vsel %vm2609, 1, 0
    %v2635 = vsel %vm2610, 1, 0
    %v2636 = vsel %vm2611, 1, 0
    %v2637 = vsel %vm2612, 1, 0
    %v2638 = vsel %vm2613, 1, 0
    %v2639 = vsel %vm2614, 1, 0
    %v2640 = vsel %vm2615, 1, 0
    %v2641 = vsel %vm2616, 1, 0
    %v2642 = vsel %vm2617, 1, 0
    %v2643 = vsel %vm2618, 1, 0
    %v2644 = vsel %vm2619, 1, 0
    %v2645 = vsel %vm2620, 1, 0
    %v2646 = vsel %vm2621, 1, 0
    %v2647 = vcvt.s32.f32 %v2622
    %v2648 = vcvt.s32.f32 %v2623
    %v2649 = vcvt.s32.f32 %v2624
    %v2650 = vcvt.s32.f32 %v2625
    %v2651 = vcvt.s32.f32 %v2626
    %v2652 = vcvt.s32.f32 %v2627
    %v2653 = vcvt.s32.f32 %v2628
    %v2654 = vcvt.s32.f32 %v2629
    %v2655 = vcvt.s32.f32 %v2630
    %v2656 = vcvt.s32.f32 %v2631
    %v2657 = vcvt.s32.f32 %v2632
    %v2658 = vcvt.s32.f32 %v2633
    %v2659 = vcvt.s32.f32 %v2634
    %v2660 = vcvt.s32.f32 %v2635
    %v2661 = vcvt.s32.f32 %v2636
    %v2662 = vcvt.s32.f32 %v2637
    %v2663 = vcvt.s32.f32 %v2638
    %v2664 = vcvt.s32.f32 %v2639
    %v2665 = vcvt.s32.f32 %v2640
    %v2666 = vcvt.s32.f32 %v2641
    %v2667 = vcvt.s32.f32 %v2642
    %v2668 = vcvt.s32.f32 %v2643
    %v2669 = vcvt.s32.f32 %v2644
    %v2670 = vcvt.s32.f32 %v2645
    %v2671 = vcvt.s32.f32 %v2646
    %v2672 = vadd.f32 %v2497, %v2647
    %v2673 = vadd.f32 %v2498, %v2648
    %v2674 = vadd.f32 %v2499, %v2649
    %v2675 = vadd.f32 %v2500, %v2650
    %v2676 = vadd.f32 %v2501, %v2651
    %v2677 = vadd.f32 %v2502, %v2652
    %v2678 = vadd.f32 %v2503, %v2653
    %v2679 = vadd.f32 %v2504, %v2654
    %v2680 = vadd.f32 %v2505, %v2655
    %v2681 = vadd.f32 %v2506, %v2656
    %v2682 = vadd.f32 %v2507, %v2657
    %v2683 = vadd.f32 %v2508, %v2658
    %v2684 = vadd.f32 %v2509, %v2659
    %v2685 = vadd.f32 %v2510, %v2660
    %v2686 = vadd.f32 %v2511, %v2661
    %v2687 = vadd.f32 %v2512, %v2662
    %v2688 = vadd.f32 %v2513, %v2663
    %v2689 = vadd.f32 %v2514, %v2664
    %v2690 = vadd.f32 %v2515, %v2665
    %v2691 = vadd.f32 %v2516, %v2666
    %v2692 = vadd.f32 %v2517, %v2667
    %v2693 = vadd.f32 %v2518, %v2668
    %v2694 = vadd.f32 %v2519, %v2669
    %v2695 = vadd.f32 %v2520, %v2670
    %v2696 = vadd.f32 %v2521, %v2671
    %2697 = vset.pattern.permute.xlu0 15
    %2698 = vperm.xlu0 %2697, %v45
    %v2699 = vpop.permute.xlu0 %2698
    %2700 = vset.pattern.permute.xlu0 15
    %2701 = vperm.xlu0 %2700, %v46
    %v2702 = vpop.permute.xlu0 %2701
    %2703 = vset.pattern.permute.xlu0 15
    %2704 = vperm.xlu0 %2703, %v47
    %v2705 = vpop.permute.xlu0 %2704
    %2706 = vset.pattern.permute.xlu0 15
    %2707 = vperm.xlu0 %2706, %v48
    %v2708 = vpop.permute.xlu0 %2707
    %2709 = vset.pattern.permute.xlu0 15
    %2710 = vperm.xlu0 %2709, %v49
    %v2711 = vpop.permute.xlu0 %2710
    %2712 = vset.pattern.permute.xlu0 15
    %2713 = vperm.xlu0 %2712, %v50
    %v2714 = vpop.permute.xlu0 %2713
    %2715 = vset.pattern.permute.xlu0 15
    %2716 = vperm.xlu0 %2715, %v51
    %v2717 = vpop.permute.xlu0 %2716
    %2718 = vset.pattern.permute.xlu0 15
    %2719 = vperm.xlu0 %2718, %v52
    %v2720 = vpop.permute.xlu0 %2719
    %2721 = vset.pattern.permute.xlu0 15
    %2722 = vperm.xlu0 %2721, %v53
    %v2723 = vpop.permute.xlu0 %2722
    %2724 = vset.pattern.permute.xlu0 15
    %2725 = vperm.xlu0 %2724, %v54
    %v2726 = vpop.permute.xlu0 %2725
    %2727 = vset.pattern.permute.xlu0 15
    %2728 = vperm.xlu0 %2727, %v55
    %v2729 = vpop.permute.xlu0 %2728
    %2730 = vset.pattern.permute.xlu0 15
    %2731 = vperm.xlu0 %2730, %v56
    %v2732 = vpop.permute.xlu0 %2731
    %2733 = vset.pattern.permute.xlu0 15
    %2734 = vperm.xlu0 %2733, %v57
    %v2735 = vpop.permute.xlu0 %2734
    %2736 = vset.pattern.permute.xlu0 15
    %2737 = vperm.xlu0 %2736, %v58
    %v2738 = vpop.permute.xlu0 %2737
    %2739 = vset.pattern.permute.xlu0 15
    %2740 = vperm.xlu0 %2739, %v59
    %v2741 = vpop.permute.xlu0 %2740
    %2742 = vset.pattern.permute.xlu0 15
    %2743 = vperm.xlu0 %2742, %v60
    %v2744 = vpop.permute.xlu0 %2743
    %2745 = vset.pattern.permute.xlu0 15
    %2746 = vperm.xlu0 %2745, %v61
    %v2747 = vpop.permute.xlu0 %2746
    %2748 = vset.pattern.permute.xlu0 15
    %2749 = vperm.xlu0 %2748, %v62
    %v2750 = vpop.permute.xlu0 %2749
    %2751 = vset.pattern.permute.xlu0 15
    %2752 = vperm.xlu0 %2751, %v63
    %v2753 = vpop.permute.xlu0 %2752
    %2754 = vset.pattern.permute.xlu0 15
    %2755 = vperm.xlu0 %2754, %v64
    %v2756 = vpop.permute.xlu0 %2755
    %2757 = vset.pattern.permute.xlu0 15
    %2758 = vperm.xlu0 %2757, %v65
    %v2759 = vpop.permute.xlu0 %2758
    %2760 = vset.pattern.permute.xlu0 15
    %2761 = vperm.xlu0 %2760, %v66
    %v2762 = vpop.permute.xlu0 %2761
    %2763 = vset.pattern.permute.xlu0 15
    %2764 = vperm.xlu0 %2763, %v67
    %v2765 = vpop.permute.xlu0 %2764
    %2766 = vset.pattern.permute.xlu0 15
    %2767 = vperm.xlu0 %2766, %v68
    %v2768 = vpop.permute.xlu0 %2767
    %2769 = vset.pattern.permute.xlu0 15
    %2770 = vperm.xlu0 %2769, %v69
    %v2771 = vpop.permute.xlu0 %2770
    %vm2772 = vcmp.eq.s32.totalorder %v2699, %v71
    %vm2773 = vcmp.eq.s32.totalorder %v2702, %v71
    %vm2774 = vcmp.eq.s32.totalorder %v2705, %v71
    %vm2775 = vcmp.eq.s32.totalorder %v2708, %v71
    %vm2776 = vcmp.eq.s32.totalorder %v2711, %v71
    %vm2777 = vcmp.eq.s32.totalorder %v2714, %v71
    %vm2778 = vcmp.eq.s32.totalorder %v2717, %v71
    %vm2779 = vcmp.eq.s32.totalorder %v2720, %v71
    %vm2780 = vcmp.eq.s32.totalorder %v2723, %v71
    %vm2781 = vcmp.eq.s32.totalorder %v2726, %v71
    %vm2782 = vcmp.eq.s32.totalorder %v2729, %v71
    %vm2783 = vcmp.eq.s32.totalorder %v2732, %v71
    %vm2784 = vcmp.eq.s32.totalorder %v2735, %v71
    %vm2785 = vcmp.eq.s32.totalorder %v2738, %v71
    %vm2786 = vcmp.eq.s32.totalorder %v2741, %v71
    %vm2787 = vcmp.eq.s32.totalorder %v2744, %v71
    %vm2788 = vcmp.eq.s32.totalorder %v2747, %v71
    %vm2789 = vcmp.eq.s32.totalorder %v2750, %v71
    %vm2790 = vcmp.eq.s32.totalorder %v2753, %v71
    %vm2791 = vcmp.eq.s32.totalorder %v2756, %v71
    %vm2792 = vcmp.eq.s32.totalorder %v2759, %v71
    %vm2793 = vcmp.eq.s32.totalorder %v2762, %v71
    %vm2794 = vcmp.eq.s32.totalorder %v2765, %v71
    %vm2795 = vcmp.eq.s32.totalorder %v2768, %v71
    %vm2796 = vcmp.eq.s32.totalorder %v2771, %v71
    %v2797 = vsel %vm2772, 1, 0
    %v2798 = vsel %vm2773, 1, 0
    %v2799 = vsel %vm2774, 1, 0
    %v2800 = vsel %vm2775, 1, 0
    %v2801 = vsel %vm2776, 1, 0
    %v2802 = vsel %vm2777, 1, 0
    %v2803 = vsel %vm2778, 1, 0
    %v2804 = vsel %vm2779, 1, 0
    %v2805 = vsel %vm2780, 1, 0
    %v2806 = vsel %vm2781, 1, 0
    %v2807 = vsel %vm2782, 1, 0
    %v2808 = vsel %vm2783, 1, 0
    %v2809 = vsel %vm2784, 1, 0
    %v2810 = vsel %vm2785, 1, 0
    %v2811 = vsel %vm2786, 1, 0
    %v2812 = vsel %vm2787, 1, 0
    %v2813 = vsel %vm2788, 1, 0
    %v2814 = vsel %vm2789, 1, 0
    %v2815 = vsel %vm2790, 1, 0
    %v2816 = vsel %vm2791, 1, 0
    %v2817 = vsel %vm2792, 1, 0
    %v2818 = vsel %vm2793, 1, 0
    %v2819 = vsel %vm2794, 1, 0
    %v2820 = vsel %vm2795, 1, 0
    %v2821 = vsel %vm2796, 1, 0
    %v2822 = vcvt.s32.f32 %v2797
    %v2823 = vcvt.s32.f32 %v2798
    %v2824 = vcvt.s32.f32 %v2799
    %v2825 = vcvt.s32.f32 %v2800
    %v2826 = vcvt.s32.f32 %v2801
    %v2827 = vcvt.s32.f32 %v2802
    %v2828 = vcvt.s32.f32 %v2803
    %v2829 = vcvt.s32.f32 %v2804
    %v2830 = vcvt.s32.f32 %v2805
    %v2831 = vcvt.s32.f32 %v2806
    %v2832 = vcvt.s32.f32 %v2807
    %v2833 = vcvt.s32.f32 %v2808
    %v2834 = vcvt.s32.f32 %v2809
    %v2835 = vcvt.s32.f32 %v2810
    %v2836 = vcvt.s32.f32 %v2811
    %v2837 = vcvt.s32.f32 %v2812
    %v2838 = vcvt.s32.f32 %v2813
    %v2839 = vcvt.s32.f32 %v2814
    %v2840 = vcvt.s32.f32 %v2815
    %v2841 = vcvt.s32.f32 %v2816
    %v2842 = vcvt.s32.f32 %v2817
    %v2843 = vcvt.s32.f32 %v2818
    %v2844 = vcvt.s32.f32 %v2819
    %v2845 = vcvt.s32.f32 %v2820
    %v2846 = vcvt.s32.f32 %v2821
    %v2847 = vadd.f32 %v2672, %v2822
    %v2848 = vadd.f32 %v2673, %v2823
    %v2849 = vadd.f32 %v2674, %v2824
    %v2850 = vadd.f32 %v2675, %v2825
    %v2851 = vadd.f32 %v2676, %v2826
    %v2852 = vadd.f32 %v2677, %v2827
    %v2853 = vadd.f32 %v2678, %v2828
    %v2854 = vadd.f32 %v2679, %v2829
    %v2855 = vadd.f32 %v2680, %v2830
    %v2856 = vadd.f32 %v2681, %v2831
    %v2857 = vadd.f32 %v2682, %v2832
    %v2858 = vadd.f32 %v2683, %v2833
    %v2859 = vadd.f32 %v2684, %v2834
    %v2860 = vadd.f32 %v2685, %v2835
    %v2861 = vadd.f32 %v2686, %v2836
    %v2862 = vadd.f32 %v2687, %v2837
    %v2863 = vadd.f32 %v2688, %v2838
    %v2864 = vadd.f32 %v2689, %v2839
    %v2865 = vadd.f32 %v2690, %v2840
    %v2866 = vadd.f32 %v2691, %v2841
    %v2867 = vadd.f32 %v2692, %v2842
    %v2868 = vadd.f32 %v2693, %v2843
    %v2869 = vadd.f32 %v2694, %v2844
    %v2870 = vadd.f32 %v2695, %v2845
    %v2871 = vadd.f32 %v2696, %v2846
    %v2872 = vpack.c.bf16 %v2848, %v2847
    %v2873 = vpack.c.bf16 %v2850, %v2849
    %v2874 = vpack.c.bf16 %v2852, %v2851
    %v2875 = vpack.c.bf16 %v2854, %v2853
    %v2876 = vpack.c.bf16 %v2856, %v2855
    %v2877 = vpack.c.bf16 %v2858, %v2857
    %v2878 = vpack.c.bf16 %v2860, %v2859
    %v2879 = vpack.c.bf16 %v2862, %v2861
    %v2880 = vpack.c.bf16 %v2864, %v2863
    %v2881 = vpack.c.bf16 %v2866, %v2865
    %v2882 = vpack.c.bf16 %v2868, %v2867
    %v2883 = vpack.c.bf16 %v2870, %v2869
    %v2884 = vpack.c.bf16 %v2871, %v2871
    // Predicated region
    $region29: #{tpu_custom_call.1} parent=1 // pred_check
      %p2885 = pneg %p11
    $region30: #{tpu_custom_call.1} parent=1 // pred_check_branch
      %2887 = sbr.rel (%p2885) target = $region32
    $region31: #{tpu_custom_call.1} parent=1 // pred_region
      %s2888 = smul.u32 4, 14
      %s2889 = smul.u32 %s2888, 1
      %s2890 = sshll.u32 %s2889, 4
      %2891 = dma.done [#allocation3], %s2890
    $region32: #{tpu_custom_call.1} parent=1 // pred_fallthru
      _
    %v2892 = vld [vmem:[#allocation2] sm:$0xf]
    %v2893 = vld [vmem:[#allocation2 + $0x4] sm:$0xf]
    %v2894 = vld [vmem:[#allocation2 + $0x8] sm:$0xf]
    %v2895 = vld [vmem:[#allocation2 + $0xc] sm:$0xf]
    %v2896 = vld [vmem:[#allocation2 + $0x10] sm:$0xf]
    %v2897 = vld [vmem:[#allocation2 + $0x14] sm:$0xf]
    %v2898 = vld [vmem:[#allocation2 + $0x18] sm:$0xf]
    %v2899 = vld [vmem:[#allocation2 + $0x1c] sm:$0xf]
    %v2900 = vld [vmem:[#allocation2 + $0x20] sm:$0xf]
    %v2901 = vld [vmem:[#allocation2 + $0x24] sm:$0xf]
    %v2902 = vld [vmem:[#allocation2 + $0x28] sm:$0xf]
    %v2903 = vld [vmem:[#allocation2 + $0x2c] sm:$0xf]
    %v2904 = vld [vmem:[#allocation2 + $0x30] sm:$0xf]
    %v2905 = vld [vmem:[#allocation2 + $0x34] sm:$0xf]
    %v2920 = vunpack.c.l.b16 %v2892
    %v2921 = vunpack.c.l.b16 %v2893
    %v2922 = vunpack.c.l.b16 %v2894
    %v2923 = vunpack.c.l.b16 %v2895
    %v2924 = vunpack.c.l.b16 %v2896
    %v2925 = vunpack.c.l.b16 %v2897
    %v2926 = vunpack.c.l.b16 %v2898
    %v2927 = vunpack.c.l.b16 %v2899
    %v2928 = vunpack.c.l.b16 %v2900
    %v2929 = vunpack.c.l.b16 %v2901
    %v2930 = vunpack.c.l.b16 %v2902
    %v2931 = vunpack.c.l.b16 %v2903
    %v2932 = vunpack.c.l.b16 %v2904
    %v2933 = vunpack.c.l.b16 %v2905
    %v2934 = vpack.c.b16 %v2921, %v2920
    %v2935 = vpack.c.b16 %v2923, %v2922
    %v2936 = vpack.c.b16 %v2925, %v2924
    %v2937 = vpack.c.b16 %v2927, %v2926
    %v2938 = vpack.c.b16 %v2929, %v2928
    %v2939 = vpack.c.b16 %v2931, %v2930
    %v2940 = vpack.c.b16 %v2933, %v2932
    %vm2948 = vcmask 916480
    %v2950 = vsel %vm2948, %v2872, 0
    %v2953 = vsel %vm2948, %v2873, 0
    %v2956 = vsel %vm2948, %v2874, 0
    %v2959 = vsel %vm2948, %v2875, 0
    %v2962 = vsel %vm2948, %v2876, 0
    %v2965 = vsel %vm2948, %v2877, 0
    %v2968 = vsel %vm2948, %v2878, 0
    %v2971 = vsel %vm2948, %v2879, 0
    %v2974 = vsel %vm2948, %v2880, 0
    %v2977 = vsel %vm2948, %v2881, 0
    %v2980 = vsel %vm2948, %v2882, 0
    %v2983 = vsel %vm2948, %v2883, 0
    %v2986 = vsel %vm2948, %v2884, 0
    %2988 = vmatpush.bf16.msra.mxu0 0
    %2989 = vmatpush.bf16.msra.mxu0 %v2940
    %2990 = vmatpush.bf16.msra.mxu0 %v2939
    %2991 = vmatpush.bf16.msra.mxu0 %v2938
    %2992 = vmatpush.bf16.msra.mxu0 %v2937
    %2993 = vmatpush.bf16.msra.mxu0 %v2936
    %2994 = vmatpush.bf16.msra.mxu0 %v2935
    %2995 = vmatpush.bf16.msra.mxu0 %v2934
    %2996 = vmatmul.bf16.gmra.mxu0 %v2950
    %v2997 = vpop.f32.mrf.mxu0
    %v2998 = vadd.f32 0.0, %v2997
    %v2999 = vpop.f32.mrf.mxu0
    %v3000 = vadd.f32 0.0, %v2999
    %3001 = vmatmul.bf16.gmra.mxu0 %v2953
    %v3002 = vpop.f32.mrf.mxu0
    %v3003 = vadd.f32 0.0, %v3002
    %v3004 = vpop.f32.mrf.mxu0
    %v3005 = vadd.f32 0.0, %v3004
    %3006 = vmatmul.bf16.gmra.mxu0 %v2956
    %v3007 = vpop.f32.mrf.mxu0
    %v3008 = vadd.f32 0.0, %v3007
    %v3009 = vpop.f32.mrf.mxu0
    %v3010 = vadd.f32 0.0, %v3009
    %3011 = vmatmul.bf16.gmra.mxu0 %v2959
    %v3012 = vpop.f32.mrf.mxu0
    %v3013 = vadd.f32 0.0, %v3012
    %v3014 = vpop.f32.mrf.mxu0
    %v3015 = vadd.f32 0.0, %v3014
    %3016 = vmatmul.bf16.gmra.mxu0 %v2962
    %v3017 = vpop.f32.mrf.mxu0
    %v3018 = vadd.f32 0.0, %v3017
    %v3019 = vpop.f32.mrf.mxu0
    %v3020 = vadd.f32 0.0, %v3019
    %3021 = vmatmul.bf16.gmra.mxu0 %v2965
    %v3022 = vpop.f32.mrf.mxu0
    %v3023 = vadd.f32 0.0, %v3022
    %v3024 = vpop.f32.mrf.mxu0
    %v3025 = vadd.f32 0.0, %v3024
    %3026 = vmatmul.bf16.gmra.mxu0 %v2968
    %v3027 = vpop.f32.mrf.mxu0
    %v3028 = vadd.f32 0.0, %v3027
    %v3029 = vpop.f32.mrf.mxu0
    %v3030 = vadd.f32 0.0, %v3029
    %3031 = vmatmul.bf16.gmra.mxu0 %v2971
    %v3032 = vpop.f32.mrf.mxu0
    %v3033 = vadd.f32 0.0, %v3032
    %v3034 = vpop.f32.mrf.mxu0
    %v3035 = vadd.f32 0.0, %v3034
    %3036 = vmatmul.bf16.gmra.mxu0 %v2974
    %v3037 = vpop.f32.mrf.mxu0
    %v3038 = vadd.f32 0.0, %v3037
    %v3039 = vpop.f32.mrf.mxu0
    %v3040 = vadd.f32 0.0, %v3039
    %3041 = vmatmul.bf16.gmra.mxu0 %v2977
    %v3042 = vpop.f32.mrf.mxu0
    %v3043 = vadd.f32 0.0, %v3042
    %v3044 = vpop.f32.mrf.mxu0
    %v3045 = vadd.f32 0.0, %v3044
    %3046 = vmatmul.bf16.gmra.mxu0 %v2980
    %v3047 = vpop.f32.mrf.mxu0
    %v3048 = vadd.f32 0.0, %v3047
    %v3049 = vpop.f32.mrf.mxu0
    %v3050 = vadd.f32 0.0, %v3049
    %3051 = vmatmul.bf16.gmra.mxu0 %v2983
    %v3052 = vpop.f32.mrf.mxu0
    %v3053 = vadd.f32 0.0, %v3052
    %v3054 = vpop.f32.mrf.mxu0
    %v3055 = vadd.f32 0.0, %v3054
    %3056 = vmatmul.bf16.gmra.mxu0 %v2986
    %v3057 = vpop.f32.mrf.mxu0
    %v3058 = vadd.f32 0.0, %v3057
    %v3059 = vpop.f32.mrf.mxu0
    %3060 = vdwg.mxu0
    %3061 = vst [vmem:[#allocation4] sm:$0xff] %v2998
    %3062 = vst [vmem:[#allocation4 + $0x8] sm:$0xff] %v3000
    %3063 = vst [vmem:[#allocation4 + $0x10] sm:$0xff] %v3003
    %3064 = vst [vmem:[#allocation4 + $0x18] sm:$0xff] %v3005
    %3065 = vst [vmem:[#allocation4 + $0x20] sm:$0xff] %v3008
    %3066 = vst [vmem:[#allocation4 + $0x28] sm:$0xff] %v3010
    %3067 = vst [vmem:[#allocation4 + $0x30] sm:$0xff] %v3013
    %3068 = vst [vmem:[#allocation4 + $0x38] sm:$0xff] %v3015
    %3069 = vst [vmem:[#allocation4 + $0x40] sm:$0xff] %v3018
    %3070 = vst [vmem:[#allocation4 + $0x48] sm:$0xff] %v3020
    %3071 = vst [vmem:[#allocation4 + $0x50] sm:$0xff] %v3023
    %3072 = vst [vmem:[#allocation4 + $0x58] sm:$0xff] %v3025
    %3073 = vst [vmem:[#allocation4 + $0x60] sm:$0xff] %v3028
    %3074 = vst [vmem:[#allocation4 + $0x68] sm:$0xff] %v3030
    %3075 = vst [vmem:[#allocation4 + $0x70] sm:$0xff] %v3033
    %3076 = vst [vmem:[#allocation4 + $0x78] sm:$0xff] %v3035
    %3077 = vst [vmem:[#allocation4 + $0x80] sm:$0xff] %v3038
    %3078 = vst [vmem:[#allocation4 + $0x88] sm:$0xff] %v3040
    %3079 = vst [vmem:[#allocation4 + $0x90] sm:$0xff] %v3043
    %3080 = vst [vmem:[#allocation4 + $0x98] sm:$0xff] %v3045
    %3081 = vst [vmem:[#allocation4 + $0xa0] sm:$0xff] %v3048
    %3082 = vst [vmem:[#allocation4 + $0xa8] sm:$0xff] %v3050
    %3083 = vst [vmem:[#allocation4 + $0xb0] sm:$0xff] %v3053
    %3084 = vst [vmem:[#allocation4 + $0xb8] sm:$0xff] %v3055
    %3085 = vst [vmem:[#allocation4 + $0xc0] sm:$0xff] %v3058
    // Predicated region
    $region33: #{tpu_custom_call.1} parent=1 // pred_check
      _
    $region34: #{tpu_custom_call.1} parent=1 // pred_check_branch
      %3087 = sbr.rel (0) target = $region36
    $region35: #{tpu_custom_call.1} parent=1 // pred_region
      %3089 = vsyncadd [#allocation5], 0
      %s3090 = sshll.u32 [#allocation4], 4
      %s3091 = int_to_ptr.vmem [resolvable:$true] %s3090
      %s3092 = sshll.u32 %s2, 4
      %s3093 = int_to_ptr.hbm [resolvable:$true] %s3092
      %3098 = dma.vmem_to_hbm [thread:$0]  %s3091, 3200, %s3093, [#allocation5], 128, 128, 8
    $region36: #{tpu_custom_call.1} parent=1 // pred_fallthru
      _
    // Predicated region
    $region37: #{tpu_custom_call.1} parent=1 // pred_check
      _
    $region38: #{tpu_custom_call.1} parent=1 // pred_check_branch
      %3100 = sbr.rel (0) target = $region40
    $region39: #{tpu_custom_call.1} parent=1 // pred_region
      %3102 = dma.done [#allocation5], 3200
    $region40: #{tpu_custom_call.1} parent=1 // pred_fallthru
      _
    %3103 = vsyncpa [#allocation5], 1
  %3104 = vsyncmov [#allocation3]
  %s3105 = vpop.sfrf %3104
  %p3106 = scmp.eq.s32.totalorder %s3105, 0
  %p3107 = pneg %p3106
  %3109 = shalt.err (%p3107)

</llo_original>
